<compile_context>
chip_gen: v6e
topology: v6e:2x2x1
jax: 0.10.0
libtpu: 0.0.40
codegen_flags: <defaults>
</compile_context>

<pallas_src>
import math

import jax
import jax.numpy as jnp
from jax import lax
from jax.experimental import pallas as pl
from jax.experimental.pallas import tpu as pltpu

# ------------------------- model dimensions -------------------------
B = 2              # batch
S = 8              # sequence length
E = 32             # emb_dim
H = 4              # heads
DK = E // H        # dim_k per head
FF = 2048          # ffwd_dim (FeedForward default)
BS = B * S         # batch folded into rows
FF_CHUNK = 512     # FFN chunk along the hidden dim
EPS = 1e-5         # torch LayerNorm eps
NEG_SLOPE = 0.01   # F.leaky_relu default
NEG_INF = -1e9     # torch masked_fill value


def _layernorm(x, g, b):
    mu = jnp.mean(x, axis=-1, keepdims=True)
    xc = x - mu
    var = jnp.mean(xc * xc, axis=-1, keepdims=True)
    return xc * lax.rsqrt(var + EPS) * g + b


def encoder_layer_kernel(
    x_ref, bias_ref,
    g1_ref, b1_ref, wqkv_ref, bqkv_ref, wo_ref, bo_ref,
    g2_ref, b2_ref, w1_ref, bf1_ref, w2_ref, bf2_ref,
    out_ref,
):
    x = x_ref[...]                                   # [BS, E] f32

    # --- LayerNorm 1 ---
    h = _layernorm(x, g1_ref[...], b1_ref[...])

    # --- fused Q/K/V projection: bf16 operands, f32 accumulation ---
    qkv = jnp.dot(h.astype(jnp.bfloat16), wqkv_ref[...],
                  preferred_element_type=jnp.float32) + bqkv_ref[...]   # [BS, 3E] f32

    # --- split heads once into [H, BS, DK] stacks (head = MXU batch dim) ---
    def head_stack(col0):
        return jnp.stack(
            [qkv[:, col0 + hd * DK: col0 + (hd + 1) * DK] for hd in range(H)],
            axis=0).astype(jnp.bfloat16)             # [H, BS, DK]

    q3 = head_stack(0)
    k3 = head_stack(E)
    v3 = head_stack(2 * E)

    # --- batched attention over heads (one dot_general, not 16 tiny dots) ---
    scores = lax.dot_general(
        q3, k3, (((2,), (2,)), ((0,), (0,))),
        preferred_element_type=jnp.float32) * (1.0 / math.sqrt(DK))     # [H, BS, BS]
    # additive bias: -1e9 on masked keys AND cross-batch pairs (exp -> 0.0),
    # so this equals the reference per-batch masked softmax exactly.
    scores = scores + bias_ref[...][None, :, :]

    m = jnp.max(scores, axis=-1, keepdims=True)
    e = jnp.exp(scores - m)
    denom = jnp.sum(e, axis=-1, keepdims=True)
    p = e * pl.reciprocal(denom, approx=True)        # softmax (dropout = identity)

    ctx = lax.dot_general(
        p.astype(jnp.bfloat16), v3, (((2,), (1,)), ((0,), (0,))),
        preferred_element_type=jnp.float32)          # [H, BS, DK]
    concat = jnp.concatenate([ctx[hd] for hd in range(H)], axis=-1)     # [BS, E]

    attn_out = jnp.dot(concat.astype(jnp.bfloat16), wo_ref[...],
                       preferred_element_type=jnp.float32) + bo_ref[...]
    x1 = x + attn_out                                # residual (dropout1 = identity)

    # --- LayerNorm 2 + FFN chunked over the 2048-wide hidden dim ---
    h2 = _layernorm(x1, g2_ref[...], b2_ref[...]).astype(jnp.bfloat16)

    def ff_chunk(c, acc):
        off = pl.multiple_of(c * FF_CHUNK, FF_CHUNK)         # 512-aligned slice starts
        f = jnp.dot(h2, w1_ref[:, pl.ds(off, FF_CHUNK)],
                    preferred_element_type=jnp.float32)      # [BS, FF_CHUNK] f32
        f = f + bf1_ref[:, pl.ds(off, FF_CHUNK)]
        f = jnp.where(f >= 0.0, f, NEG_SLOPE * f)            # leaky_relu (f32: v5e-safe)
        return acc + jnp.dot(f.astype(jnp.bfloat16),
                             w2_ref[pl.ds(off, FF_CHUNK), :],
                             preferred_element_type=jnp.float32)

    ff = lax.fori_loop(0, FF // FF_CHUNK, ff_chunk,
                       jnp.zeros((BS, E), jnp.float32), unroll=True)

    out_ref[...] = x1 + ff + bf2_ref[...]            # residual (dropout2 = identity)


def _full_spec(shape):
    # Whole-array (untiled) block; index_map ignores the size-1 grid index.
    return pl.BlockSpec(shape, lambda i: (0,) * len(shape))


def prepare_params(params):
    """One-time parameter packing: fuse QKV, pre-cast MXU weights to bf16."""
    (g1, b1, wq, bq, wk, bk, wv, bv, wo, bo, g2, b2, w1, bf1, w2, bf2) = params
    wqkv = jnp.concatenate([wq, wk, wv], axis=1).astype(jnp.bfloat16)   # [E, 3E]
    bqkv = jnp.concatenate([bq, bk, bv], axis=1)                        # [1, 3E] f32
    return (g1, b1, wqkv, bqkv, wo.astype(jnp.bfloat16), bo, g2, b2,
            w1.astype(jnp.bfloat16), bf1, w2.astype(jnp.bfloat16), bf2)


@jax.jit
def encoder_layer(x, mask, packed_params):
    (g1, b1, wqkv, bqkv, wo, bo, g2, b2, w1, bf1, w2, bf2) = packed_params

    x2d = x.reshape(BS, E)                           # fold batch into rows
    # additive attention bias [BS, BS]: 0 where (same batch AND key kept), else -1e9
    keep_k = (mask.reshape(B, S) != 0.0).reshape(BS)           # key rows, (b, s) order
    row_b = jnp.arange(BS) // S
    allow = (row_b[:, None] == row_b[None, :]) & keep_k[None, :]
    bias = jnp.where(allow, 0.0, NEG_INF).astype(jnp.float32)  # [BS, BS], ~1 KiB

    args = (x2d, bias, g1, b1, wqkv, bqkv, wo, bo, g2, b2, w1, bf1, w2, bf2)
    in_specs = [_full_spec(a.shape) for a in args]

    out2d = pl.pallas_call(
        encoder_layer_kernel,
        out_shape=jax.ShapeDtypeStruct((BS, E), jnp.float32),
        grid=(1,),
        in_specs=in_specs,
        out_specs=pl.BlockSpec((BS, E), lambda i: (0, 0)),
        compiler_params=pltpu.CompilerParams(
            dimension_semantics=("arbitrary",),
            # actual VMEM use is ~1.3 MiB incl. double buffering (w2 [2048,32]
            # bf16 lane-pads to 512 KiB); 8 MiB is comfortable headroom on
            # v5e/v6e/v7x alike.
            vmem_limit_bytes=8 * 1024 * 1024,
        ),
    )(*args)
    return out2d.reshape(B, S, E)


# ------------------------- pure-JAX reference -------------------------
def encoder_layer_ref(x, mask, params):
    (g1, b1, wq, bq, wk, bk, wv, bv, wo, bo, g2, b2, w1, bf1, w2, bf2) = params

    def ln(z, g, b):
        mu = jnp.mean(z, axis=-1, keepdims=True)
        var = jnp.mean((z - mu) ** 2, axis=-1, keepdims=True)
        return (z - mu) / jnp.sqrt(var + EPS) * g + b

    h = ln(x, g1, b1)
    q = h @ wq + bq
    k = h @ wk + bk
    v = h @ wv + bv
    q = q.reshape(B, S, H, DK).transpose(0, 2, 1, 3)
    k = k.reshape(B, S, H, DK).transpose(0, 2, 1, 3)
    v = v.reshape(B, S, H, DK).transpose(0, 2, 1, 3)
    scores = jnp.einsum("bhqd,bhkd->bhqk", q, k) / math.sqrt(DK)
    scores = jnp.where(mask[:, None, :, :] == 0.0, NEG_INF, scores)
    p = jax.nn.softmax(scores, axis=-1)
    attn = jnp.einsum("bhqk,bhkd->bhqd", p, v).transpose(0, 2, 1, 3).reshape(B, S, H * DK)
    x1 = x + (attn @ wo + bo)
    h2 = ln(x1, g2, b2)
    f = h2 @ w1 + bf1
    f = jnp.where(f >= 0, f, NEG_SLOPE * f)
    return x1 + (f @ w2 + bf2)


if __name__ == "__main__":
    key = jax.random.PRNGKey(0)
    keys = jax.random.split(key, 16)

    def w(k, shape, scale=0.05):
        return (scale * jax.random.normal(k, shape)).astype(jnp.float32)

    params = (
        1.0 + w(keys[0], (1, E)),        # ln1 gamma
        w(keys[1], (1, E)),              # ln1 beta
        w(keys[2], (E, H * DK)),         # Wq
        w(keys[3], (1, H * DK)),         # bq
        w(keys[4], (E, H * DK)),         # Wk
        w(keys[5], (1, H * DK)),         # bk
        w(keys[6], (E, H * DK)),         # Wv
        w(keys[7], (1, H * DK)),         # bv
        w(keys[8], (H * DK, E)),         # Wo
        w(keys[9], (1, E)),              # bo
        1.0 + w(keys[10], (1, E)),       # ln2 gamma
        w(keys[11], (1, E)),             # ln2 beta
        w(keys[12], (E, FF)),            # FF W1
        w(keys[13], (1, FF)),            # FF b1
        w(keys[14], (FF, E)),            # FF W2
        w(keys[15], (1, E)),             # FF b2
    )

    # one-time packing/casting (NOT per forward call)
    packed = prepare_params(params)
    packed = jax.block_until_ready(packed)

    xkey, _ = jax.random.split(key)
    x = jax.random.normal(xkey, (B, S, E), dtype=jnp.float32)
    # key-padding style mask: last 2 positions masked out
    mask = (jnp.arange(S) < S - 2).astype(jnp.float32)[None, None, :]
    mask = jnp.broadcast_to(mask, (B, 1, S))

    out = encoder_layer(x, mask, packed)
    out = jax.block_until_ready(out)

    ref = encoder_layer_ref(x, mask, params)  # full f32 reference
    assert out.shape == (B, S, E)
    # Tolerance covers the intentional bf16 matmul operands and the EUP
    # approx reciprocal in softmax (worst case ~1e-2 at these scales).
    assert jnp.max(jnp.abs(out - ref)) < 5e-2, "mismatch vs reference"

    print("KERNEL_OK")
</pallas_src>

<mosaic_0001>
module attributes {stable_mosaic.version = 11 : i64} {
  func.func @encoder_layer_kernel(%arg0: i32, %arg1: memref<16x32xf32, #tpu.memory_space<vmem>>, %arg2: memref<16x16xf32, #tpu.memory_space<vmem>>, %arg3: memref<1x32xf32, #tpu.memory_space<vmem>>, %arg4: memref<1x32xf32, #tpu.memory_space<vmem>>, %arg5: memref<32x96xbf16, #tpu.memory_space<vmem>>, %arg6: memref<1x96xf32, #tpu.memory_space<vmem>>, %arg7: memref<32x32xbf16, #tpu.memory_space<vmem>>, %arg8: memref<1x32xf32, #tpu.memory_space<vmem>>, %arg9: memref<1x32xf32, #tpu.memory_space<vmem>>, %arg10: memref<1x32xf32, #tpu.memory_space<vmem>>, %arg11: memref<32x2048xbf16, #tpu.memory_space<vmem>>, %arg12: memref<1x2048xf32, #tpu.memory_space<vmem>>, %arg13: memref<2048x32xbf16, #tpu.memory_space<vmem>>, %arg14: memref<1x32xf32, #tpu.memory_space<vmem>>, %arg15: memref<16x32xf32, #tpu.memory_space<vmem>>) attributes {dimension_semantics = [#tpu.dimension_semantics<arbitrary>], iteration_bounds = array<i64: 1>, scalar_prefetch = 0 : i64, scratch_operands = 0 : i64, tpu.core_type = #tpu.core_type<tc>, window_params = [{pipeline_mode = #tpu.pipeline_mode<synchronous>, transform_indices = @transform_0, window_bounds = array<i64: 16, 32>}, {pipeline_mode = #tpu.pipeline_mode<synchronous>, transform_indices = @transform_1, window_bounds = array<i64: 16, 16>}, {pipeline_mode = #tpu.pipeline_mode<synchronous>, transform_indices = @transform_2, window_bounds = array<i64: 1, 32>}, {pipeline_mode = #tpu.pipeline_mode<synchronous>, transform_indices = @transform_3, window_bounds = array<i64: 1, 32>}, {pipeline_mode = #tpu.pipeline_mode<synchronous>, transform_indices = @transform_4, window_bounds = array<i64: 32, 96>}, {pipeline_mode = #tpu.pipeline_mode<synchronous>, transform_indices = @transform_5, window_bounds = array<i64: 1, 96>}, {pipeline_mode = #tpu.pipeline_mode<synchronous>, transform_indices = @transform_6, window_bounds = array<i64: 32, 32>}, {pipeline_mode = #tpu.pipeline_mode<synchronous>, transform_indices = @transform_7, window_bounds = array<i64: 1, 32>}, {pipeline_mode = #tpu.pipeline_mode<synchronous>, transform_indices = @transform_8, window_bounds = array<i64: 1, 32>}, {pipeline_mode = #tpu.pipeline_mode<synchronous>, transform_indices = @transform_9, window_bounds = array<i64: 1, 32>}, {pipeline_mode = #tpu.pipeline_mode<synchronous>, transform_indices = @transform_10, window_bounds = array<i64: 32, 2048>}, {pipeline_mode = #tpu.pipeline_mode<synchronous>, transform_indices = @transform_11, window_bounds = array<i64: 1, 2048>}, {pipeline_mode = #tpu.pipeline_mode<synchronous>, transform_indices = @transform_12, window_bounds = array<i64: 2048, 32>}, {pipeline_mode = #tpu.pipeline_mode<synchronous>, transform_indices = @transform_13, window_bounds = array<i64: 1, 32>}, {pipeline_mode = #tpu.pipeline_mode<synchronous>, transform_indices = @transform_14, window_bounds = array<i64: 16, 32>}]} {
    %c0 = arith.constant 0 : index
    %c0_0 = arith.constant 0 : index
    %0 = vector.load %arg1[%c0, %c0_0] : memref<16x32xf32, #tpu.memory_space<vmem>>, vector<16x32xf32>
    %c0_1 = arith.constant 0 : index
    %c0_2 = arith.constant 0 : index
    %1 = vector.load %arg3[%c0_1, %c0_2] : memref<1x32xf32, #tpu.memory_space<vmem>>, vector<1x32xf32>
    %c0_3 = arith.constant 0 : index
    %c0_4 = arith.constant 0 : index
    %2 = vector.load %arg4[%c0_3, %c0_4] : memref<1x32xf32, #tpu.memory_space<vmem>>, vector<1x32xf32>
    %cst = arith.constant dense<0.000000e+00> : vector<16xf32>
    %3 = vector.multi_reduction <add>, %0, %cst [1] : vector<16x32xf32> to vector<16xf32>
    %4 = vector.shape_cast %3 : vector<16xf32> to vector<16x1xf32>
    %cst_5 = arith.constant 3.200000e+01 : f32
    %5 = vector.broadcast %cst_5 : f32 to vector<16x1xf32>
    %6 = arith.divf %4, %5 : vector<16x1xf32>
    %7 = vector.broadcast %6 : vector<16x1xf32> to vector<16x32xf32>
    %8 = arith.subf %0, %7 : vector<16x32xf32>
    %9 = arith.mulf %8, %8 : vector<16x32xf32>
    %cst_6 = arith.constant dense<0.000000e+00> : vector<16xf32>
    %10 = vector.multi_reduction <add>, %9, %cst_6 [1] : vector<16x32xf32> to vector<16xf32>
    %11 = vector.shape_cast %10 : vector<16xf32> to vector<16x1xf32>
    %cst_7 = arith.constant 3.200000e+01 : f32
    %12 = vector.broadcast %cst_7 : f32 to vector<16x1xf32>
    %13 = arith.divf %11, %12 : vector<16x1xf32>
    %cst_8 = arith.constant 9.99999974E-6 : f32
    %14 = vector.broadcast %cst_8 : f32 to vector<16x1xf32>
    %15 = arith.addf %13, %14 : vector<16x1xf32>
    %16 = math.rsqrt %15 : vector<16x1xf32>
    %17 = vector.broadcast %16 : vector<16x1xf32> to vector<16x32xf32>
    %18 = arith.mulf %8, %17 : vector<16x32xf32>
    %19 = vector.broadcast %1 : vector<1x32xf32> to vector<16x32xf32>
    %20 = arith.mulf %18, %19 : vector<16x32xf32>
    %21 = vector.broadcast %2 : vector<1x32xf32> to vector<16x32xf32>
    %22 = arith.addf %20, %21 : vector<16x32xf32>
    %23 = arith.truncf %22 : vector<16x32xf32> to vector<16x32xbf16>
    %c0_9 = arith.constant 0 : index
    %c0_10 = arith.constant 0 : index
    %24 = vector.load %arg5[%c0_9, %c0_10] : memref<32x96xbf16, #tpu.memory_space<vmem>>, vector<32x96xbf16>
    %cst_11 = arith.constant dense<0.000000e+00> : vector<16x96xf32>
    %25 = tpu.matmul %23, %24, %cst_11 {dimension_numbers = #tpu.dot_dimension_numbers<[1], [0], [0], [1], [0, 0, 1, 1], [], []>} : vector<16x32xbf16>, vector<32x96xbf16>, vector<16x96xf32> -> vector<16x96xf32>
    %c0_12 = arith.constant 0 : index
    %c0_13 = arith.constant 0 : index
    %26 = vector.load %arg6[%c0_12, %c0_13] : memref<1x96xf32, #tpu.memory_space<vmem>>, vector<1x96xf32>
    %27 = vector.broadcast %26 : vector<1x96xf32> to vector<16x96xf32>
    %28 = arith.addf %25, %27 : vector<16x96xf32>
    %29 = vector.extract_strided_slice %28 {offsets = [0, 0], sizes = [16, 8], strides = [1, 1]} : vector<16x96xf32> to vector<16x8xf32>
    %30 = vector.extract_strided_slice %28 {offsets = [0, 8], sizes = [16, 8], strides = [1, 1]} : vector<16x96xf32> to vector<16x8xf32>
    %31 = vector.extract_strided_slice %28 {offsets = [0, 16], sizes = [16, 8], strides = [1, 1]} : vector<16x96xf32> to vector<16x8xf32>
    %32 = vector.extract_strided_slice %28 {offsets = [0, 24], sizes = [16, 8], strides = [1, 1]} : vector<16x96xf32> to vector<16x8xf32>
    %33 = vector.shape_cast %29 : vector<16x8xf32> to vector<1x16x8xf32>
    %34 = vector.shape_cast %30 : vector<16x8xf32> to vector<1x16x8xf32>
    %35 = vector.shape_cast %31 : vector<16x8xf32> to vector<1x16x8xf32>
    %36 = vector.shape_cast %32 : vector<16x8xf32> to vector<1x16x8xf32>
    %37 = tpu.concatenate %33, %34, %35, %36 in 0 : vector<1x16x8xf32>, vector<1x16x8xf32>, vector<1x16x8xf32>, vector<1x16x8xf32> -> vector<4x16x8xf32>
    %38 = arith.truncf %37 : vector<4x16x8xf32> to vector<4x16x8xbf16>
    %39 = vector.extract_strided_slice %28 {offsets = [0, 32], sizes = [16, 8], strides = [1, 1]} : vector<16x96xf32> to vector<16x8xf32>
    %40 = vector.extract_strided_slice %28 {offsets = [0, 40], sizes = [16, 8], strides = [1, 1]} : vector<16x96xf32> to vector<16x8xf32>
    %41 = vector.extract_strided_slice %28 {offsets = [0, 48], sizes = [16, 8], strides = [1, 1]} : vector<16x96xf32> to vector<16x8xf32>
    %42 = vector.extract_strided_slice %28 {offsets = [0, 56], sizes = [16, 8], strides = [1, 1]} : vector<16x96xf32> to vector<16x8xf32>
    %43 = vector.shape_cast %39 : vector<16x8xf32> to vector<1x16x8xf32>
    %44 = vector.shape_cast %40 : vector<16x8xf32> to vector<1x16x8xf32>
    %45 = vector.shape_cast %41 : vector<16x8xf32> to vector<1x16x8xf32>
    %46 = vector.shape_cast %42 : vector<16x8xf32> to vector<1x16x8xf32>
    %47 = tpu.concatenate %43, %44, %45, %46 in 0 : vector<1x16x8xf32>, vector<1x16x8xf32>, vector<1x16x8xf32>, vector<1x16x8xf32> -> vector<4x16x8xf32>
    %48 = arith.truncf %47 : vector<4x16x8xf32> to vector<4x16x8xbf16>
    %49 = vector.extract_strided_slice %28 {offsets = [0, 64], sizes = [16, 8], strides = [1, 1]} : vector<16x96xf32> to vector<16x8xf32>
    %50 = vector.extract_strided_slice %28 {offsets = [0, 72], sizes = [16, 8], strides = [1, 1]} : vector<16x96xf32> to vector<16x8xf32>
    %51 = vector.extract_strided_slice %28 {offsets = [0, 80], sizes = [16, 8], strides = [1, 1]} : vector<16x96xf32> to vector<16x8xf32>
    %52 = vector.extract_strided_slice %28 {offsets = [0, 88], sizes = [16, 8], strides = [1, 1]} : vector<16x96xf32> to vector<16x8xf32>
    %53 = vector.shape_cast %49 : vector<16x8xf32> to vector<1x16x8xf32>
    %54 = vector.shape_cast %50 : vector<16x8xf32> to vector<1x16x8xf32>
    %55 = vector.shape_cast %51 : vector<16x8xf32> to vector<1x16x8xf32>
    %56 = vector.shape_cast %52 : vector<16x8xf32> to vector<1x16x8xf32>
    %57 = tpu.concatenate %53, %54, %55, %56 in 0 : vector<1x16x8xf32>, vector<1x16x8xf32>, vector<1x16x8xf32>, vector<1x16x8xf32> -> vector<4x16x8xf32>
    %58 = arith.truncf %57 : vector<4x16x8xf32> to vector<4x16x8xbf16>
    %cst_14 = arith.constant dense<0.000000e+00> : vector<4x16x16xf32>
    %59 = tpu.matmul %38, %48, %cst_14 {dimension_numbers = #tpu.dot_dimension_numbers<[2], [2], [1], [1], [0, 0, 0, 1, 1, 1], [0], [0]>} : vector<4x16x8xbf16>, vector<4x16x8xbf16>, vector<4x16x16xf32> -> vector<4x16x16xf32>
    %cst_15 = arith.constant 0.353553385 : f32
    %60 = vector.broadcast %cst_15 : f32 to vector<4x16x16xf32>
    %61 = arith.mulf %59, %60 : vector<4x16x16xf32>
    %c0_16 = arith.constant 0 : index
    %c0_17 = arith.constant 0 : index
    %62 = vector.load %arg2[%c0_16, %c0_17] : memref<16x16xf32, #tpu.memory_space<vmem>>, vector<16x16xf32>
    %63 = vector.shape_cast %62 : vector<16x16xf32> to vector<1x16x16xf32>
    %64 = vector.broadcast %63 : vector<1x16x16xf32> to vector<4x16x16xf32>
    %65 = arith.addf %61, %64 : vector<4x16x16xf32>
    %cst_18 = arith.constant dense<0xFF800000> : vector<4x16xf32>
    %66 = vector.multi_reduction <maximumf>, %65, %cst_18 [2] : vector<4x16x16xf32> to vector<4x16xf32>
    %67 = vector.shape_cast %66 : vector<4x16xf32> to vector<4x16x1xf32>
    %68 = vector.broadcast %67 : vector<4x16x1xf32> to vector<4x16x16xf32>
    %69 = arith.subf %65, %68 : vector<4x16x16xf32>
    %70 = math.exp %69 : vector<4x16x16xf32>
    %cst_19 = arith.constant dense<0.000000e+00> : vector<4x16xf32>
    %71 = vector.multi_reduction <add>, %70, %cst_19 [2] : vector<4x16x16xf32> to vector<4x16xf32>
    %72 = vector.shape_cast %71 : vector<4x16xf32> to vector<4x16x1xf32>
    %73 = tpu.reciprocal %72 {approx = true} : vector<4x16x1xf32> -> vector<4x16x1xf32>
    %74 = vector.broadcast %73 : vector<4x16x1xf32> to vector<4x16x16xf32>
    %75 = arith.mulf %70, %74 : vector<4x16x16xf32>
    %76 = arith.truncf %75 : vector<4x16x16xf32> to vector<4x16x16xbf16>
    %cst_20 = arith.constant dense<0.000000e+00> : vector<4x16x8xf32>
    %77 = tpu.matmul %76, %58, %cst_20 {dimension_numbers = #tpu.dot_dimension_numbers<[2], [1], [1], [2], [0, 0, 0, 1, 1, 2], [0], [0]>} : vector<4x16x16xbf16>, vector<4x16x8xbf16>, vector<4x16x8xf32> -> vector<4x16x8xf32>
    %78 = vector.extract_strided_slice %77 {offsets = [0, 0, 0], sizes = [1, 16, 8], strides = [1, 1, 1]} : vector<4x16x8xf32> to vector<1x16x8xf32>
    %79 = vector.shape_cast %78 : vector<1x16x8xf32> to vector<16x8xf32>
    %80 = vector.extract_strided_slice %77 {offsets = [1, 0, 0], sizes = [1, 16, 8], strides = [1, 1, 1]} : vector<4x16x8xf32> to vector<1x16x8xf32>
    %81 = vector.shape_cast %80 : vector<1x16x8xf32> to vector<16x8xf32>
    %82 = vector.extract_strided_slice %77 {offsets = [2, 0, 0], sizes = [1, 16, 8], strides = [1, 1, 1]} : vector<4x16x8xf32> to vector<1x16x8xf32>
    %83 = vector.shape_cast %82 : vector<1x16x8xf32> to vector<16x8xf32>
    %84 = vector.extract_strided_slice %77 {offsets = [3, 0, 0], sizes = [1, 16, 8], strides = [1, 1, 1]} : vector<4x16x8xf32> to vector<1x16x8xf32>
    %85 = vector.shape_cast %84 : vector<1x16x8xf32> to vector<16x8xf32>
    %86 = tpu.concatenate %79, %81, %83, %85 in 1 : vector<16x8xf32>, vector<16x8xf32>, vector<16x8xf32>, vector<16x8xf32> -> vector<16x32xf32>
    %87 = arith.truncf %86 : vector<16x32xf32> to vector<16x32xbf16>
    %c0_21 = arith.constant 0 : index
    %c0_22 = arith.constant 0 : index
    %88 = vector.load %arg7[%c0_21, %c0_22] : memref<32x32xbf16, #tpu.memory_space<vmem>>, vector<32x32xbf16>
    %cst_23 = arith.constant dense<0.000000e+00> : vector<16x32xf32>
    %89 = tpu.matmul %87, %88, %cst_23 {dimension_numbers = #tpu.dot_dimension_numbers<[1], [0], [0], [1], [0, 0, 1, 1], [], []>} : vector<16x32xbf16>, vector<32x32xbf16>, vector<16x32xf32> -> vector<16x32xf32>
    %c0_24 = arith.constant 0 : index
    %c0_25 = arith.constant 0 : index
    %90 = vector.load %arg8[%c0_24, %c0_25] : memref<1x32xf32, #tpu.memory_space<vmem>>, vector<1x32xf32>
    %91 = vector.broadcast %90 : vector<1x32xf32> to vector<16x32xf32>
    %92 = arith.addf %89, %91 : vector<16x32xf32>
    %93 = arith.addf %0, %92 : vector<16x32xf32>
    %c0_26 = arith.constant 0 : index
    %c0_27 = arith.constant 0 : index
    %94 = vector.load %arg9[%c0_26, %c0_27] : memref<1x32xf32, #tpu.memory_space<vmem>>, vector<1x32xf32>
    %c0_28 = arith.constant 0 : index
    %c0_29 = arith.constant 0 : index
    %95 = vector.load %arg10[%c0_28, %c0_29] : memref<1x32xf32, #tpu.memory_space<vmem>>, vector<1x32xf32>
    %cst_30 = arith.constant dense<0.000000e+00> : vector<16xf32>
    %96 = vector.multi_reduction <add>, %93, %cst_30 [1] : vector<16x32xf32> to vector<16xf32>
    %97 = vector.shape_cast %96 : vector<16xf32> to vector<16x1xf32>
    %cst_31 = arith.constant 3.200000e+01 : f32
    %98 = vector.broadcast %cst_31 : f32 to vector<16x1xf32>
    %99 = arith.divf %97, %98 : vector<16x1xf32>
    %100 = vector.broadcast %99 : vector<16x1xf32> to vector<16x32xf32>
    %101 = arith.subf %93, %100 : vector<16x32xf32>
    %102 = arith.mulf %101, %101 : vector<16x32xf32>
    %cst_32 = arith.constant dense<0.000000e+00> : vector<16xf32>
    %103 = vector.multi_reduction <add>, %102, %cst_32 [1] : vector<16x32xf32> to vector<16xf32>
    %104 = vector.shape_cast %103 : vector<16xf32> to vector<16x1xf32>
    %cst_33 = arith.constant 3.200000e+01 : f32
    %105 = vector.broadcast %cst_33 : f32 to vector<16x1xf32>
    %106 = arith.divf %104, %105 : vector<16x1xf32>
    %cst_34 = arith.constant 9.99999974E-6 : f32
    %107 = vector.broadcast %cst_34 : f32 to vector<16x1xf32>
    %108 = arith.addf %106, %107 : vector<16x1xf32>
    %109 = math.rsqrt %108 : vector<16x1xf32>
    %110 = vector.broadcast %109 : vector<16x1xf32> to vector<16x32xf32>
    %111 = arith.mulf %101, %110 : vector<16x32xf32>
    %112 = vector.broadcast %94 : vector<1x32xf32> to vector<16x32xf32>
    %113 = arith.mulf %111, %112 : vector<16x32xf32>
    %114 = vector.broadcast %95 : vector<1x32xf32> to vector<16x32xf32>
    %115 = arith.addf %113, %114 : vector<16x32xf32>
    %116 = arith.truncf %115 : vector<16x32xf32> to vector<16x32xbf16>
    %cst_35 = arith.constant 0.000000e+00 : f32
    %117 = vector.broadcast %cst_35 : f32 to vector<16x32xf32>
    %c0_i32 = arith.constant 0 : i32
    %c512_i32 = arith.constant 512 : i32
    %118 = arith.muli %c0_i32, %c512_i32 : i32
    %119 = tpu.assume_multiple %118, 512 : i32
    %c0_36 = arith.constant 0 : index
    %120 = arith.index_cast %119 : i32 to index
    %121 = vector.load %arg11[%c0_36, %120] : memref<32x2048xbf16, #tpu.memory_space<vmem>>, vector<32x512xbf16>
    %cst_37 = arith.constant dense<0.000000e+00> : vector<16x512xf32>
    %122 = tpu.matmul %116, %121, %cst_37 {dimension_numbers = #tpu.dot_dimension_numbers<[1], [0], [0], [1], [0, 0, 1, 1], [], []>} : vector<16x32xbf16>, vector<32x512xbf16>, vector<16x512xf32> -> vector<16x512xf32>
    %c0_38 = arith.constant 0 : index
    %123 = arith.index_cast %119 : i32 to index
    %124 = vector.load %arg12[%c0_38, %123] : memref<1x2048xf32, #tpu.memory_space<vmem>>, vector<1x512xf32>
    %125 = vector.broadcast %124 : vector<1x512xf32> to vector<16x512xf32>
    %126 = arith.addf %122, %125 : vector<16x512xf32>
    %cst_39 = arith.constant 0.000000e+00 : f32
    %127 = vector.broadcast %cst_39 : f32 to vector<16x512xf32>
    %128 = arith.cmpf oge, %126, %127 : vector<16x512xf32>
    %cst_40 = arith.constant 0.00999999977 : f32
    %129 = vector.broadcast %cst_40 : f32 to vector<16x512xf32>
    %130 = arith.mulf %129, %126 : vector<16x512xf32>
    %131 = arith.select %128, %126, %130 : vector<16x512xi1>, vector<16x512xf32>
    %132 = arith.truncf %131 : vector<16x512xf32> to vector<16x512xbf16>
    %133 = arith.index_cast %119 : i32 to index
    %c0_41 = arith.constant 0 : index
    %134 = vector.load %arg13[%133, %c0_41] : memref<2048x32xbf16, #tpu.memory_space<vmem>>, vector<512x32xbf16>
    %cst_42 = arith.constant dense<0.000000e+00> : vector<16x32xf32>
    %135 = tpu.matmul %132, %134, %cst_42 {dimension_numbers = #tpu.dot_dimension_numbers<[1], [0], [0], [1], [0, 0, 1, 1], [], []>} : vector<16x512xbf16>, vector<512x32xbf16>, vector<16x32xf32> -> vector<16x32xf32>
    %136 = arith.addf %117, %135 : vector<16x32xf32>
    %c1_i32 = arith.constant 1 : i32
    %c512_i32_43 = arith.constant 512 : i32
    %137 = arith.muli %c1_i32, %c512_i32_43 : i32
    %138 = tpu.assume_multiple %137, 512 : i32
    %c0_44 = arith.constant 0 : index
    %139 = arith.index_cast %138 : i32 to index
    %140 = vector.load %arg11[%c0_44, %139] : memref<32x2048xbf16, #tpu.memory_space<vmem>>, vector<32x512xbf16>
    %cst_45 = arith.constant dense<0.000000e+00> : vector<16x512xf32>
    %141 = tpu.matmul %116, %140, %cst_45 {dimension_numbers = #tpu.dot_dimension_numbers<[1], [0], [0], [1], [0, 0, 1, 1], [], []>} : vector<16x32xbf16>, vector<32x512xbf16>, vector<16x512xf32> -> vector<16x512xf32>
    %c0_46 = arith.constant 0 : index
    %142 = arith.index_cast %138 : i32 to index
    %143 = vector.load %arg12[%c0_46, %142] : memref<1x2048xf32, #tpu.memory_space<vmem>>, vector<1x512xf32>
    %144 = vector.broadcast %143 : vector<1x512xf32> to vector<16x512xf32>
    %145 = arith.addf %141, %144 : vector<16x512xf32>
    %cst_47 = arith.constant 0.000000e+00 : f32
    %146 = vector.broadcast %cst_47 : f32 to vector<16x512xf32>
    %147 = arith.cmpf oge, %145, %146 : vector<16x512xf32>
    %cst_48 = arith.constant 0.00999999977 : f32
    %148 = vector.broadcast %cst_48 : f32 to vector<16x512xf32>
    %149 = arith.mulf %148, %145 : vector<16x512xf32>
    %150 = arith.select %147, %145, %149 : vector<16x512xi1>, vector<16x512xf32>
    %151 = arith.truncf %150 : vector<16x512xf32> to vector<16x512xbf16>
    %152 = arith.index_cast %138 : i32 to index
    %c0_49 = arith.constant 0 : index
    %153 = vector.load %arg13[%152, %c0_49] : memref<2048x32xbf16, #tpu.memory_space<vmem>>, vector<512x32xbf16>
    %cst_50 = arith.constant dense<0.000000e+00> : vector<16x32xf32>
    %154 = tpu.matmul %151, %153, %cst_50 {dimension_numbers = #tpu.dot_dimension_numbers<[1], [0], [0], [1], [0, 0, 1, 1], [], []>} : vector<16x512xbf16>, vector<512x32xbf16>, vector<16x32xf32> -> vector<16x32xf32>
    %155 = arith.addf %136, %154 : vector<16x32xf32>
    %c2_i32 = arith.constant 2 : i32
    %c512_i32_51 = arith.constant 512 : i32
    %156 = arith.muli %c2_i32, %c512_i32_51 : i32
    %157 = tpu.assume_multiple %156, 512 : i32
    %c0_52 = arith.constant 0 : index
    %158 = arith.index_cast %157 : i32 to index
    %159 = vector.load %arg11[%c0_52, %158] : memref<32x2048xbf16, #tpu.memory_space<vmem>>, vector<32x512xbf16>
    %cst_53 = arith.constant dense<0.000000e+00> : vector<16x512xf32>
    %160 = tpu.matmul %116, %159, %cst_53 {dimension_numbers = #tpu.dot_dimension_numbers<[1], [0], [0], [1], [0, 0, 1, 1], [], []>} : vector<16x32xbf16>, vector<32x512xbf16>, vector<16x512xf32> -> vector<16x512xf32>
    %c0_54 = arith.constant 0 : index
    %161 = arith.index_cast %157 : i32 to index
    %162 = vector.load %arg12[%c0_54, %161] : memref<1x2048xf32, #tpu.memory_space<vmem>>, vector<1x512xf32>
    %163 = vector.broadcast %162 : vector<1x512xf32> to vector<16x512xf32>
    %164 = arith.addf %160, %163 : vector<16x512xf32>
    %cst_55 = arith.constant 0.000000e+00 : f32
    %165 = vector.broadcast %cst_55 : f32 to vector<16x512xf32>
    %166 = arith.cmpf oge, %164, %165 : vector<16x512xf32>
    %cst_56 = arith.constant 0.00999999977 : f32
    %167 = vector.broadcast %cst_56 : f32 to vector<16x512xf32>
    %168 = arith.mulf %167, %164 : vector<16x512xf32>
    %169 = arith.select %166, %164, %168 : vector<16x512xi1>, vector<16x512xf32>
    %170 = arith.truncf %169 : vector<16x512xf32> to vector<16x512xbf16>
    %171 = arith.index_cast %157 : i32 to index
    %c0_57 = arith.constant 0 : index
    %172 = vector.load %arg13[%171, %c0_57] : memref<2048x32xbf16, #tpu.memory_space<vmem>>, vector<512x32xbf16>
    %cst_58 = arith.constant dense<0.000000e+00> : vector<16x32xf32>
    %173 = tpu.matmul %170, %172, %cst_58 {dimension_numbers = #tpu.dot_dimension_numbers<[1], [0], [0], [1], [0, 0, 1, 1], [], []>} : vector<16x512xbf16>, vector<512x32xbf16>, vector<16x32xf32> -> vector<16x32xf32>
    %174 = arith.addf %155, %173 : vector<16x32xf32>
    %c3_i32 = arith.constant 3 : i32
    %c512_i32_59 = arith.constant 512 : i32
    %175 = arith.muli %c3_i32, %c512_i32_59 : i32
    %176 = tpu.assume_multiple %175, 512 : i32
    %c0_60 = arith.constant 0 : index
    %177 = arith.index_cast %176 : i32 to index
    %178 = vector.load %arg11[%c0_60, %177] : memref<32x2048xbf16, #tpu.memory_space<vmem>>, vector<32x512xbf16>
    %cst_61 = arith.constant dense<0.000000e+00> : vector<16x512xf32>
    %179 = tpu.matmul %116, %178, %cst_61 {dimension_numbers = #tpu.dot_dimension_numbers<[1], [0], [0], [1], [0, 0, 1, 1], [], []>} : vector<16x32xbf16>, vector<32x512xbf16>, vector<16x512xf32> -> vector<16x512xf32>
    %c0_62 = arith.constant 0 : index
    %180 = arith.index_cast %176 : i32 to index
    %181 = vector.load %arg12[%c0_62, %180] : memref<1x2048xf32, #tpu.memory_space<vmem>>, vector<1x512xf32>
    %182 = vector.broadcast %181 : vector<1x512xf32> to vector<16x512xf32>
    %183 = arith.addf %179, %182 : vector<16x512xf32>
    %cst_63 = arith.constant 0.000000e+00 : f32
    %184 = vector.broadcast %cst_63 : f32 to vector<16x512xf32>
    %185 = arith.cmpf oge, %183, %184 : vector<16x512xf32>
    %cst_64 = arith.constant 0.00999999977 : f32
    %186 = vector.broadcast %cst_64 : f32 to vector<16x512xf32>
    %187 = arith.mulf %186, %183 : vector<16x512xf32>
    %188 = arith.select %185, %183, %187 : vector<16x512xi1>, vector<16x512xf32>
    %189 = arith.truncf %188 : vector<16x512xf32> to vector<16x512xbf16>
    %190 = arith.index_cast %176 : i32 to index
    %c0_65 = arith.constant 0 : index
    %191 = vector.load %arg13[%190, %c0_65] : memref<2048x32xbf16, #tpu.memory_space<vmem>>, vector<512x32xbf16>
    %cst_66 = arith.constant dense<0.000000e+00> : vector<16x32xf32>
    %192 = tpu.matmul %189, %191, %cst_66 {dimension_numbers = #tpu.dot_dimension_numbers<[1], [0], [0], [1], [0, 0, 1, 1], [], []>} : vector<16x512xbf16>, vector<512x32xbf16>, vector<16x32xf32> -> vector<16x32xf32>
    %193 = arith.addf %174, %192 : vector<16x32xf32>
    %c4_i32 = arith.constant 4 : i32
    %194 = arith.addf %93, %193 : vector<16x32xf32>
    %c0_67 = arith.constant 0 : index
    %c0_68 = arith.constant 0 : index
    %195 = vector.load %arg14[%c0_67, %c0_68] : memref<1x32xf32, #tpu.memory_space<vmem>>, vector<1x32xf32>
    %196 = vector.broadcast %195 : vector<1x32xf32> to vector<16x32xf32>
    %197 = arith.addf %194, %196 : vector<16x32xf32>
    %c0_69 = arith.constant 0 : index
    %c0_70 = arith.constant 0 : index
    %198 = vector.load %arg15[%c0_69, %c0_70] : memref<16x32xf32, #tpu.memory_space<vmem>>, vector<16x32xf32>
    tpu.vector_store %arg15[%c0_69, %c0_70], %197 {strides = array<i32>} : memref<16x32xf32, #tpu.memory_space<vmem>>, vector<16x32xf32>,
    return
  }
  func.func @transform_0(%arg0: i32) -> (i32, i32) {
    %c0_i32 = arith.constant 0 : i32
    %c0_i32_0 = arith.constant 0 : i32
    %c0_i32_1 = arith.constant 0 : i32
    return %c0_i32, %c0_i32_0 : i32, i32
  }
  func.func @transform_1(%arg0: i32) -> (i32, i32) {
    %c0_i32 = arith.constant 0 : i32
    %c0_i32_0 = arith.constant 0 : i32
    %c0_i32_1 = arith.constant 0 : i32
    return %c0_i32, %c0_i32_0 : i32, i32
  }
  func.func @transform_2(%arg0: i32) -> (i32, i32) {
    %c0_i32 = arith.constant 0 : i32
    %c0_i32_0 = arith.constant 0 : i32
    %c0_i32_1 = arith.constant 0 : i32
    return %c0_i32, %c0_i32_0 : i32, i32
  }
  func.func @transform_3(%arg0: i32) -> (i32, i32) {
    %c0_i32 = arith.constant 0 : i32
    %c0_i32_0 = arith.constant 0 : i32
    %c0_i32_1 = arith.constant 0 : i32
    return %c0_i32, %c0_i32_0 : i32, i32
  }
  func.func @transform_4(%arg0: i32) -> (i32, i32) {
    %c0_i32 = arith.constant 0 : i32
    %c0_i32_0 = arith.constant 0 : i32
    %c0_i32_1 = arith.constant 0 : i32
    return %c0_i32, %c0_i32_0 : i32, i32
  }
  func.func @transform_5(%arg0: i32) -> (i32, i32) {
    %c0_i32 = arith.constant 0 : i32
    %c0_i32_0 = arith.constant 0 : i32
    %c0_i32_1 = arith.constant 0 : i32
    return %c0_i32, %c0_i32_0 : i32, i32
  }
  func.func @transform_6(%arg0: i32) -> (i32, i32) {
    %c0_i32 = arith.constant 0 : i32
    %c0_i32_0 = arith.constant 0 : i32
    %c0_i32_1 = arith.constant 0 : i32
    return %c0_i32, %c0_i32_0 : i32, i32
  }
  func.func @transform_7(%arg0: i32) -> (i32, i32) {
    %c0_i32 = arith.constant 0 : i32
    %c0_i32_0 = arith.constant 0 : i32
    %c0_i32_1 = arith.constant 0 : i32
    return %c0_i32, %c0_i32_0 : i32, i32
  }
  func.func @transform_8(%arg0: i32) -> (i32, i32) {
    %c0_i32 = arith.constant 0 : i32
    %c0_i32_0 = arith.constant 0 : i32
    %c0_i32_1 = arith.constant 0 : i32
    return %c0_i32, %c0_i32_0 : i32, i32
  }
  func.func @transform_9(%arg0: i32) -> (i32, i32) {
    %c0_i32 = arith.constant 0 : i32
    %c0_i32_0 = arith.constant 0 : i32
    %c0_i32_1 = arith.constant 0 : i32
    return %c0_i32, %c0_i32_0 : i32, i32
  }
  func.func @transform_10(%arg0: i32) -> (i32, i32) {
    %c0_i32 = arith.constant 0 : i32
    %c0_i32_0 = arith.constant 0 : i32
    %c0_i32_1 = arith.constant 0 : i32
    return %c0_i32, %c0_i32_0 : i32, i32
  }
  func.func @transform_11(%arg0: i32) -> (i32, i32) {
    %c0_i32 = arith.constant 0 : i32
    %c0_i32_0 = arith.constant 0 : i32
    %c0_i32_1 = arith.constant 0 : i32
    return %c0_i32, %c0_i32_0 : i32, i32
  }
  func.func @transform_12(%arg0: i32) -> (i32, i32) {
    %c0_i32 = arith.constant 0 : i32
    %c0_i32_0 = arith.constant 0 : i32
    %c0_i32_1 = arith.constant 0 : i32
    return %c0_i32, %c0_i32_0 : i32, i32
  }
  func.func @transform_13(%arg0: i32) -> (i32, i32) {
    %c0_i32 = arith.constant 0 : i32
    %c0_i32_0 = arith.constant 0 : i32
    %c0_i32_1 = arith.constant 0 : i32
    return %c0_i32, %c0_i32_0 : i32, i32
  }
  func.func @transform_14(%arg0: i32) -> (i32, i32) {
    %c0_i32 = arith.constant 0 : i32
    %c0_i32_0 = arith.constant 0 : i32
    %c0_i32_1 = arith.constant 0 : i32
    return %c0_i32, %c0_i32_0 : i32, i32
  }
}

</mosaic_0001>

<llo_original>
// kernel: encoder_layer.1
$region0: #{encoder_layer.1}
  #allocation0 [shape = 'u32[]', space=smem, size = 0x4, offset = 0x4, fixed_abs, tag = 'smem constant byte address 0x4 - core index']
  #allocation1 [shape = 'u32[144,128]{1,0:T(1,128)}', space=vmem, size = 0x12000, scoped, tag = 'internal scratch']
  %s0 = inlined_call_operand.vmem [shape: f32[16,32], index: 0, kind: input, shape index: {}]
  %s1 = inlined_call_operand.vmem [shape: f32[16,16], index: 1, kind: input, shape index: {}]
  %s2 = inlined_call_operand.vmem [shape: f32[1,32], index: 2, kind: input, shape index: {}]
  %s3 = inlined_call_operand.vmem [shape: f32[1,32], index: 3, kind: input, shape index: {}]
  %s4 = inlined_call_operand.vmem [shape: bf16[32,96], index: 4, kind: input, shape index: {}]
  %s5 = inlined_call_operand.vmem [shape: f32[1,96], index: 5, kind: input, shape index: {}]
  %s6 = inlined_call_operand.vmem [shape: bf16[32,32], index: 6, kind: input, shape index: {}]
  %s7 = inlined_call_operand.vmem [shape: f32[1,32], index: 7, kind: input, shape index: {}]
  %s8 = inlined_call_operand.vmem [shape: f32[1,32], index: 8, kind: input, shape index: {}]
  %s9 = inlined_call_operand.vmem [shape: f32[1,32], index: 9, kind: input, shape index: {}]
  %s10 = inlined_call_operand.vmem [shape: bf16[32,2048], index: 10, kind: input, shape index: {}]
  %s11 = inlined_call_operand.vmem [shape: f32[1,2048], index: 11, kind: input, shape index: {}]
  %s12 = inlined_call_operand.vmem [shape: bf16[2048,32], index: 12, kind: input, shape index: {}]
  %s13 = inlined_call_operand.vmem [shape: f32[1,32], index: 13, kind: input, shape index: {}]
  %s14 = inlined_call_operand.hbm [shape: f32[16,32], index: 14, kind: output, shape index: {}]
  %s15 = sld [smem:[#allocation0]]
  $region66: #{encoder_layer.1} parent=0
    _
  %s17 = ssub.s32 1, %s15
  %s18 = scalar_select 0, %s17, %s15
  $region1: #{encoder_layer.1} parent=0
    #allocation2 [shape = 'u8[8192]{0}', space=vmem, size = 0x2000, scoped, tag = 'output window, operand 0, single buffered']
    #allocation3 [shape = 's32[1]{0}', space=sflag, size = 0x4, scoped, tag = 'scoped memory for encoder_layer.1']
    %19 = vsyncpa [#allocation3], 0
    // Predicated region
    $region2: #{encoder_layer.1} parent=1 // pred_check
      _
    $region3: #{encoder_layer.1} parent=1 // pred_check_branch
      %21 = sbr.rel (0) target = $region5
    $region4: #{encoder_layer.1} parent=1 // pred_region
      _
    $region5: #{encoder_layer.1} parent=1 // pred_fallthru
      _
    // Predicated region
    $region6: #{encoder_layer.1} parent=1 // pred_check
      _
    $region7: #{encoder_layer.1} parent=1 // pred_check_branch
      %23 = sbr.rel (0) target = $region9
    $region8: #{encoder_layer.1} parent=1 // pred_region
      _
    $region9: #{encoder_layer.1} parent=1 // pred_fallthru
      _
    // Predicated region
    $region10: #{encoder_layer.1} parent=1 // pred_check
      _
    $region11: #{encoder_layer.1} parent=1 // pred_check_branch
      %25 = sbr.rel (0) target = $region13
    $region12: #{encoder_layer.1} parent=1 // pred_region
      _
    $region13: #{encoder_layer.1} parent=1 // pred_fallthru
      _
    // Predicated region
    $region14: #{encoder_layer.1} parent=1 // pred_check
      _
    $region15: #{encoder_layer.1} parent=1 // pred_check_branch
      %27 = sbr.rel (0) target = $region17
    $region16: #{encoder_layer.1} parent=1 // pred_region
      _
    $region17: #{encoder_layer.1} parent=1 // pred_fallthru
      _
    // Predicated region
    $region18: #{encoder_layer.1} parent=1 // pred_check
      _
    $region19: #{encoder_layer.1} parent=1 // pred_check_branch
      %29 = sbr.rel (0) target = $region21
    $region20: #{encoder_layer.1} parent=1 // pred_region
      _
    $region21: #{encoder_layer.1} parent=1 // pred_fallthru
      _
    // Predicated region
    $region22: #{encoder_layer.1} parent=1 // pred_check
      _
    $region23: #{encoder_layer.1} parent=1 // pred_check_branch
      %31 = sbr.rel (0) target = $region25
    $region24: #{encoder_layer.1} parent=1 // pred_region
      _
    $region25: #{encoder_layer.1} parent=1 // pred_fallthru
      _
    // Predicated region
    $region26: #{encoder_layer.1} parent=1 // pred_check
      _
    $region27: #{encoder_layer.1} parent=1 // pred_check_branch
      %33 = sbr.rel (0) target = $region29
    $region28: #{encoder_layer.1} parent=1 // pred_region
      _
    $region29: #{encoder_layer.1} parent=1 // pred_fallthru
      _
    // Predicated region
    $region30: #{encoder_layer.1} parent=1 // pred_check
      _
    $region31: #{encoder_layer.1} parent=1 // pred_check_branch
      %35 = sbr.rel (0) target = $region33
    $region32: #{encoder_layer.1} parent=1 // pred_region
      _
    $region33: #{encoder_layer.1} parent=1 // pred_fallthru
      _
    // Predicated region
    $region34: #{encoder_layer.1} parent=1 // pred_check
      _
    $region35: #{encoder_layer.1} parent=1 // pred_check_branch
      %37 = sbr.rel (0) target = $region37
    $region36: #{encoder_layer.1} parent=1 // pred_region
      _
    $region37: #{encoder_layer.1} parent=1 // pred_fallthru
      _
    // Predicated region
    $region38: #{encoder_layer.1} parent=1 // pred_check
      _
    $region39: #{encoder_layer.1} parent=1 // pred_check_branch
      %39 = sbr.rel (0) target = $region41
    $region40: #{encoder_layer.1} parent=1 // pred_region
      _
    $region41: #{encoder_layer.1} parent=1 // pred_fallthru
      _
    // Predicated region
    $region42: #{encoder_layer.1} parent=1 // pred_check
      _
    $region43: #{encoder_layer.1} parent=1 // pred_check_branch
      %41 = sbr.rel (0) target = $region45
    $region44: #{encoder_layer.1} parent=1 // pred_region
      _
    $region45: #{encoder_layer.1} parent=1 // pred_fallthru
      _
    // Predicated region
    $region46: #{encoder_layer.1} parent=1 // pred_check
      _
    $region47: #{encoder_layer.1} parent=1 // pred_check_branch
      %43 = sbr.rel (0) target = $region49
    $region48: #{encoder_layer.1} parent=1 // pred_region
      _
    $region49: #{encoder_layer.1} parent=1 // pred_fallthru
      _
    // Predicated region
    $region50: #{encoder_layer.1} parent=1 // pred_check
      _
    $region51: #{encoder_layer.1} parent=1 // pred_check_branch
      %45 = sbr.rel (0) target = $region53
    $region52: #{encoder_layer.1} parent=1 // pred_region
      _
    $region53: #{encoder_layer.1} parent=1 // pred_fallthru
      _
    // Predicated region
    $region54: #{encoder_layer.1} parent=1 // pred_check
      _
    $region55: #{encoder_layer.1} parent=1 // pred_check_branch
      %47 = sbr.rel (0) target = $region57
    $region56: #{encoder_layer.1} parent=1 // pred_region
      _
    $region57: #{encoder_layer.1} parent=1 // pred_fallthru
      _
    %v49 = vld [vmem:[%s0] sm:$0xff]
    %v50 = vld [vmem:[%s0 + $0x8] sm:$0xff]
    %v51 = vld [vmem:[%s2] sm:$0x1]
    %v52 = vld [vmem:[%s3] sm:$0x1]
    %vm53 = vcmask 261120
    %v54 = vsel %vm53, %v49, 0.0
    %55 = vadd.xlane.f32.xlu0 %v54
    %v56 = vpop.xlane.xlu0 %55
    %v57 = vsel %vm53, %v50, 0.0
    %58 = vadd.xlane.f32.xlu0 %v57
    %v59 = vpop.xlane.xlu0 %58
    %v60 = vrcp.pop 32.0
    %v61 = vmul.f32 %v56, %v60
    %v62 = vmul.f32 %v59, %v60
    %v63 = vsub.f32 %v49, %v61
    %v64 = vsub.f32 %v50, %v62
    %v65 = vmul.f32 %v63, %v63
    %v66 = vmul.f32 %v64, %v64
    %v67 = vsel %vm53, %v65, 0.0
    %68 = vadd.xlane.f32.xlu0 %v67
    %v69 = vpop.xlane.xlu0 %68
    %v70 = vsel %vm53, %v66, 0.0
    %71 = vadd.xlane.f32.xlu0 %v70
    %v72 = vpop.xlane.xlu0 %71
    %v73 = vmul.f32 %v69, %v60
    %v74 = vmul.f32 %v72, %v60
    %v75 = vadd.f32 %v73, 1e-05
    %v76 = vadd.f32 %v74, 1e-05
    %v77 = vrsqrt.pop %v75
    %v78 = vrsqrt.pop %v76
    %v79 = vmul.f32 %v63, %v77
    %v80 = vmul.f32 %v64, %v78
    %v82 = vlaneseq
    %v83 = vshrl.u32 %v82, 7
    %v84 = vsub.s32 0, %v83
    %v85 = vrot.slane %v51, %v84
    %v87 = vmul.f32 %v79, %v85
    %v88 = vmul.f32 %v80, %v85
    %v90 = vlaneseq
    %v91 = vshrl.u32 %v90, 7
    %v92 = vsub.s32 0, %v91
    %v93 = vrot.slane %v52, %v92
    %v95 = vadd.f32 %v87, %v93
    %v96 = vadd.f32 %v88, %v93
    %v97 = vpack.c.bf16 %v96, %v95
    %v98 = vld [vmem:[%s4] sm:$0xf]
    %v99 = vld [vmem:[%s4 + $0x4] sm:$0xf]
    %v100 = vld [vmem:[%s4 + $0x8] sm:$0xf]
    %v101 = vld [vmem:[%s4 + $0xc] sm:$0xf]
    %v102 = vld [vmem:[%s5] sm:$0x1]
    %v104 = vlaneseq
    %v105 = vshrl.u32 %v104, 7
    %v106 = vsub.s32 0, %v105
    %v107 = vrot.slane %v102, %v106
    %v113 = vunpack.c.l.b16 %v98
    %v114 = vunpack.c.l.b16 %v99
    %v115 = vunpack.c.l.b16 %v100
    %v116 = vunpack.c.l.b16 %v101
    %v117 = vpack.c.b16 %v114, %v113
    %v118 = vpack.c.b16 %v116, %v115
    %v122 = vsel %vm53, %v97, 0
    %124 = vmatprep.subr.bf16.mxu0 0
    %125 = vmatpush1.bf16.msra.mxu0 0
    %126 = vmatprep.subr.bf16.mxu0 0
    %127 = vmatpush1.bf16.msra.mxu0 0
    %128 = vmatprep.subr.bf16.mxu0 0
    %129 = vmatpush1.bf16.msra.mxu0 0
    %130 = vmatprep.subr.bf16.mxu0 0
    %131 = vmatpush1.bf16.msra.mxu0 0
    %132 = vmatprep.subr.bf16.mxu0 0
    %133 = vmatpush1.bf16.msra.mxu0 0
    %134 = vmatprep.subr.bf16.mxu0 0
    %135 = vmatpush1.bf16.msra.mxu0 0
    %136 = vmatprep.subr.bf16.mxu0 0
    %137 = vmatpush1.bf16.msra.mxu0 %v118
    %138 = vmatprep.subr.bf16.mxu0 0
    %139 = vmatpush1.bf16.msra.mxu0 %v117
    %140 = vmatprep.subr.bf16.mxu0 0
    %141 = vmatpush2.bf16.msra.mxu0 0
    %142 = vmatprep.subr.bf16.mxu0 0
    %143 = vmatpush2.bf16.msra.mxu0 0
    %144 = vmatprep.subr.bf16.mxu0 0
    %145 = vmatpush2.bf16.msra.mxu0 0
    %146 = vmatprep.subr.bf16.mxu0 0
    %147 = vmatpush2.bf16.msra.mxu0 0
    %148 = vmatprep.subr.bf16.mxu0 0
    %149 = vmatpush2.bf16.msra.mxu0 0
    %150 = vmatprep.subr.bf16.mxu0 0
    %151 = vmatpush2.bf16.msra.mxu0 0
    %152 = vmatprep.subr.bf16.mxu0 0
    %153 = vmatpush2.bf16.msra.mxu0 0
    %154 = vmatprep.subr.bf16.mxu0 0
    %155 = vmatpush2.bf16.msra.mxu0 0
    %156 = vmatprep.mubr.bf16.mxu0 0
    %157 = vmatmul.mubr.bf16.gmra.mxu0 %v122
    %v158 = vpop.f32.mrf.mxu0
    %v159 = vadd.f32 %v107, %v158
    %v160 = vpop.f32.mrf.mxu0
    %v161 = vpop.f32.mrf.mxu0
    %v162 = vadd.f32 %v107, %v161
    %v163 = vpop.f32.mrf.mxu0
    %164 = vdwg.mxu0
    %167 = vrot.lane.b32.xlu0 %v159, 120
    %v168 = vpop.permute.xlu0 %167
    %169 = vrot.lane.b32.xlu0 %v162, 120
    %v170 = vpop.permute.xlu0 %169
    %173 = vrot.lane.b32.xlu0 %v159, 112
    %v174 = vpop.permute.xlu0 %173
    %175 = vrot.lane.b32.xlu0 %v162, 112
    %v176 = vpop.permute.xlu0 %175
    %179 = vrot.lane.b32.xlu0 %v159, 104
    %v180 = vpop.permute.xlu0 %179
    %181 = vrot.lane.b32.xlu0 %v162, 104
    %v182 = vpop.permute.xlu0 %181
    %v185 = vpack.c.bf16 %v162, %v159
    %v186 = vpack.c.bf16 %v170, %v168
    %v187 = vpack.c.bf16 %v176, %v174
    %v188 = vpack.c.bf16 %v182, %v180
    %190 = vrot.lane.b32.xlu0 %v185, 96
    %v191 = vpop.permute.xlu0 %190
    %vm192 = vcmask 64512
    %v194 = vsel %vm192, %v185, 0
    %v197 = vsel %vm192, %v191, 0
    %199 = vmatprep.subr.bf16.mxu0 0
    %200 = vmatpush1.bf16.xpose.msra.mxu0 0
    %201 = vmatprep.subr.bf16.mxu0 0
    %202 = vmatpush1.bf16.xpose.msra.mxu0 0
    %203 = vmatprep.subr.bf16.mxu0 0
    %204 = vmatpush1.bf16.xpose.msra.mxu0 0
    %205 = vmatprep.subr.bf16.mxu0 0
    %206 = vmatpush1.bf16.xpose.msra.mxu0 0
    %207 = vmatprep.subr.bf16.mxu0 0
    %208 = vmatpush1.bf16.xpose.msra.mxu0 0
    %209 = vmatprep.subr.bf16.mxu0 0
    %210 = vmatpush1.bf16.xpose.msra.mxu0 0
    %211 = vmatprep.subr.bf16.mxu0 0
    %212 = vmatpush1.bf16.xpose.msra.mxu0 0
    %213 = vmatprep.subr.bf16.mxu0 0
    %214 = vmatpush1.bf16.xpose.msra.mxu0 %v197
    %215 = vmatprep.subr.bf16.mxu0 0
    %216 = vmatpush2.bf16.xpose.msra.mxu0 0
    %217 = vmatprep.subr.bf16.mxu0 0
    %218 = vmatpush2.bf16.xpose.msra.mxu0 0
    %219 = vmatprep.subr.bf16.mxu0 0
    %220 = vmatpush2.bf16.xpose.msra.mxu0 0
    %221 = vmatprep.subr.bf16.mxu0 0
    %222 = vmatpush2.bf16.xpose.msra.mxu0 0
    %223 = vmatprep.subr.bf16.mxu0 0
    %224 = vmatpush2.bf16.xpose.msra.mxu0 0
    %225 = vmatprep.subr.bf16.mxu0 0
    %226 = vmatpush2.bf16.xpose.msra.mxu0 0
    %227 = vmatprep.subr.bf16.mxu0 0
    %228 = vmatpush2.bf16.xpose.msra.mxu0 0
    %229 = vmatprep.subr.bf16.mxu0 0
    %230 = vmatpush2.bf16.xpose.msra.mxu0 0
    %231 = vmatprep.mubr.bf16.mxu0 0
    %232 = vmatmul.mubr.bf16.gmra.mxu0 %v194
    %v233 = vpop.f32.mrf.mxu0
    %v234 = vadd.f32 0.0, %v233
    %v235 = vpop.f32.mrf.mxu0
    %v236 = vpop.f32.mrf.mxu0
    %v237 = vadd.f32 0.0, %v236
    %v238 = vpop.f32.mrf.mxu0
    %239 = vdwg.mxu0
    %241 = vrot.lane.b32.xlu0 %v186, 96
    %v242 = vpop.permute.xlu0 %241
    %v244 = vsel %vm192, %v186, 0
    %v247 = vsel %vm192, %v242, 0
    %249 = vmatprep.subr.bf16.mxu0 0
    %250 = vmatpush1.bf16.xpose.msra.mxu0 0
    %251 = vmatprep.subr.bf16.mxu0 0
    %252 = vmatpush1.bf16.xpose.msra.mxu0 0
    %253 = vmatprep.subr.bf16.mxu0 0
    %254 = vmatpush1.bf16.xpose.msra.mxu0 0
    %255 = vmatprep.subr.bf16.mxu0 0
    %256 = vmatpush1.bf16.xpose.msra.mxu0 0
    %257 = vmatprep.subr.bf16.mxu0 0
    %258 = vmatpush1.bf16.xpose.msra.mxu0 0
    %259 = vmatprep.subr.bf16.mxu0 0
    %260 = vmatpush1.bf16.xpose.msra.mxu0 0
    %261 = vmatprep.subr.bf16.mxu0 0
    %262 = vmatpush1.bf16.xpose.msra.mxu0 0
    %263 = vmatprep.subr.bf16.mxu0 0
    %264 = vmatpush1.bf16.xpose.msra.mxu0 %v247
    %265 = vmatprep.subr.bf16.mxu0 0
    %266 = vmatpush2.bf16.xpose.msra.mxu0 0
    %267 = vmatprep.subr.bf16.mxu0 0
    %268 = vmatpush2.bf16.xpose.msra.mxu0 0
    %269 = vmatprep.subr.bf16.mxu0 0
    %270 = vmatpush2.bf16.xpose.msra.mxu0 0
    %271 = vmatprep.subr.bf16.mxu0 0
    %272 = vmatpush2.bf16.xpose.msra.mxu0 0
    %273 = vmatprep.subr.bf16.mxu0 0
    %274 = vmatpush2.bf16.xpose.msra.mxu0 0
    %275 = vmatprep.subr.bf16.mxu0 0
    %276 = vmatpush2.bf16.xpose.msra.mxu0 0
    %277 = vmatprep.subr.bf16.mxu0 0
    %278 = vmatpush2.bf16.xpose.msra.mxu0 0
    %279 = vmatprep.subr.bf16.mxu0 0
    %280 = vmatpush2.bf16.xpose.msra.mxu0 0
    %281 = vmatprep.mubr.bf16.mxu0 0
    %282 = vmatmul.mubr.bf16.gmra.mxu0 %v244
    %v283 = vpop.f32.mrf.mxu0
    %v284 = vadd.f32 0.0, %v283
    %v285 = vpop.f32.mrf.mxu0
    %v286 = vpop.f32.mrf.mxu0
    %v287 = vadd.f32 0.0, %v286
    %v288 = vpop.f32.mrf.mxu0
    %289 = vdwg.mxu0
    %291 = vrot.lane.b32.xlu0 %v187, 96
    %v292 = vpop.permute.xlu0 %291
    %v294 = vsel %vm192, %v187, 0
    %v297 = vsel %vm192, %v292, 0
    %299 = vmatprep.subr.bf16.mxu0 0
    %300 = vmatpush1.bf16.xpose.msra.mxu0 0
    %301 = vmatprep.subr.bf16.mxu0 0
    %302 = vmatpush1.bf16.xpose.msra.mxu0 0
    %303 = vmatprep.subr.bf16.mxu0 0
    %304 = vmatpush1.bf16.xpose.msra.mxu0 0
    %305 = vmatprep.subr.bf16.mxu0 0
    %306 = vmatpush1.bf16.xpose.msra.mxu0 0
    %307 = vmatprep.subr.bf16.mxu0 0
    %308 = vmatpush1.bf16.xpose.msra.mxu0 0
    %309 = vmatprep.subr.bf16.mxu0 0
    %310 = vmatpush1.bf16.xpose.msra.mxu0 0
    %311 = vmatprep.subr.bf16.mxu0 0
    %312 = vmatpush1.bf16.xpose.msra.mxu0 0
    %313 = vmatprep.subr.bf16.mxu0 0
    %314 = vmatpush1.bf16.xpose.msra.mxu0 %v297
    %315 = vmatprep.subr.bf16.mxu0 0
    %316 = vmatpush2.bf16.xpose.msra.mxu0 0
    %317 = vmatprep.subr.bf16.mxu0 0
    %318 = vmatpush2.bf16.xpose.msra.mxu0 0
    %319 = vmatprep.subr.bf16.mxu0 0
    %320 = vmatpush2.bf16.xpose.msra.mxu0 0
    %321 = vmatprep.subr.bf16.mxu0 0
    %322 = vmatpush2.bf16.xpose.msra.mxu0 0
    %323 = vmatprep.subr.bf16.mxu0 0
    %324 = vmatpush2.bf16.xpose.msra.mxu0 0
    %325 = vmatprep.subr.bf16.mxu0 0
    %326 = vmatpush2.bf16.xpose.msra.mxu0 0
    %327 = vmatprep.subr.bf16.mxu0 0
    %328 = vmatpush2.bf16.xpose.msra.mxu0 0
    %329 = vmatprep.subr.bf16.mxu0 0
    %330 = vmatpush2.bf16.xpose.msra.mxu0 0
    %331 = vmatprep.mubr.bf16.mxu0 0
    %332 = vmatmul.mubr.bf16.gmra.mxu0 %v294
    %v333 = vpop.f32.mrf.mxu0
    %v334 = vadd.f32 0.0, %v333
    %v335 = vpop.f32.mrf.mxu0
    %v336 = vpop.f32.mrf.mxu0
    %v337 = vadd.f32 0.0, %v336
    %v338 = vpop.f32.mrf.mxu0
    %339 = vdwg.mxu0
    %341 = vrot.lane.b32.xlu0 %v188, 96
    %v342 = vpop.permute.xlu0 %341
    %v344 = vsel %vm192, %v188, 0
    %v347 = vsel %vm192, %v342, 0
    %349 = vmatprep.subr.bf16.mxu0 0
    %350 = vmatpush1.bf16.xpose.msra.mxu0 0
    %351 = vmatprep.subr.bf16.mxu0 0
    %352 = vmatpush1.bf16.xpose.msra.mxu0 0
    %353 = vmatprep.subr.bf16.mxu0 0
    %354 = vmatpush1.bf16.xpose.msra.mxu0 0
    %355 = vmatprep.subr.bf16.mxu0 0
    %356 = vmatpush1.bf16.xpose.msra.mxu0 0
    %357 = vmatprep.subr.bf16.mxu0 0
    %358 = vmatpush1.bf16.xpose.msra.mxu0 0
    %359 = vmatprep.subr.bf16.mxu0 0
    %360 = vmatpush1.bf16.xpose.msra.mxu0 0
    %361 = vmatprep.subr.bf16.mxu0 0
    %362 = vmatpush1.bf16.xpose.msra.mxu0 0
    %363 = vmatprep.subr.bf16.mxu0 0
    %364 = vmatpush1.bf16.xpose.msra.mxu0 %v347
    %365 = vmatprep.subr.bf16.mxu0 0
    %366 = vmatpush2.bf16.xpose.msra.mxu0 0
    %367 = vmatprep.subr.bf16.mxu0 0
    %368 = vmatpush2.bf16.xpose.msra.mxu0 0
    %369 = vmatprep.subr.bf16.mxu0 0
    %370 = vmatpush2.bf16.xpose.msra.mxu0 0
    %371 = vmatprep.subr.bf16.mxu0 0
    %372 = vmatpush2.bf16.xpose.msra.mxu0 0
    %373 = vmatprep.subr.bf16.mxu0 0
    %374 = vmatpush2.bf16.xpose.msra.mxu0 0
    %375 = vmatprep.subr.bf16.mxu0 0
    %376 = vmatpush2.bf16.xpose.msra.mxu0 0
    %377 = vmatprep.subr.bf16.mxu0 0
    %378 = vmatpush2.bf16.xpose.msra.mxu0 0
    %379 = vmatprep.subr.bf16.mxu0 0
    %380 = vmatpush2.bf16.xpose.msra.mxu0 0
    %381 = vmatprep.mubr.bf16.mxu0 0
    %382 = vmatmul.mubr.bf16.gmra.mxu0 %v344
    %v383 = vpop.f32.mrf.mxu0
    %v384 = vadd.f32 0.0, %v383
    %v385 = vpop.f32.mrf.mxu0
    %v386 = vpop.f32.mrf.mxu0
    %v387 = vadd.f32 0.0, %v386
    %v388 = vpop.f32.mrf.mxu0
    %389 = vdwg.mxu0
    %v390 = vmul.f32 %v234, 0.35355338
    %v391 = vmul.f32 %v237, 0.35355338
    %v392 = vmul.f32 %v284, 0.35355338
    %v393 = vmul.f32 %v287, 0.35355338
    %v394 = vmul.f32 %v334, 0.35355338
    %v395 = vmul.f32 %v337, 0.35355338
    %v396 = vmul.f32 %v384, 0.35355338
    %v397 = vmul.f32 %v387, 0.35355338
    %v398 = vld [vmem:[%s1] sm:$0xff]
    %v399 = vld [vmem:[%s1 + $0x8] sm:$0xff]
    %v400 = vadd.f32 %v390, %v398
    %v401 = vadd.f32 %v391, %v399
    %v402 = vadd.f32 %v392, %v398
    %v403 = vadd.f32 %v393, %v399
    %v404 = vadd.f32 %v394, %v398
    %v405 = vadd.f32 %v395, %v399
    %v406 = vadd.f32 %v396, %v398
    %v407 = vadd.f32 %v397, %v399
    %vm408 = vcmask 130048
    %v409 = vsel %vm408, %v400, -inf
    %410 = vmax.xlane.f32.xlu0 %v409
    %v411 = vpop.xlane.xlu0 %410
    %v412 = vsel %vm408, %v401, -inf
    %413 = vmax.xlane.f32.xlu0 %v412
    %v414 = vpop.xlane.xlu0 %413
    %v415 = vsel %vm408, %v402, -inf
    %416 = vmax.xlane.f32.xlu0 %v415
    %v417 = vpop.xlane.xlu0 %416
    %v418 = vsel %vm408, %v403, -inf
    %419 = vmax.xlane.f32.xlu0 %v418
    %v420 = vpop.xlane.xlu0 %419
    %v421 = vsel %vm408, %v404, -inf
    %422 = vmax.xlane.f32.xlu0 %v421
    %v423 = vpop.xlane.xlu0 %422
    %v424 = vsel %vm408, %v405, -inf
    %425 = vmax.xlane.f32.xlu0 %v424
    %v426 = vpop.xlane.xlu0 %425
    %v427 = vsel %vm408, %v406, -inf
    %428 = vmax.xlane.f32.xlu0 %v427
    %v429 = vpop.xlane.xlu0 %428
    %v430 = vsel %vm408, %v407, -inf
    %431 = vmax.xlane.f32.xlu0 %v430
    %v432 = vpop.xlane.xlu0 %431
    %v433 = vsub.f32 %v400, %v411
    %v434 = vsub.f32 %v401, %v414
    %v435 = vsub.f32 %v402, %v417
    %v436 = vsub.f32 %v403, %v420
    %v437 = vsub.f32 %v404, %v423
    %v438 = vsub.f32 %v405, %v426
    %v439 = vsub.f32 %v406, %v429
    %v440 = vsub.f32 %v407, %v432
    %v441 = vmul.f32 %v433, 1.442695
    %v442 = vpow.pop %v441
    %v443 = vmul.f32 %v434, 1.442695
    %v444 = vpow.pop %v443
    %v445 = vmul.f32 %v435, 1.442695
    %v446 = vpow.pop %v445
    %v447 = vmul.f32 %v436, 1.442695
    %v448 = vpow.pop %v447
    %v449 = vmul.f32 %v437, 1.442695
    %v450 = vpow.pop %v449
    %v451 = vmul.f32 %v438, 1.442695
    %v452 = vpow.pop %v451
    %v453 = vmul.f32 %v439, 1.442695
    %v454 = vpow.pop %v453
    %v455 = vmul.f32 %v440, 1.442695
    %v456 = vpow.pop %v455
    %v457 = vsel %vm408, %v442, 0.0
    %458 = vadd.xlane.f32.xlu0 %v457
    %v459 = vpop.xlane.xlu0 %458
    %v460 = vsel %vm408, %v444, 0.0
    %461 = vadd.xlane.f32.xlu0 %v460
    %v462 = vpop.xlane.xlu0 %461
    %v463 = vsel %vm408, %v446, 0.0
    %464 = vadd.xlane.f32.xlu0 %v463
    %v465 = vpop.xlane.xlu0 %464
    %v466 = vsel %vm408, %v448, 0.0
    %467 = vadd.xlane.f32.xlu0 %v466
    %v468 = vpop.xlane.xlu0 %467
    %v469 = vsel %vm408, %v450, 0.0
    %470 = vadd.xlane.f32.xlu0 %v469
    %v471 = vpop.xlane.xlu0 %470
    %v472 = vsel %vm408, %v452, 0.0
    %473 = vadd.xlane.f32.xlu0 %v472
    %v474 = vpop.xlane.xlu0 %473
    %v475 = vsel %vm408, %v454, 0.0
    %476 = vadd.xlane.f32.xlu0 %v475
    %v477 = vpop.xlane.xlu0 %476
    %v478 = vsel %vm408, %v456, 0.0
    %479 = vadd.xlane.f32.xlu0 %v478
    %v480 = vpop.xlane.xlu0 %479
    %v481 = vrcp.pop %v459
    %v482 = vrcp.pop %v462
    %v483 = vrcp.pop %v465
    %v484 = vrcp.pop %v468
    %v485 = vrcp.pop %v471
    %v486 = vrcp.pop %v474
    %v487 = vrcp.pop %v477
    %v488 = vrcp.pop %v480
    %v489 = vmul.f32 %v442, %v481
    %v490 = vmul.f32 %v444, %v482
    %v491 = vmul.f32 %v446, %v483
    %v492 = vmul.f32 %v448, %v484
    %v493 = vmul.f32 %v450, %v485
    %v494 = vmul.f32 %v452, %v486
    %v495 = vmul.f32 %v454, %v487
    %v496 = vmul.f32 %v456, %v488
    %v497 = vpack.c.bf16 %v490, %v489
    %v498 = vpack.c.bf16 %v492, %v491
    %v499 = vpack.c.bf16 %v494, %v493
    %v500 = vpack.c.bf16 %v496, %v495
    %501 = vrot.lane.b32.xlu0 %v185, 64
    %v502 = vpop.permute.xlu0 %501
    %v505 = vsel %vm408, %v497, 0
    %507 = vmatprep.subr.bf16.mxu0 0
    %508 = vmatpush1.bf16.msra.mxu0 0
    %509 = vmatprep.subr.bf16.mxu0 0
    %510 = vmatpush1.bf16.msra.mxu0 0
    %511 = vmatprep.subr.bf16.mxu0 0
    %512 = vmatpush1.bf16.msra.mxu0 0
    %513 = vmatprep.subr.bf16.mxu0 0
    %514 = vmatpush1.bf16.msra.mxu0 0
    %515 = vmatprep.subr.bf16.mxu0 0
    %516 = vmatpush1.bf16.msra.mxu0 0
    %517 = vmatprep.subr.bf16.mxu0 0
    %518 = vmatpush1.bf16.msra.mxu0 0
    %519 = vmatprep.subr.bf16.mxu0 0
    %520 = vmatpush1.bf16.msra.mxu0 0
    %521 = vmatprep.subr.bf16.mxu0 0
    %522 = vmatpush1.bf16.msra.mxu0 %v502
    %523 = vmatprep.subr.bf16.mxu0 0
    %524 = vmatpush2.bf16.msra.mxu0 0
    %525 = vmatprep.subr.bf16.mxu0 0
    %526 = vmatpush2.bf16.msra.mxu0 0
    %527 = vmatprep.subr.bf16.mxu0 0
    %528 = vmatpush2.bf16.msra.mxu0 0
    %529 = vmatprep.subr.bf16.mxu0 0
    %530 = vmatpush2.bf16.msra.mxu0 0
    %531 = vmatprep.subr.bf16.mxu0 0
    %532 = vmatpush2.bf16.msra.mxu0 0
    %533 = vmatprep.subr.bf16.mxu0 0
    %534 = vmatpush2.bf16.msra.mxu0 0
    %535 = vmatprep.subr.bf16.mxu0 0
    %536 = vmatpush2.bf16.msra.mxu0 0
    %537 = vmatprep.subr.bf16.mxu0 0
    %538 = vmatpush2.bf16.msra.mxu0 0
    %539 = vmatprep.mubr.bf16.mxu0 0
    %540 = vmatmul.mubr.bf16.gmra.mxu0 %v505
    %v541 = vpop.f32.mrf.mxu0
    %v542 = vadd.f32 0.0, %v541
    %v543 = vpop.f32.mrf.mxu0
    %v544 = vpop.f32.mrf.mxu0
    %v545 = vadd.f32 0.0, %v544
    %v546 = vpop.f32.mrf.mxu0
    %547 = vdwg.mxu0
    %548 = vrot.lane.b32.xlu0 %v186, 64
    %v549 = vpop.permute.xlu0 %548
    %v552 = vsel %vm408, %v498, 0
    %554 = vmatprep.subr.bf16.mxu0 0
    %555 = vmatpush1.bf16.msra.mxu0 0
    %556 = vmatprep.subr.bf16.mxu0 0
    %557 = vmatpush1.bf16.msra.mxu0 0
    %558 = vmatprep.subr.bf16.mxu0 0
    %559 = vmatpush1.bf16.msra.mxu0 0
    %560 = vmatprep.subr.bf16.mxu0 0
    %561 = vmatpush1.bf16.msra.mxu0 0
    %562 = vmatprep.subr.bf16.mxu0 0
    %563 = vmatpush1.bf16.msra.mxu0 0
    %564 = vmatprep.subr.bf16.mxu0 0
    %565 = vmatpush1.bf16.msra.mxu0 0
    %566 = vmatprep.subr.bf16.mxu0 0
    %567 = vmatpush1.bf16.msra.mxu0 0
    %568 = vmatprep.subr.bf16.mxu0 0
    %569 = vmatpush1.bf16.msra.mxu0 %v549
    %570 = vmatprep.subr.bf16.mxu0 0
    %571 = vmatpush2.bf16.msra.mxu0 0
    %572 = vmatprep.subr.bf16.mxu0 0
    %573 = vmatpush2.bf16.msra.mxu0 0
    %574 = vmatprep.subr.bf16.mxu0 0
    %575 = vmatpush2.bf16.msra.mxu0 0
    %576 = vmatprep.subr.bf16.mxu0 0
    %577 = vmatpush2.bf16.msra.mxu0 0
    %578 = vmatprep.subr.bf16.mxu0 0
    %579 = vmatpush2.bf16.msra.mxu0 0
    %580 = vmatprep.subr.bf16.mxu0 0
    %581 = vmatpush2.bf16.msra.mxu0 0
    %582 = vmatprep.subr.bf16.mxu0 0
    %583 = vmatpush2.bf16.msra.mxu0 0
    %584 = vmatprep.subr.bf16.mxu0 0
    %585 = vmatpush2.bf16.msra.mxu0 0
    %586 = vmatprep.mubr.bf16.mxu0 0
    %587 = vmatmul.mubr.bf16.gmra.mxu0 %v552
    %v588 = vpop.f32.mrf.mxu0
    %v589 = vadd.f32 0.0, %v588
    %v590 = vpop.f32.mrf.mxu0
    %v591 = vpop.f32.mrf.mxu0
    %v592 = vadd.f32 0.0, %v591
    %v593 = vpop.f32.mrf.mxu0
    %594 = vdwg.mxu0
    %595 = vrot.lane.b32.xlu0 %v187, 64
    %v596 = vpop.permute.xlu0 %595
    %v599 = vsel %vm408, %v499, 0
    %601 = vmatprep.subr.bf16.mxu0 0
    %602 = vmatpush1.bf16.msra.mxu0 0
    %603 = vmatprep.subr.bf16.mxu0 0
    %604 = vmatpush1.bf16.msra.mxu0 0
    %605 = vmatprep.subr.bf16.mxu0 0
    %606 = vmatpush1.bf16.msra.mxu0 0
    %607 = vmatprep.subr.bf16.mxu0 0
    %608 = vmatpush1.bf16.msra.mxu0 0
    %609 = vmatprep.subr.bf16.mxu0 0
    %610 = vmatpush1.bf16.msra.mxu0 0
    %611 = vmatprep.subr.bf16.mxu0 0
    %612 = vmatpush1.bf16.msra.mxu0 0
    %613 = vmatprep.subr.bf16.mxu0 0
    %614 = vmatpush1.bf16.msra.mxu0 0
    %615 = vmatprep.subr.bf16.mxu0 0
    %616 = vmatpush1.bf16.msra.mxu0 %v596
    %617 = vmatprep.subr.bf16.mxu0 0
    %618 = vmatpush2.bf16.msra.mxu0 0
    %619 = vmatprep.subr.bf16.mxu0 0
    %620 = vmatpush2.bf16.msra.mxu0 0
    %621 = vmatprep.subr.bf16.mxu0 0
    %622 = vmatpush2.bf16.msra.mxu0 0
    %623 = vmatprep.subr.bf16.mxu0 0
    %624 = vmatpush2.bf16.msra.mxu0 0
    %625 = vmatprep.subr.bf16.mxu0 0
    %626 = vmatpush2.bf16.msra.mxu0 0
    %627 = vmatprep.subr.bf16.mxu0 0
    %628 = vmatpush2.bf16.msra.mxu0 0
    %629 = vmatprep.subr.bf16.mxu0 0
    %630 = vmatpush2.bf16.msra.mxu0 0
    %631 = vmatprep.subr.bf16.mxu0 0
    %632 = vmatpush2.bf16.msra.mxu0 0
    %633 = vmatprep.mubr.bf16.mxu0 0
    %634 = vmatmul.mubr.bf16.gmra.mxu0 %v599
    %v635 = vpop.f32.mrf.mxu0
    %v636 = vadd.f32 0.0, %v635
    %v637 = vpop.f32.mrf.mxu0
    %v638 = vpop.f32.mrf.mxu0
    %v639 = vadd.f32 0.0, %v638
    %v640 = vpop.f32.mrf.mxu0
    %641 = vdwg.mxu0
    %642 = vrot.lane.b32.xlu0 %v188, 64
    %v643 = vpop.permute.xlu0 %642
    %v646 = vsel %vm408, %v500, 0
    %648 = vmatprep.subr.bf16.mxu0 0
    %649 = vmatpush1.bf16.msra.mxu0 0
    %650 = vmatprep.subr.bf16.mxu0 0
    %651 = vmatpush1.bf16.msra.mxu0 0
    %652 = vmatprep.subr.bf16.mxu0 0
    %653 = vmatpush1.bf16.msra.mxu0 0
    %654 = vmatprep.subr.bf16.mxu0 0
    %655 = vmatpush1.bf16.msra.mxu0 0
    %656 = vmatprep.subr.bf16.mxu0 0
    %657 = vmatpush1.bf16.msra.mxu0 0
    %658 = vmatprep.subr.bf16.mxu0 0
    %659 = vmatpush1.bf16.msra.mxu0 0
    %660 = vmatprep.subr.bf16.mxu0 0
    %661 = vmatpush1.bf16.msra.mxu0 0
    %662 = vmatprep.subr.bf16.mxu0 0
    %663 = vmatpush1.bf16.msra.mxu0 %v643
    %664 = vmatprep.subr.bf16.mxu0 0
    %665 = vmatpush2.bf16.msra.mxu0 0
    %666 = vmatprep.subr.bf16.mxu0 0
    %667 = vmatpush2.bf16.msra.mxu0 0
    %668 = vmatprep.subr.bf16.mxu0 0
    %669 = vmatpush2.bf16.msra.mxu0 0
    %670 = vmatprep.subr.bf16.mxu0 0
    %671 = vmatpush2.bf16.msra.mxu0 0
    %672 = vmatprep.subr.bf16.mxu0 0
    %673 = vmatpush2.bf16.msra.mxu0 0
    %674 = vmatprep.subr.bf16.mxu0 0
    %675 = vmatpush2.bf16.msra.mxu0 0
    %676 = vmatprep.subr.bf16.mxu0 0
    %677 = vmatpush2.bf16.msra.mxu0 0
    %678 = vmatprep.subr.bf16.mxu0 0
    %679 = vmatpush2.bf16.msra.mxu0 0
    %680 = vmatprep.mubr.bf16.mxu0 0
    %681 = vmatmul.mubr.bf16.gmra.mxu0 %v646
    %v682 = vpop.f32.mrf.mxu0
    %v683 = vadd.f32 0.0, %v682
    %v684 = vpop.f32.mrf.mxu0
    %v685 = vpop.f32.mrf.mxu0
    %v686 = vadd.f32 0.0, %v685
    %v687 = vpop.f32.mrf.mxu0
    %688 = vdwg.mxu0
    %691 = vrot.lane.b32.xlu0 %v589, 8
    %v692 = vpop.permute.xlu0 %691
    %693 = vrot.lane.b32.xlu0 %v592, 8
    %v694 = vpop.permute.xlu0 %693
    %699 = vrot.lane.b32.xlu0 %v636, 16
    %v700 = vpop.permute.xlu0 %699
    %701 = vrot.lane.b32.xlu0 %v639, 16
    %v702 = vpop.permute.xlu0 %701
    %707 = vrot.lane.b32.xlu0 %v683, 24
    %v708 = vpop.permute.xlu0 %707
    %709 = vrot.lane.b32.xlu0 %v686, 24
    %v710 = vpop.permute.xlu0 %709
    %v713 = vsel %vm192, %v542, %v692
    %v714 = vsel %vm192, %v545, %v694
    %v715 = vsel %vm408, %v713, %v700
    %v716 = vsel %vm408, %v714, %v702
    %vm717 = vcmask 195584
    %v718 = vsel %vm717, %v715, %v708
    %v719 = vsel %vm717, %v716, %v710
    %v720 = vpack.c.bf16 %v719, %v718
    %v721 = vld [vmem:[%s6] sm:$0xf]
    %v722 = vld [vmem:[%s6 + $0x4] sm:$0xf]
    %v723 = vld [vmem:[%s6 + $0x8] sm:$0xf]
    %v724 = vld [vmem:[%s6 + $0xc] sm:$0xf]
    %v725 = vld [vmem:[%s7] sm:$0x1]
    %v727 = vlaneseq
    %v728 = vshrl.u32 %v727, 7
    %v729 = vsub.s32 0, %v728
    %v730 = vrot.slane %v725, %v729
    %v736 = vunpack.c.l.b16 %v721
    %v737 = vunpack.c.l.b16 %v722
    %v738 = vunpack.c.l.b16 %v723
    %v739 = vunpack.c.l.b16 %v724
    %v740 = vpack.c.b16 %v737, %v736
    %v741 = vpack.c.b16 %v739, %v738
    %v745 = vsel %vm53, %v720, 0
    %747 = vmatprep.subr.bf16.mxu0 0
    %748 = vmatpush1.bf16.msra.mxu0 0
    %749 = vmatprep.subr.bf16.mxu0 0
    %750 = vmatpush1.bf16.msra.mxu0 0
    %751 = vmatprep.subr.bf16.mxu0 0
    %752 = vmatpush1.bf16.msra.mxu0 0
    %753 = vmatprep.subr.bf16.mxu0 0
    %754 = vmatpush1.bf16.msra.mxu0 0
    %755 = vmatprep.subr.bf16.mxu0 0
    %756 = vmatpush1.bf16.msra.mxu0 0
    %757 = vmatprep.subr.bf16.mxu0 0
    %758 = vmatpush1.bf16.msra.mxu0 0
    %759 = vmatprep.subr.bf16.mxu0 0
    %760 = vmatpush1.bf16.msra.mxu0 %v741
    %761 = vmatprep.subr.bf16.mxu0 0
    %762 = vmatpush1.bf16.msra.mxu0 %v740
    %763 = vmatprep.subr.bf16.mxu0 0
    %764 = vmatpush2.bf16.msra.mxu0 0
    %765 = vmatprep.subr.bf16.mxu0 0
    %766 = vmatpush2.bf16.msra.mxu0 0
    %767 = vmatprep.subr.bf16.mxu0 0
    %768 = vmatpush2.bf16.msra.mxu0 0
    %769 = vmatprep.subr.bf16.mxu0 0
    %770 = vmatpush2.bf16.msra.mxu0 0
    %771 = vmatprep.subr.bf16.mxu0 0
    %772 = vmatpush2.bf16.msra.mxu0 0
    %773 = vmatprep.subr.bf16.mxu0 0
    %774 = vmatpush2.bf16.msra.mxu0 0
    %775 = vmatprep.subr.bf16.mxu0 0
    %776 = vmatpush2.bf16.msra.mxu0 0
    %777 = vmatprep.subr.bf16.mxu0 0
    %778 = vmatpush2.bf16.msra.mxu0 0
    %779 = vmatprep.mubr.bf16.mxu0 0
    %780 = vmatmul.mubr.bf16.gmra.mxu0 %v745
    %v781 = vpop.f32.mrf.mxu0
    %v782 = vadd.f32 %v730, %v781
    %v783 = vpop.f32.mrf.mxu0
    %v784 = vpop.f32.mrf.mxu0
    %v785 = vadd.f32 %v730, %v784
    %v786 = vpop.f32.mrf.mxu0
    %787 = vdwg.mxu0
    %v788 = vadd.f32 %v49, %v782
    %v789 = vadd.f32 %v50, %v785
    %v790 = vld [vmem:[%s8] sm:$0x1]
    %v791 = vld [vmem:[%s9] sm:$0x1]
    %v792 = vsel %vm53, %v788, 0.0
    %793 = vadd.xlane.f32.xlu0 %v792
    %v794 = vpop.xlane.xlu0 %793
    %v795 = vsel %vm53, %v789, 0.0
    %796 = vadd.xlane.f32.xlu0 %v795
    %v797 = vpop.xlane.xlu0 %796
    %v798 = vmul.f32 %v794, %v60
    %v799 = vmul.f32 %v797, %v60
    %v800 = vsub.f32 %v788, %v798
    %v801 = vsub.f32 %v789, %v799
    %v802 = vmul.f32 %v800, %v800
    %v803 = vmul.f32 %v801, %v801
    %v804 = vsel %vm53, %v802, 0.0
    %805 = vadd.xlane.f32.xlu0 %v804
    %v806 = vpop.xlane.xlu0 %805
    %v807 = vsel %vm53, %v803, 0.0
    %808 = vadd.xlane.f32.xlu0 %v807
    %v809 = vpop.xlane.xlu0 %808
    %v810 = vmul.f32 %v806, %v60
    %v811 = vmul.f32 %v809, %v60
    %v812 = vadd.f32 %v810, 1e-05
    %v813 = vadd.f32 %v811, 1e-05
    %v814 = vrsqrt.pop %v812
    %v815 = vrsqrt.pop %v813
    %v816 = vmul.f32 %v800, %v814
    %v817 = vmul.f32 %v801, %v815
    %v819 = vlaneseq
    %v820 = vshrl.u32 %v819, 7
    %v821 = vsub.s32 0, %v820
    %v822 = vrot.slane %v790, %v821
    %v824 = vmul.f32 %v816, %v822
    %v825 = vmul.f32 %v817, %v822
    %v827 = vlaneseq
    %v828 = vshrl.u32 %v827, 7
    %v829 = vsub.s32 0, %v828
    %v830 = vrot.slane %v791, %v829
    %v832 = vadd.f32 %v824, %v830
    %v833 = vadd.f32 %v825, %v830
    %v834 = vpack.c.bf16 %v833, %v832
    %v835 = vld [vmem:[%s10] sm:$0xff]
    %v836 = vld [vmem:[%s10 + $0x8] sm:$0xff]
    %v837 = vld [vmem:[%s10 + $0x40] sm:$0xff]
    %v838 = vld [vmem:[%s10 + $0x48] sm:$0xff]
    %v839 = vld [vmem:[%s10 + $0x80] sm:$0xff]
    %v840 = vld [vmem:[%s10 + $0x88] sm:$0xff]
    %v841 = vld [vmem:[%s10 + $0xc0] sm:$0xff]
    %v842 = vld [vmem:[%s10 + $0xc8] sm:$0xff]
    %v843 = vld [vmem:[%s11] sm:$0xf]
    %v845 = vlaneseq
    %v846 = vshrl.u32 %v845, 7
    %v847 = vsub.s32 0, %v846
    %v848 = vrot.slane %v843, %v847
    %v849 = vlaneseq
    %v850 = vshrl.u32 %v849, 7
    %v851 = vsub.s32 1, %v850
    %v852 = vrot.slane %v843, %v851
    %v853 = vlaneseq
    %v854 = vshrl.u32 %v853, 7
    %v855 = vsub.s32 2, %v854
    %v856 = vrot.slane %v843, %v855
    %v857 = vlaneseq
    %v858 = vshrl.u32 %v857, 7
    %v859 = vsub.s32 3, %v858
    %v860 = vrot.slane %v843, %v859
    %v873 = vunpack.c.l.b16 %v835
    %v874 = vunpack.c.h.b16 %v835
    %v875 = vunpack.c.l.b16 %v836
    %v876 = vunpack.c.h.b16 %v836
    %v877 = vunpack.c.l.b16 %v837
    %v878 = vunpack.c.h.b16 %v837
    %v879 = vunpack.c.l.b16 %v838
    %v880 = vunpack.c.h.b16 %v838
    %v881 = vunpack.c.l.b16 %v839
    %v882 = vunpack.c.h.b16 %v839
    %v883 = vunpack.c.l.b16 %v840
    %v884 = vunpack.c.h.b16 %v840
    %v885 = vunpack.c.l.b16 %v841
    %v886 = vunpack.c.h.b16 %v841
    %v887 = vunpack.c.l.b16 %v842
    %v888 = vunpack.c.h.b16 %v842
    %v889 = vpack.c.b16 %v877, %v873
    %v890 = vpack.c.b16 %v878, %v874
    %v891 = vpack.c.b16 %v879, %v875
    %v892 = vpack.c.b16 %v880, %v876
    %v893 = vpack.c.b16 %v885, %v881
    %v894 = vpack.c.b16 %v886, %v882
    %v895 = vpack.c.b16 %v887, %v883
    %v896 = vpack.c.b16 %v888, %v884
    %v906 = vsel %vm53, %v834, 0
    %908 = vmatprep.subr.bf16.mxu0 0
    %909 = vmatpush1.bf16.msra.mxu0 0
    %910 = vmatprep.subr.bf16.mxu0 0
    %911 = vmatpush1.bf16.msra.mxu0 0
    %912 = vmatprep.subr.bf16.mxu0 0
    %913 = vmatpush1.bf16.msra.mxu0 0
    %914 = vmatprep.subr.bf16.mxu0 0
    %915 = vmatpush1.bf16.msra.mxu0 0
    %916 = vmatprep.subr.bf16.mxu0 0
    %917 = vmatpush1.bf16.msra.mxu0 0
    %918 = vmatprep.subr.bf16.mxu0 0
    %919 = vmatpush1.bf16.msra.mxu0 0
    %920 = vmatprep.subr.bf16.mxu0 %v894
    %921 = vmatpush1.bf16.msra.mxu0 %v893
    %922 = vmatprep.subr.bf16.mxu0 %v890
    %923 = vmatpush1.bf16.msra.mxu0 %v889
    %924 = vmatprep.subr.bf16.mxu0 0
    %925 = vmatpush2.bf16.msra.mxu0 0
    %926 = vmatprep.subr.bf16.mxu0 0
    %927 = vmatpush2.bf16.msra.mxu0 0
    %928 = vmatprep.subr.bf16.mxu0 0
    %929 = vmatpush2.bf16.msra.mxu0 0
    %930 = vmatprep.subr.bf16.mxu0 0
    %931 = vmatpush2.bf16.msra.mxu0 0
    %932 = vmatprep.subr.bf16.mxu0 0
    %933 = vmatpush2.bf16.msra.mxu0 0
    %934 = vmatprep.subr.bf16.mxu0 0
    %935 = vmatpush2.bf16.msra.mxu0 0
    %936 = vmatprep.subr.bf16.mxu0 0
    %937 = vmatpush2.bf16.msra.mxu0 0
    %938 = vmatprep.subr.bf16.mxu0 0
    %939 = vmatpush2.bf16.msra.mxu0 0
    %940 = vmatprep.mubr.bf16.mxu0 0
    %941 = vmatmul.mubr.bf16.gmra.mxu0 %v906
    %v942 = vpop.f32.mrf.mxu0
    %v943 = vadd.f32 %v848, %v942
    %v944 = vpop.f32.mrf.mxu0
    %v945 = vadd.f32 %v852, %v944
    %v946 = vpop.f32.mrf.mxu0
    %v947 = vadd.f32 %v848, %v946
    %v948 = vpop.f32.mrf.mxu0
    %v949 = vadd.f32 %v852, %v948
    %950 = vdwg.mxu0
    %951 = vmatprep.subr.bf16.mxu0 0
    %952 = vmatpush1.bf16.msra.mxu0 0
    %953 = vmatprep.subr.bf16.mxu0 0
    %954 = vmatpush1.bf16.msra.mxu0 0
    %955 = vmatprep.subr.bf16.mxu0 0
    %956 = vmatpush1.bf16.msra.mxu0 0
    %957 = vmatprep.subr.bf16.mxu0 0
    %958 = vmatpush1.bf16.msra.mxu0 0
    %959 = vmatprep.subr.bf16.mxu0 0
    %960 = vmatpush1.bf16.msra.mxu0 0
    %961 = vmatprep.subr.bf16.mxu0 0
    %962 = vmatpush1.bf16.msra.mxu0 0
    %963 = vmatprep.subr.bf16.mxu0 %v896
    %964 = vmatpush1.bf16.msra.mxu0 %v895
    %965 = vmatprep.subr.bf16.mxu0 %v892
    %966 = vmatpush1.bf16.msra.mxu0 %v891
    %967 = vmatprep.subr.bf16.mxu0 0
    %968 = vmatpush2.bf16.msra.mxu0 0
    %969 = vmatprep.subr.bf16.mxu0 0
    %970 = vmatpush2.bf16.msra.mxu0 0
    %971 = vmatprep.subr.bf16.mxu0 0
    %972 = vmatpush2.bf16.msra.mxu0 0
    %973 = vmatprep.subr.bf16.mxu0 0
    %974 = vmatpush2.bf16.msra.mxu0 0
    %975 = vmatprep.subr.bf16.mxu0 0
    %976 = vmatpush2.bf16.msra.mxu0 0
    %977 = vmatprep.subr.bf16.mxu0 0
    %978 = vmatpush2.bf16.msra.mxu0 0
    %979 = vmatprep.subr.bf16.mxu0 0
    %980 = vmatpush2.bf16.msra.mxu0 0
    %981 = vmatprep.subr.bf16.mxu0 0
    %982 = vmatpush2.bf16.msra.mxu0 0
    %983 = vmatprep.mubr.bf16.mxu0 0
    %984 = vmatmul.mubr.bf16.gmra.mxu0 %v906
    %v985 = vpop.f32.mrf.mxu0
    %v986 = vadd.f32 %v856, %v985
    %v987 = vpop.f32.mrf.mxu0
    %v988 = vadd.f32 %v860, %v987
    %v989 = vpop.f32.mrf.mxu0
    %v990 = vadd.f32 %v856, %v989
    %v991 = vpop.f32.mrf.mxu0
    %v992 = vadd.f32 %v860, %v991
    %993 = vdwg.mxu0
    %vm994 = vcmp.ge.f32.partialorder %v943, 0.0
    %vm995 = vcmp.ge.f32.partialorder %v945, 0.0
    %vm996 = vcmp.ge.f32.partialorder %v986, 0.0
    %vm997 = vcmp.ge.f32.partialorder %v988, 0.0
    %vm998 = vcmp.ge.f32.partialorder %v947, 0.0
    %vm999 = vcmp.ge.f32.partialorder %v949, 0.0
    %vm1000 = vcmp.ge.f32.partialorder %v990, 0.0
    %vm1001 = vcmp.ge.f32.partialorder %v992, 0.0
    %v1002 = vmul.f32 %v943, 0.01
    %v1003 = vmul.f32 %v945, 0.01
    %v1004 = vmul.f32 %v986, 0.01
    %v1005 = vmul.f32 %v988, 0.01
    %v1006 = vmul.f32 %v947, 0.01
    %v1007 = vmul.f32 %v949, 0.01
    %v1008 = vmul.f32 %v990, 0.01
    %v1009 = vmul.f32 %v992, 0.01
    %v1010 = vsel %vm994, %v943, %v1002
    %v1011 = vsel %vm995, %v945, %v1003
    %v1012 = vsel %vm996, %v986, %v1004
    %v1013 = vsel %vm997, %v988, %v1005
    %v1014 = vsel %vm998, %v947, %v1006
    %v1015 = vsel %vm999, %v949, %v1007
    %v1016 = vsel %vm1000, %v990, %v1008
    %v1017 = vsel %vm1001, %v992, %v1009
    %v1018 = vpack.c.bf16 %v1014, %v1010
    %v1019 = vpack.c.bf16 %v1015, %v1011
    %v1020 = vpack.c.bf16 %v1016, %v1012
    %v1021 = vpack.c.bf16 %v1017, %v1013
    %v1022 = vld [vmem:[%s12] sm:$0xf]
    %v1023 = vld [vmem:[%s12 + $0x4] sm:$0xf]
    %v1024 = vld [vmem:[%s12 + $0x8] sm:$0xf]
    %v1025 = vld [vmem:[%s12 + $0xc] sm:$0xf]
    %v1026 = vld [vmem:[%s12 + $0x10] sm:$0xf]
    %v1027 = vld [vmem:[%s12 + $0x14] sm:$0xf]
    %v1028 = vld [vmem:[%s12 + $0x18] sm:$0xf]
    %v1029 = vld [vmem:[%s12 + $0x1c] sm:$0xf]
    %v1030 = vld [vmem:[%s12 + $0x20] sm:$0xf]
    %v1031 = vld [vmem:[%s12 + $0x24] sm:$0xf]
    %v1032 = vld [vmem:[%s12 + $0x28] sm:$0xf]
    %v1033 = vld [vmem:[%s12 + $0x2c] sm:$0xf]
    %v1034 = vld [vmem:[%s12 + $0x30] sm:$0xf]
    %v1035 = vld [vmem:[%s12 + $0x34] sm:$0xf]
    %v1036 = vld [vmem:[%s12 + $0x38] sm:$0xf]
    %v1037 = vld [vmem:[%s12 + $0x3c] sm:$0xf]
    %v1038 = vld [vmem:[%s12 + $0x40] sm:$0xf]
    %v1039 = vld [vmem:[%s12 + $0x44] sm:$0xf]
    %v1040 = vld [vmem:[%s12 + $0x48] sm:$0xf]
    %v1041 = vld [vmem:[%s12 + $0x4c] sm:$0xf]
    %v1042 = vld [vmem:[%s12 + $0x50] sm:$0xf]
    %v1043 = vld [vmem:[%s12 + $0x54] sm:$0xf]
    %v1044 = vld [vmem:[%s12 + $0x58] sm:$0xf]
    %v1045 = vld [vmem:[%s12 + $0x5c] sm:$0xf]
    %v1046 = vld [vmem:[%s12 + $0x60] sm:$0xf]
    %v1047 = vld [vmem:[%s12 + $0x64] sm:$0xf]
    %v1048 = vld [vmem:[%s12 + $0x68] sm:$0xf]
    %v1049 = vld [vmem:[%s12 + $0x6c] sm:$0xf]
    %v1050 = vld [vmem:[%s12 + $0x70] sm:$0xf]
    %v1051 = vld [vmem:[%s12 + $0x74] sm:$0xf]
    %v1052 = vld [vmem:[%s12 + $0x78] sm:$0xf]
    %v1053 = vld [vmem:[%s12 + $0x7c] sm:$0xf]
    %v1054 = vld [vmem:[%s12 + $0x80] sm:$0xf]
    %v1055 = vld [vmem:[%s12 + $0x84] sm:$0xf]
    %v1056 = vld [vmem:[%s12 + $0x88] sm:$0xf]
    %v1057 = vld [vmem:[%s12 + $0x8c] sm:$0xf]
    %v1058 = vld [vmem:[%s12 + $0x90] sm:$0xf]
    %v1059 = vld [vmem:[%s12 + $0x94] sm:$0xf]
    %v1060 = vld [vmem:[%s12 + $0x98] sm:$0xf]
    %v1061 = vld [vmem:[%s12 + $0x9c] sm:$0xf]
    %v1062 = vld [vmem:[%s12 + $0xa0] sm:$0xf]
    %v1063 = vld [vmem:[%s12 + $0xa4] sm:$0xf]
    %v1064 = vld [vmem:[%s12 + $0xa8] sm:$0xf]
    %v1065 = vld [vmem:[%s12 + $0xac] sm:$0xf]
    %v1066 = vld [vmem:[%s12 + $0xb0] sm:$0xf]
    %v1067 = vld [vmem:[%s12 + $0xb4] sm:$0xf]
    %v1068 = vld [vmem:[%s12 + $0xb8] sm:$0xf]
    %v1069 = vld [vmem:[%s12 + $0xbc] sm:$0xf]
    %v1070 = vld [vmem:[%s12 + $0xc0] sm:$0xf]
    %v1071 = vld [vmem:[%s12 + $0xc4] sm:$0xf]
    %v1072 = vld [vmem:[%s12 + $0xc8] sm:$0xf]
    %v1073 = vld [vmem:[%s12 + $0xcc] sm:$0xf]
    %v1074 = vld [vmem:[%s12 + $0xd0] sm:$0xf]
    %v1075 = vld [vmem:[%s12 + $0xd4] sm:$0xf]
    %v1076 = vld [vmem:[%s12 + $0xd8] sm:$0xf]
    %v1077 = vld [vmem:[%s12 + $0xdc] sm:$0xf]
    %v1078 = vld [vmem:[%s12 + $0xe0] sm:$0xf]
    %v1079 = vld [vmem:[%s12 + $0xe4] sm:$0xf]
    %v1080 = vld [vmem:[%s12 + $0xe8] sm:$0xf]
    %v1081 = vld [vmem:[%s12 + $0xec] sm:$0xf]
    %v1082 = vld [vmem:[%s12 + $0xf0] sm:$0xf]
    %v1083 = vld [vmem:[%s12 + $0xf4] sm:$0xf]
    %v1084 = vld [vmem:[%s12 + $0xf8] sm:$0xf]
    %v1085 = vld [vmem:[%s12 + $0xfc] sm:$0xf]
    %s1086 = scalar_lea.vmem %s10, 16
    %v1087 = vld [vmem:[%s1086] sm:$0xff]
    %v1088 = vld [vmem:[%s1086 + $0x8] sm:$0xff]
    %v1089 = vld [vmem:[%s1086 + $0x40] sm:$0xff]
    %v1090 = vld [vmem:[%s1086 + $0x48] sm:$0xff]
    %v1091 = vld [vmem:[%s1086 + $0x80] sm:$0xff]
    %v1092 = vld [vmem:[%s1086 + $0x88] sm:$0xff]
    %v1093 = vld [vmem:[%s1086 + $0xc0] sm:$0xff]
    %v1094 = vld [vmem:[%s1086 + $0xc8] sm:$0xff]
    %s1095 = scalar_lea.vmem %s11, 4
    %v1096 = vld [vmem:[%s1095] sm:$0xf]
    %v1098 = vlaneseq
    %v1099 = vshrl.u32 %v1098, 7
    %v1100 = vsub.s32 0, %v1099
    %v1101 = vrot.slane %v1096, %v1100
    %v1102 = vlaneseq
    %v1103 = vshrl.u32 %v1102, 7
    %v1104 = vsub.s32 1, %v1103
    %v1105 = vrot.slane %v1096, %v1104
    %v1106 = vlaneseq
    %v1107 = vshrl.u32 %v1106, 7
    %v1108 = vsub.s32 2, %v1107
    %v1109 = vrot.slane %v1096, %v1108
    %v1110 = vlaneseq
    %v1111 = vshrl.u32 %v1110, 7
    %v1112 = vsub.s32 3, %v1111
    %v1113 = vrot.slane %v1096, %v1112
    %v1126 = vunpack.c.l.b16 %v1087
    %v1127 = vunpack.c.h.b16 %v1087
    %v1128 = vunpack.c.l.b16 %v1088
    %v1129 = vunpack.c.h.b16 %v1088
    %v1130 = vunpack.c.l.b16 %v1089
    %v1131 = vunpack.c.h.b16 %v1089
    %v1132 = vunpack.c.l.b16 %v1090
    %v1133 = vunpack.c.h.b16 %v1090
    %v1134 = vunpack.c.l.b16 %v1091
    %v1135 = vunpack.c.h.b16 %v1091
    %v1136 = vunpack.c.l.b16 %v1092
    %v1137 = vunpack.c.h.b16 %v1092
    %v1138 = vunpack.c.l.b16 %v1093
    %v1139 = vunpack.c.h.b16 %v1093
    %v1140 = vunpack.c.l.b16 %v1094
    %v1141 = vunpack.c.h.b16 %v1094
    %v1142 = vpack.c.b16 %v1130, %v1126
    %v1143 = vpack.c.b16 %v1131, %v1127
    %v1144 = vpack.c.b16 %v1132, %v1128
    %v1145 = vpack.c.b16 %v1133, %v1129
    %v1146 = vpack.c.b16 %v1138, %v1134
    %v1147 = vpack.c.b16 %v1139, %v1135
    %v1148 = vpack.c.b16 %v1140, %v1136
    %v1149 = vpack.c.b16 %v1141, %v1137
    %1158 = vmatprep.subr.bf16.mxu0 0
    %1159 = vmatpush1.bf16.msra.mxu0 0
    %1160 = vmatprep.subr.bf16.mxu0 0
    %1161 = vmatpush1.bf16.msra.mxu0 0
    %1162 = vmatprep.subr.bf16.mxu0 0
    %1163 = vmatpush1.bf16.msra.mxu0 0
    %1164 = vmatprep.subr.bf16.mxu0 0
    %1165 = vmatpush1.bf16.msra.mxu0 0
    %1166 = vmatprep.subr.bf16.mxu0 0
    %1167 = vmatpush1.bf16.msra.mxu0 0
    %1168 = vmatprep.subr.bf16.mxu0 0
    %1169 = vmatpush1.bf16.msra.mxu0 0
    %1170 = vmatprep.subr.bf16.mxu0 %v1147
    %1171 = vmatpush1.bf16.msra.mxu0 %v1146
    %1172 = vmatprep.subr.bf16.mxu0 %v1143
    %1173 = vmatpush1.bf16.msra.mxu0 %v1142
    %1174 = vmatprep.subr.bf16.mxu0 0
    %1175 = vmatpush2.bf16.msra.mxu0 0
    %1176 = vmatprep.subr.bf16.mxu0 0
    %1177 = vmatpush2.bf16.msra.mxu0 0
    %1178 = vmatprep.subr.bf16.mxu0 0
    %1179 = vmatpush2.bf16.msra.mxu0 0
    %1180 = vmatprep.subr.bf16.mxu0 0
    %1181 = vmatpush2.bf16.msra.mxu0 0
    %1182 = vmatprep.subr.bf16.mxu0 0
    %1183 = vmatpush2.bf16.msra.mxu0 0
    %1184 = vmatprep.subr.bf16.mxu0 0
    %1185 = vmatpush2.bf16.msra.mxu0 0
    %1186 = vmatprep.subr.bf16.mxu0 0
    %1187 = vmatpush2.bf16.msra.mxu0 0
    %1188 = vmatprep.subr.bf16.mxu0 0
    %1189 = vmatpush2.bf16.msra.mxu0 0
    %1190 = vmatprep.mubr.bf16.mxu0 0
    %1191 = vmatmul.mubr.bf16.gmra.mxu0 %v906
    %v1192 = vpop.f32.mrf.mxu0
    %v1193 = vadd.f32 %v1101, %v1192
    %v1194 = vpop.f32.mrf.mxu0
    %v1195 = vadd.f32 %v1105, %v1194
    %v1196 = vpop.f32.mrf.mxu0
    %v1197 = vadd.f32 %v1101, %v1196
    %v1198 = vpop.f32.mrf.mxu0
    %v1199 = vadd.f32 %v1105, %v1198
    %1200 = vdwg.mxu0
    %1201 = vmatprep.subr.bf16.mxu0 0
    %1202 = vmatpush1.bf16.msra.mxu0 0
    %1203 = vmatprep.subr.bf16.mxu0 0
    %1204 = vmatpush1.bf16.msra.mxu0 0
    %1205 = vmatprep.subr.bf16.mxu0 0
    %1206 = vmatpush1.bf16.msra.mxu0 0
    %1207 = vmatprep.subr.bf16.mxu0 0
    %1208 = vmatpush1.bf16.msra.mxu0 0
    %1209 = vmatprep.subr.bf16.mxu0 0
    %1210 = vmatpush1.bf16.msra.mxu0 0
    %1211 = vmatprep.subr.bf16.mxu0 0
    %1212 = vmatpush1.bf16.msra.mxu0 0
    %1213 = vmatprep.subr.bf16.mxu0 %v1149
    %1214 = vmatpush1.bf16.msra.mxu0 %v1148
    %1215 = vmatprep.subr.bf16.mxu0 %v1145
    %1216 = vmatpush1.bf16.msra.mxu0 %v1144
    %1217 = vmatprep.subr.bf16.mxu0 0
    %1218 = vmatpush2.bf16.msra.mxu0 0
    %1219 = vmatprep.subr.bf16.mxu0 0
    %1220 = vmatpush2.bf16.msra.mxu0 0
    %1221 = vmatprep.subr.bf16.mxu0 0
    %1222 = vmatpush2.bf16.msra.mxu0 0
    %1223 = vmatprep.subr.bf16.mxu0 0
    %1224 = vmatpush2.bf16.msra.mxu0 0
    %1225 = vmatprep.subr.bf16.mxu0 0
    %1226 = vmatpush2.bf16.msra.mxu0 0
    %1227 = vmatprep.subr.bf16.mxu0 0
    %1228 = vmatpush2.bf16.msra.mxu0 0
    %1229 = vmatprep.subr.bf16.mxu0 0
    %1230 = vmatpush2.bf16.msra.mxu0 0
    %1231 = vmatprep.subr.bf16.mxu0 0
    %1232 = vmatpush2.bf16.msra.mxu0 0
    %1233 = vmatprep.mubr.bf16.mxu0 0
    %1234 = vmatmul.mubr.bf16.gmra.mxu0 %v906
    %v1235 = vpop.f32.mrf.mxu0
    %v1236 = vadd.f32 %v1109, %v1235
    %v1237 = vpop.f32.mrf.mxu0
    %v1238 = vadd.f32 %v1113, %v1237
    %v1239 = vpop.f32.mrf.mxu0
    %v1240 = vadd.f32 %v1109, %v1239
    %v1241 = vpop.f32.mrf.mxu0
    %v1242 = vadd.f32 %v1113, %v1241
    %1243 = vdwg.mxu0
    %vm1244 = vcmp.ge.f32.partialorder %v1193, 0.0
    %vm1245 = vcmp.ge.f32.partialorder %v1195, 0.0
    %vm1246 = vcmp.ge.f32.partialorder %v1236, 0.0
    %vm1247 = vcmp.ge.f32.partialorder %v1238, 0.0
    %vm1248 = vcmp.ge.f32.partialorder %v1197, 0.0
    %vm1249 = vcmp.ge.f32.partialorder %v1199, 0.0
    %vm1250 = vcmp.ge.f32.partialorder %v1240, 0.0
    %vm1251 = vcmp.ge.f32.partialorder %v1242, 0.0
    %v1252 = vmul.f32 %v1193, 0.01
    %v1253 = vmul.f32 %v1195, 0.01
    %v1254 = vmul.f32 %v1236, 0.01
    %v1255 = vmul.f32 %v1238, 0.01
    %v1256 = vmul.f32 %v1197, 0.01
    %v1257 = vmul.f32 %v1199, 0.01
    %v1258 = vmul.f32 %v1240, 0.01
    %v1259 = vmul.f32 %v1242, 0.01
    %v1260 = vsel %vm1244, %v1193, %v1252
    %v1261 = vsel %vm1245, %v1195, %v1253
    %v1262 = vsel %vm1246, %v1236, %v1254
    %v1263 = vsel %vm1247, %v1238, %v1255
    %v1264 = vsel %vm1248, %v1197, %v1256
    %v1265 = vsel %vm1249, %v1199, %v1257
    %v1266 = vsel %vm1250, %v1240, %v1258
    %v1267 = vsel %vm1251, %v1242, %v1259
    %v1268 = vpack.c.bf16 %v1264, %v1260
    %v1269 = vpack.c.bf16 %v1265, %v1261
    %v1270 = vpack.c.bf16 %v1266, %v1262
    %v1271 = vpack.c.bf16 %v1267, %v1263
    %s1272 = scalar_lea.vmem %s12, 256
    %v1273 = vld [vmem:[%s1272] sm:$0xf]
    %v1274 = vld [vmem:[%s1272 + $0x4] sm:$0xf]
    %v1275 = vld [vmem:[%s1272 + $0x8] sm:$0xf]
    %v1276 = vld [vmem:[%s1272 + $0xc] sm:$0xf]
    %v1277 = vld [vmem:[%s1272 + $0x10] sm:$0xf]
    %v1278 = vld [vmem:[%s1272 + $0x14] sm:$0xf]
    %v1279 = vld [vmem:[%s1272 + $0x18] sm:$0xf]
    %v1280 = vld [vmem:[%s1272 + $0x1c] sm:$0xf]
    %v1281 = vld [vmem:[%s1272 + $0x20] sm:$0xf]
    %v1282 = vld [vmem:[%s1272 + $0x24] sm:$0xf]
    %v1283 = vld [vmem:[%s1272 + $0x28] sm:$0xf]
    %v1284 = vld [vmem:[%s1272 + $0x2c] sm:$0xf]
    %v1285 = vld [vmem:[%s1272 + $0x30] sm:$0xf]
    %v1286 = vld [vmem:[%s1272 + $0x34] sm:$0xf]
    %v1287 = vld [vmem:[%s1272 + $0x38] sm:$0xf]
    %v1288 = vld [vmem:[%s1272 + $0x3c] sm:$0xf]
    %v1289 = vld [vmem:[%s1272 + $0x40] sm:$0xf]
    %v1290 = vld [vmem:[%s1272 + $0x44] sm:$0xf]
    %v1291 = vld [vmem:[%s1272 + $0x48] sm:$0xf]
    %v1292 = vld [vmem:[%s1272 + $0x4c] sm:$0xf]
    %v1293 = vld [vmem:[%s1272 + $0x50] sm:$0xf]
    %v1294 = vld [vmem:[%s1272 + $0x54] sm:$0xf]
    %v1295 = vld [vmem:[%s1272 + $0x58] sm:$0xf]
    %v1296 = vld [vmem:[%s1272 + $0x5c] sm:$0xf]
    %v1297 = vld [vmem:[%s1272 + $0x60] sm:$0xf]
    %v1298 = vld [vmem:[%s1272 + $0x64] sm:$0xf]
    %v1299 = vld [vmem:[%s1272 + $0x68] sm:$0xf]
    %v1300 = vld [vmem:[%s1272 + $0x6c] sm:$0xf]
    %v1301 = vld [vmem:[%s1272 + $0x70] sm:$0xf]
    %v1302 = vld [vmem:[%s1272 + $0x74] sm:$0xf]
    %v1303 = vld [vmem:[%s1272 + $0x78] sm:$0xf]
    %v1304 = vld [vmem:[%s1272 + $0x7c] sm:$0xf]
    %v1305 = vld [vmem:[%s1272 + $0x80] sm:$0xf]
    %v1306 = vld [vmem:[%s1272 + $0x84] sm:$0xf]
    %v1307 = vld [vmem:[%s1272 + $0x88] sm:$0xf]
    %v1308 = vld [vmem:[%s1272 + $0x8c] sm:$0xf]
    %v1309 = vld [vmem:[%s1272 + $0x90] sm:$0xf]
    %v1310 = vld [vmem:[%s1272 + $0x94] sm:$0xf]
    %v1311 = vld [vmem:[%s1272 + $0x98] sm:$0xf]
    %v1312 = vld [vmem:[%s1272 + $0x9c] sm:$0xf]
    %v1313 = vld [vmem:[%s1272 + $0xa0] sm:$0xf]
    %v1314 = vld [vmem:[%s1272 + $0xa4] sm:$0xf]
    %v1315 = vld [vmem:[%s1272 + $0xa8] sm:$0xf]
    %v1316 = vld [vmem:[%s1272 + $0xac] sm:$0xf]
    %v1317 = vld [vmem:[%s1272 + $0xb0] sm:$0xf]
    %v1318 = vld [vmem:[%s1272 + $0xb4] sm:$0xf]
    %v1319 = vld [vmem:[%s1272 + $0xb8] sm:$0xf]
    %v1320 = vld [vmem:[%s1272 + $0xbc] sm:$0xf]
    %v1321 = vld [vmem:[%s1272 + $0xc0] sm:$0xf]
    %v1322 = vld [vmem:[%s1272 + $0xc4] sm:$0xf]
    %v1323 = vld [vmem:[%s1272 + $0xc8] sm:$0xf]
    %v1324 = vld [vmem:[%s1272 + $0xcc] sm:$0xf]
    %v1325 = vld [vmem:[%s1272 + $0xd0] sm:$0xf]
    %v1326 = vld [vmem:[%s1272 + $0xd4] sm:$0xf]
    %v1327 = vld [vmem:[%s1272 + $0xd8] sm:$0xf]
    %v1328 = vld [vmem:[%s1272 + $0xdc] sm:$0xf]
    %v1329 = vld [vmem:[%s1272 + $0xe0] sm:$0xf]
    %v1330 = vld [vmem:[%s1272 + $0xe4] sm:$0xf]
    %v1331 = vld [vmem:[%s1272 + $0xe8] sm:$0xf]
    %v1332 = vld [vmem:[%s1272 + $0xec] sm:$0xf]
    %v1333 = vld [vmem:[%s1272 + $0xf0] sm:$0xf]
    %v1334 = vld [vmem:[%s1272 + $0xf4] sm:$0xf]
    %v1335 = vld [vmem:[%s1272 + $0xf8] sm:$0xf]
    %v1336 = vld [vmem:[%s1272 + $0xfc] sm:$0xf]
    %v1401 = vunpack.c.l.b16 %v1273
    %v1402 = vunpack.c.l.b16 %v1274
    %v1403 = vunpack.c.l.b16 %v1275
    %v1404 = vunpack.c.l.b16 %v1276
    %v1405 = vunpack.c.l.b16 %v1277
    %v1406 = vunpack.c.l.b16 %v1278
    %v1407 = vunpack.c.l.b16 %v1279
    %v1408 = vunpack.c.l.b16 %v1280
    %v1409 = vunpack.c.l.b16 %v1281
    %v1410 = vunpack.c.l.b16 %v1282
    %v1411 = vunpack.c.l.b16 %v1283
    %v1412 = vunpack.c.l.b16 %v1284
    %v1413 = vunpack.c.l.b16 %v1285
    %v1414 = vunpack.c.l.b16 %v1286
    %v1415 = vunpack.c.l.b16 %v1287
    %v1416 = vunpack.c.l.b16 %v1288
    %v1417 = vunpack.c.l.b16 %v1289
    %v1418 = vunpack.c.l.b16 %v1290
    %v1419 = vunpack.c.l.b16 %v1291
    %v1420 = vunpack.c.l.b16 %v1292
    %v1421 = vunpack.c.l.b16 %v1293
    %v1422 = vunpack.c.l.b16 %v1294
    %v1423 = vunpack.c.l.b16 %v1295
    %v1424 = vunpack.c.l.b16 %v1296
    %v1425 = vunpack.c.l.b16 %v1297
    %v1426 = vunpack.c.l.b16 %v1298
    %v1427 = vunpack.c.l.b16 %v1299
    %v1428 = vunpack.c.l.b16 %v1300
    %v1429 = vunpack.c.l.b16 %v1301
    %v1430 = vunpack.c.l.b16 %v1302
    %v1431 = vunpack.c.l.b16 %v1303
    %v1432 = vunpack.c.l.b16 %v1304
    %v1433 = vunpack.c.l.b16 %v1305
    %v1434 = vunpack.c.l.b16 %v1306
    %v1435 = vunpack.c.l.b16 %v1307
    %v1436 = vunpack.c.l.b16 %v1308
    %v1437 = vunpack.c.l.b16 %v1309
    %v1438 = vunpack.c.l.b16 %v1310
    %v1439 = vunpack.c.l.b16 %v1311
    %v1440 = vunpack.c.l.b16 %v1312
    %v1441 = vunpack.c.l.b16 %v1313
    %v1442 = vunpack.c.l.b16 %v1314
    %v1443 = vunpack.c.l.b16 %v1315
    %v1444 = vunpack.c.l.b16 %v1316
    %v1445 = vunpack.c.l.b16 %v1317
    %v1446 = vunpack.c.l.b16 %v1318
    %v1447 = vunpack.c.l.b16 %v1319
    %v1448 = vunpack.c.l.b16 %v1320
    %v1449 = vunpack.c.l.b16 %v1321
    %v1450 = vunpack.c.l.b16 %v1322
    %v1451 = vunpack.c.l.b16 %v1323
    %v1452 = vunpack.c.l.b16 %v1324
    %v1453 = vunpack.c.l.b16 %v1325
    %v1454 = vunpack.c.l.b16 %v1326
    %v1455 = vunpack.c.l.b16 %v1327
    %v1456 = vunpack.c.l.b16 %v1328
    %v1457 = vunpack.c.l.b16 %v1329
    %v1458 = vunpack.c.l.b16 %v1330
    %v1459 = vunpack.c.l.b16 %v1331
    %v1460 = vunpack.c.l.b16 %v1332
    %v1461 = vunpack.c.l.b16 %v1333
    %v1462 = vunpack.c.l.b16 %v1334
    %v1463 = vunpack.c.l.b16 %v1335
    %v1464 = vunpack.c.l.b16 %v1336
    %v1465 = vpack.c.b16 %v1402, %v1401
    %v1466 = vpack.c.b16 %v1404, %v1403
    %v1467 = vpack.c.b16 %v1406, %v1405
    %v1468 = vpack.c.b16 %v1408, %v1407
    %v1469 = vpack.c.b16 %v1410, %v1409
    %v1470 = vpack.c.b16 %v1412, %v1411
    %v1471 = vpack.c.b16 %v1414, %v1413
    %v1472 = vpack.c.b16 %v1416, %v1415
    %v1473 = vpack.c.b16 %v1418, %v1417
    %v1474 = vpack.c.b16 %v1420, %v1419
    %v1475 = vpack.c.b16 %v1422, %v1421
    %v1476 = vpack.c.b16 %v1424, %v1423
    %v1477 = vpack.c.b16 %v1426, %v1425
    %v1478 = vpack.c.b16 %v1428, %v1427
    %v1479 = vpack.c.b16 %v1430, %v1429
    %v1480 = vpack.c.b16 %v1432, %v1431
    %v1481 = vpack.c.b16 %v1434, %v1433
    %v1482 = vpack.c.b16 %v1436, %v1435
    %v1483 = vpack.c.b16 %v1438, %v1437
    %v1484 = vpack.c.b16 %v1440, %v1439
    %v1485 = vpack.c.b16 %v1442, %v1441
    %v1486 = vpack.c.b16 %v1444, %v1443
    %v1487 = vpack.c.b16 %v1446, %v1445
    %v1488 = vpack.c.b16 %v1448, %v1447
    %v1489 = vpack.c.b16 %v1450, %v1449
    %v1490 = vpack.c.b16 %v1452, %v1451
    %v1491 = vpack.c.b16 %v1454, %v1453
    %v1492 = vpack.c.b16 %v1456, %v1455
    %v1493 = vpack.c.b16 %v1458, %v1457
    %v1494 = vpack.c.b16 %v1460, %v1459
    %v1495 = vpack.c.b16 %v1462, %v1461
    %v1496 = vpack.c.b16 %v1464, %v1463
    %1529 = vmatprep.subr.bf16.mxu0 0
    %1530 = vmatpush1.bf16.msra.mxu0 %v1472
    %1531 = vmatprep.subr.bf16.mxu0 0
    %1532 = vmatpush1.bf16.msra.mxu0 %v1471
    %1533 = vmatprep.subr.bf16.mxu0 0
    %1534 = vmatpush1.bf16.msra.mxu0 %v1470
    %1535 = vmatprep.subr.bf16.mxu0 0
    %1536 = vmatpush1.bf16.msra.mxu0 %v1469
    %1537 = vmatprep.subr.bf16.mxu0 0
    %1538 = vmatpush1.bf16.msra.mxu0 %v1468
    %1539 = vmatprep.subr.bf16.mxu0 0
    %1540 = vmatpush1.bf16.msra.mxu0 %v1467
    %1541 = vmatprep.subr.bf16.mxu0 0
    %1542 = vmatpush1.bf16.msra.mxu0 %v1466
    %1543 = vmatprep.subr.bf16.mxu0 0
    %1544 = vmatpush1.bf16.msra.mxu0 %v1465
    %1545 = vmatprep.subr.bf16.mxu0 0
    %1546 = vmatpush2.bf16.msra.mxu0 %v1480
    %1547 = vmatprep.subr.bf16.mxu0 0
    %1548 = vmatpush2.bf16.msra.mxu0 %v1479
    %1549 = vmatprep.subr.bf16.mxu0 0
    %1550 = vmatpush2.bf16.msra.mxu0 %v1478
    %1551 = vmatprep.subr.bf16.mxu0 0
    %1552 = vmatpush2.bf16.msra.mxu0 %v1477
    %1553 = vmatprep.subr.bf16.mxu0 0
    %1554 = vmatpush2.bf16.msra.mxu0 %v1476
    %1555 = vmatprep.subr.bf16.mxu0 0
    %1556 = vmatpush2.bf16.msra.mxu0 %v1475
    %1557 = vmatprep.subr.bf16.mxu0 0
    %1558 = vmatpush2.bf16.msra.mxu0 %v1474
    %1559 = vmatprep.subr.bf16.mxu0 0
    %1560 = vmatpush2.bf16.msra.mxu0 %v1473
    %1561 = vmatprep.mubr.bf16.mxu0 %v1269
    %1562 = vmatmul.mubr.bf16.gmra.mxu0 %v1268
    %v1563 = vpop.f32.mrf.mxu0
    %v1564 = vadd.f32 0.0, %v1563
    %v1565 = vpop.f32.mrf.mxu0
    %v1566 = vpop.f32.mrf.mxu0
    %v1567 = vadd.f32 0.0, %v1566
    %v1568 = vpop.f32.mrf.mxu0
    %1569 = vdwg.mxu0
    %1570 = vmatprep.subr.bf16.mxu0 0
    %1571 = vmatpush1.bf16.msra.mxu0 %v1488
    %1572 = vmatprep.subr.bf16.mxu0 0
    %1573 = vmatpush1.bf16.msra.mxu0 %v1487
    %1574 = vmatprep.subr.bf16.mxu0 0
    %1575 = vmatpush1.bf16.msra.mxu0 %v1486
    %1576 = vmatprep.subr.bf16.mxu0 0
    %1577 = vmatpush1.bf16.msra.mxu0 %v1485
    %1578 = vmatprep.subr.bf16.mxu0 0
    %1579 = vmatpush1.bf16.msra.mxu0 %v1484
    %1580 = vmatprep.subr.bf16.mxu0 0
    %1581 = vmatpush1.bf16.msra.mxu0 %v1483
    %1582 = vmatprep.subr.bf16.mxu0 0
    %1583 = vmatpush1.bf16.msra.mxu0 %v1482
    %1584 = vmatprep.subr.bf16.mxu0 0
    %1585 = vmatpush1.bf16.msra.mxu0 %v1481
    %1586 = vmatprep.subr.bf16.mxu0 0
    %1587 = vmatpush2.bf16.msra.mxu0 %v1496
    %1588 = vmatprep.subr.bf16.mxu0 0
    %1589 = vmatpush2.bf16.msra.mxu0 %v1495
    %1590 = vmatprep.subr.bf16.mxu0 0
    %1591 = vmatpush2.bf16.msra.mxu0 %v1494
    %1592 = vmatprep.subr.bf16.mxu0 0
    %1593 = vmatpush2.bf16.msra.mxu0 %v1493
    %1594 = vmatprep.subr.bf16.mxu0 0
    %1595 = vmatpush2.bf16.msra.mxu0 %v1492
    %1596 = vmatprep.subr.bf16.mxu0 0
    %1597 = vmatpush2.bf16.msra.mxu0 %v1491
    %1598 = vmatprep.subr.bf16.mxu0 0
    %1599 = vmatpush2.bf16.msra.mxu0 %v1490
    %1600 = vmatprep.subr.bf16.mxu0 0
    %1601 = vmatpush2.bf16.msra.mxu0 %v1489
    %1602 = vmatprep.mubr.bf16.mxu0 %v1271
    %1603 = vmatmul.mubr.bf16.gmra.mxu0 %v1270
    %v1604 = vpop.f32.mrf.mxu0
    %v1605 = vadd.f32 %v1564, %v1604
    %v1606 = vpop.f32.mrf.mxu0
    %v1607 = vpop.f32.mrf.mxu0
    %v1608 = vadd.f32 %v1567, %v1607
    %v1609 = vpop.f32.mrf.mxu0
    %1610 = vdwg.mxu0
    %v1675 = vunpack.c.l.b16 %v1022
    %v1676 = vunpack.c.l.b16 %v1023
    %v1677 = vunpack.c.l.b16 %v1024
    %v1678 = vunpack.c.l.b16 %v1025
    %v1679 = vunpack.c.l.b16 %v1026
    %v1680 = vunpack.c.l.b16 %v1027
    %v1681 = vunpack.c.l.b16 %v1028
    %v1682 = vunpack.c.l.b16 %v1029
    %v1683 = vunpack.c.l.b16 %v1030
    %v1684 = vunpack.c.l.b16 %v1031
    %v1685 = vunpack.c.l.b16 %v1032
    %v1686 = vunpack.c.l.b16 %v1033
    %v1687 = vunpack.c.l.b16 %v1034
    %v1688 = vunpack.c.l.b16 %v1035
    %v1689 = vunpack.c.l.b16 %v1036
    %v1690 = vunpack.c.l.b16 %v1037
    %v1691 = vunpack.c.l.b16 %v1038
    %v1692 = vunpack.c.l.b16 %v1039
    %v1693 = vunpack.c.l.b16 %v1040
    %v1694 = vunpack.c.l.b16 %v1041
    %v1695 = vunpack.c.l.b16 %v1042
    %v1696 = vunpack.c.l.b16 %v1043
    %v1697 = vunpack.c.l.b16 %v1044
    %v1698 = vunpack.c.l.b16 %v1045
    %v1699 = vunpack.c.l.b16 %v1046
    %v1700 = vunpack.c.l.b16 %v1047
    %v1701 = vunpack.c.l.b16 %v1048
    %v1702 = vunpack.c.l.b16 %v1049
    %v1703 = vunpack.c.l.b16 %v1050
    %v1704 = vunpack.c.l.b16 %v1051
    %v1705 = vunpack.c.l.b16 %v1052
    %v1706 = vunpack.c.l.b16 %v1053
    %v1707 = vunpack.c.l.b16 %v1054
    %v1708 = vunpack.c.l.b16 %v1055
    %v1709 = vunpack.c.l.b16 %v1056
    %v1710 = vunpack.c.l.b16 %v1057
    %v1711 = vunpack.c.l.b16 %v1058
    %v1712 = vunpack.c.l.b16 %v1059
    %v1713 = vunpack.c.l.b16 %v1060
    %v1714 = vunpack.c.l.b16 %v1061
    %v1715 = vunpack.c.l.b16 %v1062
    %v1716 = vunpack.c.l.b16 %v1063
    %v1717 = vunpack.c.l.b16 %v1064
    %v1718 = vunpack.c.l.b16 %v1065
    %v1719 = vunpack.c.l.b16 %v1066
    %v1720 = vunpack.c.l.b16 %v1067
    %v1721 = vunpack.c.l.b16 %v1068
    %v1722 = vunpack.c.l.b16 %v1069
    %v1723 = vunpack.c.l.b16 %v1070
    %v1724 = vunpack.c.l.b16 %v1071
    %v1725 = vunpack.c.l.b16 %v1072
    %v1726 = vunpack.c.l.b16 %v1073
    %v1727 = vunpack.c.l.b16 %v1074
    %v1728 = vunpack.c.l.b16 %v1075
    %v1729 = vunpack.c.l.b16 %v1076
    %v1730 = vunpack.c.l.b16 %v1077
    %v1731 = vunpack.c.l.b16 %v1078
    %v1732 = vunpack.c.l.b16 %v1079
    %v1733 = vunpack.c.l.b16 %v1080
    %v1734 = vunpack.c.l.b16 %v1081
    %v1735 = vunpack.c.l.b16 %v1082
    %v1736 = vunpack.c.l.b16 %v1083
    %v1737 = vunpack.c.l.b16 %v1084
    %v1738 = vunpack.c.l.b16 %v1085
    %v1739 = vpack.c.b16 %v1676, %v1675
    %v1740 = vpack.c.b16 %v1678, %v1677
    %v1741 = vpack.c.b16 %v1680, %v1679
    %v1742 = vpack.c.b16 %v1682, %v1681
    %v1743 = vpack.c.b16 %v1684, %v1683
    %v1744 = vpack.c.b16 %v1686, %v1685
    %v1745 = vpack.c.b16 %v1688, %v1687
    %v1746 = vpack.c.b16 %v1690, %v1689
    %v1747 = vpack.c.b16 %v1692, %v1691
    %v1748 = vpack.c.b16 %v1694, %v1693
    %v1749 = vpack.c.b16 %v1696, %v1695
    %v1750 = vpack.c.b16 %v1698, %v1697
    %v1751 = vpack.c.b16 %v1700, %v1699
    %v1752 = vpack.c.b16 %v1702, %v1701
    %v1753 = vpack.c.b16 %v1704, %v1703
    %v1754 = vpack.c.b16 %v1706, %v1705
    %v1755 = vpack.c.b16 %v1708, %v1707
    %v1756 = vpack.c.b16 %v1710, %v1709
    %v1757 = vpack.c.b16 %v1712, %v1711
    %v1758 = vpack.c.b16 %v1714, %v1713
    %v1759 = vpack.c.b16 %v1716, %v1715
    %v1760 = vpack.c.b16 %v1718, %v1717
    %v1761 = vpack.c.b16 %v1720, %v1719
    %v1762 = vpack.c.b16 %v1722, %v1721
    %v1763 = vpack.c.b16 %v1724, %v1723
    %v1764 = vpack.c.b16 %v1726, %v1725
    %v1765 = vpack.c.b16 %v1728, %v1727
    %v1766 = vpack.c.b16 %v1730, %v1729
    %v1767 = vpack.c.b16 %v1732, %v1731
    %v1768 = vpack.c.b16 %v1734, %v1733
    %v1769 = vpack.c.b16 %v1736, %v1735
    %v1770 = vpack.c.b16 %v1738, %v1737
    %1803 = vmatprep.subr.bf16.mxu0 0
    %1804 = vmatpush1.bf16.msra.mxu0 %v1746
    %1805 = vmatprep.subr.bf16.mxu0 0
    %1806 = vmatpush1.bf16.msra.mxu0 %v1745
    %1807 = vmatprep.subr.bf16.mxu0 0
    %1808 = vmatpush1.bf16.msra.mxu0 %v1744
    %1809 = vmatprep.subr.bf16.mxu0 0
    %1810 = vmatpush1.bf16.msra.mxu0 %v1743
    %1811 = vmatprep.subr.bf16.mxu0 0
    %1812 = vmatpush1.bf16.msra.mxu0 %v1742
    %1813 = vmatprep.subr.bf16.mxu0 0
    %1814 = vmatpush1.bf16.msra.mxu0 %v1741
    %1815 = vmatprep.subr.bf16.mxu0 0
    %1816 = vmatpush1.bf16.msra.mxu0 %v1740
    %1817 = vmatprep.subr.bf16.mxu0 0
    %1818 = vmatpush1.bf16.msra.mxu0 %v1739
    %1819 = vmatprep.subr.bf16.mxu0 0
    %1820 = vmatpush2.bf16.msra.mxu0 %v1754
    %1821 = vmatprep.subr.bf16.mxu0 0
    %1822 = vmatpush2.bf16.msra.mxu0 %v1753
    %1823 = vmatprep.subr.bf16.mxu0 0
    %1824 = vmatpush2.bf16.msra.mxu0 %v1752
    %1825 = vmatprep.subr.bf16.mxu0 0
    %1826 = vmatpush2.bf16.msra.mxu0 %v1751
    %1827 = vmatprep.subr.bf16.mxu0 0
    %1828 = vmatpush2.bf16.msra.mxu0 %v1750
    %1829 = vmatprep.subr.bf16.mxu0 0
    %1830 = vmatpush2.bf16.msra.mxu0 %v1749
    %1831 = vmatprep.subr.bf16.mxu0 0
    %1832 = vmatpush2.bf16.msra.mxu0 %v1748
    %1833 = vmatprep.subr.bf16.mxu0 0
    %1834 = vmatpush2.bf16.msra.mxu0 %v1747
    %1835 = vmatprep.mubr.bf16.mxu0 %v1019
    %1836 = vmatmul.mubr.bf16.gmra.mxu0 %v1018
    %v1837 = vpop.f32.mrf.mxu0
    %v1838 = vadd.f32 %v1605, %v1837
    %v1839 = vpop.f32.mrf.mxu0
    %v1840 = vpop.f32.mrf.mxu0
    %v1841 = vadd.f32 %v1608, %v1840
    %v1842 = vpop.f32.mrf.mxu0
    %1843 = vdwg.mxu0
    %1844 = vmatprep.subr.bf16.mxu0 0
    %1845 = vmatpush1.bf16.msra.mxu0 %v1762
    %1846 = vmatprep.subr.bf16.mxu0 0
    %1847 = vmatpush1.bf16.msra.mxu0 %v1761
    %1848 = vmatprep.subr.bf16.mxu0 0
    %1849 = vmatpush1.bf16.msra.mxu0 %v1760
    %1850 = vmatprep.subr.bf16.mxu0 0
    %1851 = vmatpush1.bf16.msra.mxu0 %v1759
    %1852 = vmatprep.subr.bf16.mxu0 0
    %1853 = vmatpush1.bf16.msra.mxu0 %v1758
    %1854 = vmatprep.subr.bf16.mxu0 0
    %1855 = vmatpush1.bf16.msra.mxu0 %v1757
    %1856 = vmatprep.subr.bf16.mxu0 0
    %1857 = vmatpush1.bf16.msra.mxu0 %v1756
    %1858 = vmatprep.subr.bf16.mxu0 0
    %1859 = vmatpush1.bf16.msra.mxu0 %v1755
    %1860 = vmatprep.subr.bf16.mxu0 0
    %1861 = vmatpush2.bf16.msra.mxu0 %v1770
    %1862 = vmatprep.subr.bf16.mxu0 0
    %1863 = vmatpush2.bf16.msra.mxu0 %v1769
    %1864 = vmatprep.subr.bf16.mxu0 0
    %1865 = vmatpush2.bf16.msra.mxu0 %v1768
    %1866 = vmatprep.subr.bf16.mxu0 0
    %1867 = vmatpush2.bf16.msra.mxu0 %v1767
    %1868 = vmatprep.subr.bf16.mxu0 0
    %1869 = vmatpush2.bf16.msra.mxu0 %v1766
    %1870 = vmatprep.subr.bf16.mxu0 0
    %1871 = vmatpush2.bf16.msra.mxu0 %v1765
    %1872 = vmatprep.subr.bf16.mxu0 0
    %1873 = vmatpush2.bf16.msra.mxu0 %v1764
    %1874 = vmatprep.subr.bf16.mxu0 0
    %1875 = vmatpush2.bf16.msra.mxu0 %v1763
    %1876 = vmatprep.mubr.bf16.mxu0 %v1021
    %1877 = vmatmul.mubr.bf16.gmra.mxu0 %v1020
    %v1878 = vpop.f32.mrf.mxu0
    %v1879 = vadd.f32 %v1838, %v1878
    %v1880 = vpop.f32.mrf.mxu0
    %v1881 = vpop.f32.mrf.mxu0
    %v1882 = vadd.f32 %v1841, %v1881
    %v1883 = vpop.f32.mrf.mxu0
    %1884 = vdwg.mxu0
    %s1885 = scalar_lea.vmem %s10, 32
    %v1886 = vld [vmem:[%s1885] sm:$0xff]
    %v1887 = vld [vmem:[%s1885 + $0x8] sm:$0xff]
    %v1888 = vld [vmem:[%s1885 + $0x40] sm:$0xff]
    %v1889 = vld [vmem:[%s1885 + $0x48] sm:$0xff]
    %v1890 = vld [vmem:[%s1885 + $0x80] sm:$0xff]
    %v1891 = vld [vmem:[%s1885 + $0x88] sm:$0xff]
    %v1892 = vld [vmem:[%s1885 + $0xc0] sm:$0xff]
    %v1893 = vld [vmem:[%s1885 + $0xc8] sm:$0xff]
    %s1894 = scalar_lea.vmem %s11, 8
    %v1895 = vld [vmem:[%s1894] sm:$0xf]
    %v1897 = vlaneseq
    %v1898 = vshrl.u32 %v1897, 7
    %v1899 = vsub.s32 0, %v1898
    %v1900 = vrot.slane %v1895, %v1899
    %v1901 = vlaneseq
    %v1902 = vshrl.u32 %v1901, 7
    %v1903 = vsub.s32 1, %v1902
    %v1904 = vrot.slane %v1895, %v1903
    %v1905 = vlaneseq
    %v1906 = vshrl.u32 %v1905, 7
    %v1907 = vsub.s32 2, %v1906
    %v1908 = vrot.slane %v1895, %v1907
    %v1909 = vlaneseq
    %v1910 = vshrl.u32 %v1909, 7
    %v1911 = vsub.s32 3, %v1910
    %v1912 = vrot.slane %v1895, %v1911
    %v1925 = vunpack.c.l.b16 %v1886
    %v1926 = vunpack.c.h.b16 %v1886
    %v1927 = vunpack.c.l.b16 %v1887
    %v1928 = vunpack.c.h.b16 %v1887
    %v1929 = vunpack.c.l.b16 %v1888
    %v1930 = vunpack.c.h.b16 %v1888
    %v1931 = vunpack.c.l.b16 %v1889
    %v1932 = vunpack.c.h.b16 %v1889
    %v1933 = vunpack.c.l.b16 %v1890
    %v1934 = vunpack.c.h.b16 %v1890
    %v1935 = vunpack.c.l.b16 %v1891
    %v1936 = vunpack.c.h.b16 %v1891
    %v1937 = vunpack.c.l.b16 %v1892
    %v1938 = vunpack.c.h.b16 %v1892
    %v1939 = vunpack.c.l.b16 %v1893
    %v1940 = vunpack.c.h.b16 %v1893
    %v1941 = vpack.c.b16 %v1929, %v1925
    %v1942 = vpack.c.b16 %v1930, %v1926
    %v1943 = vpack.c.b16 %v1931, %v1927
    %v1944 = vpack.c.b16 %v1932, %v1928
    %v1945 = vpack.c.b16 %v1937, %v1933
    %v1946 = vpack.c.b16 %v1938, %v1934
    %v1947 = vpack.c.b16 %v1939, %v1935
    %v1948 = vpack.c.b16 %v1940, %v1936
    %1957 = vmatprep.subr.bf16.mxu0 0
    %1958 = vmatpush1.bf16.msra.mxu0 0
    %1959 = vmatprep.subr.bf16.mxu0 0
    %1960 = vmatpush1.bf16.msra.mxu0 0
    %1961 = vmatprep.subr.bf16.mxu0 0
    %1962 = vmatpush1.bf16.msra.mxu0 0
    %1963 = vmatprep.subr.bf16.mxu0 0
    %1964 = vmatpush1.bf16.msra.mxu0 0
    %1965 = vmatprep.subr.bf16.mxu0 0
    %1966 = vmatpush1.bf16.msra.mxu0 0
    %1967 = vmatprep.subr.bf16.mxu0 0
    %1968 = vmatpush1.bf16.msra.mxu0 0
    %1969 = vmatprep.subr.bf16.mxu0 %v1946
    %1970 = vmatpush1.bf16.msra.mxu0 %v1945
    %1971 = vmatprep.subr.bf16.mxu0 %v1942
    %1972 = vmatpush1.bf16.msra.mxu0 %v1941
    %1973 = vmatprep.subr.bf16.mxu0 0
    %1974 = vmatpush2.bf16.msra.mxu0 0
    %1975 = vmatprep.subr.bf16.mxu0 0
    %1976 = vmatpush2.bf16.msra.mxu0 0
    %1977 = vmatprep.subr.bf16.mxu0 0
    %1978 = vmatpush2.bf16.msra.mxu0 0
    %1979 = vmatprep.subr.bf16.mxu0 0
    %1980 = vmatpush2.bf16.msra.mxu0 0
    %1981 = vmatprep.subr.bf16.mxu0 0
    %1982 = vmatpush2.bf16.msra.mxu0 0
    %1983 = vmatprep.subr.bf16.mxu0 0
    %1984 = vmatpush2.bf16.msra.mxu0 0
    %1985 = vmatprep.subr.bf16.mxu0 0
    %1986 = vmatpush2.bf16.msra.mxu0 0
    %1987 = vmatprep.subr.bf16.mxu0 0
    %1988 = vmatpush2.bf16.msra.mxu0 0
    %1989 = vmatprep.mubr.bf16.mxu0 0
    %1990 = vmatmul.mubr.bf16.gmra.mxu0 %v906
    %v1991 = vpop.f32.mrf.mxu0
    %v1992 = vadd.f32 %v1900, %v1991
    %v1993 = vpop.f32.mrf.mxu0
    %v1994 = vadd.f32 %v1904, %v1993
    %v1995 = vpop.f32.mrf.mxu0
    %v1996 = vadd.f32 %v1900, %v1995
    %v1997 = vpop.f32.mrf.mxu0
    %v1998 = vadd.f32 %v1904, %v1997
    %1999 = vdwg.mxu0
    %2000 = vmatprep.subr.bf16.mxu0 0
    %2001 = vmatpush1.bf16.msra.mxu0 0
    %2002 = vmatprep.subr.bf16.mxu0 0
    %2003 = vmatpush1.bf16.msra.mxu0 0
    %2004 = vmatprep.subr.bf16.mxu0 0
    %2005 = vmatpush1.bf16.msra.mxu0 0
    %2006 = vmatprep.subr.bf16.mxu0 0
    %2007 = vmatpush1.bf16.msra.mxu0 0
    %2008 = vmatprep.subr.bf16.mxu0 0
    %2009 = vmatpush1.bf16.msra.mxu0 0
    %2010 = vmatprep.subr.bf16.mxu0 0
    %2011 = vmatpush1.bf16.msra.mxu0 0
    %2012 = vmatprep.subr.bf16.mxu0 %v1948
    %2013 = vmatpush1.bf16.msra.mxu0 %v1947
    %2014 = vmatprep.subr.bf16.mxu0 %v1944
    %2015 = vmatpush1.bf16.msra.mxu0 %v1943
    %2016 = vmatprep.subr.bf16.mxu0 0
    %2017 = vmatpush2.bf16.msra.mxu0 0
    %2018 = vmatprep.subr.bf16.mxu0 0
    %2019 = vmatpush2.bf16.msra.mxu0 0
    %2020 = vmatprep.subr.bf16.mxu0 0
    %2021 = vmatpush2.bf16.msra.mxu0 0
    %2022 = vmatprep.subr.bf16.mxu0 0
    %2023 = vmatpush2.bf16.msra.mxu0 0
    %2024 = vmatprep.subr.bf16.mxu0 0
    %2025 = vmatpush2.bf16.msra.mxu0 0
    %2026 = vmatprep.subr.bf16.mxu0 0
    %2027 = vmatpush2.bf16.msra.mxu0 0
    %2028 = vmatprep.subr.bf16.mxu0 0
    %2029 = vmatpush2.bf16.msra.mxu0 0
    %2030 = vmatprep.subr.bf16.mxu0 0
    %2031 = vmatpush2.bf16.msra.mxu0 0
    %2032 = vmatprep.mubr.bf16.mxu0 0
    %2033 = vmatmul.mubr.bf16.gmra.mxu0 %v906
    %v2034 = vpop.f32.mrf.mxu0
    %v2035 = vadd.f32 %v1908, %v2034
    %v2036 = vpop.f32.mrf.mxu0
    %v2037 = vadd.f32 %v1912, %v2036
    %v2038 = vpop.f32.mrf.mxu0
    %v2039 = vadd.f32 %v1908, %v2038
    %v2040 = vpop.f32.mrf.mxu0
    %v2041 = vadd.f32 %v1912, %v2040
    %2042 = vdwg.mxu0
    %vm2043 = vcmp.ge.f32.partialorder %v1992, 0.0
    %vm2044 = vcmp.ge.f32.partialorder %v1994, 0.0
    %vm2045 = vcmp.ge.f32.partialorder %v2035, 0.0
    %vm2046 = vcmp.ge.f32.partialorder %v2037, 0.0
    %vm2047 = vcmp.ge.f32.partialorder %v1996, 0.0
    %vm2048 = vcmp.ge.f32.partialorder %v1998, 0.0
    %vm2049 = vcmp.ge.f32.partialorder %v2039, 0.0
    %vm2050 = vcmp.ge.f32.partialorder %v2041, 0.0
    %v2051 = vmul.f32 %v1992, 0.01
    %v2052 = vmul.f32 %v1994, 0.01
    %v2053 = vmul.f32 %v2035, 0.01
    %v2054 = vmul.f32 %v2037, 0.01
    %v2055 = vmul.f32 %v1996, 0.01
    %v2056 = vmul.f32 %v1998, 0.01
    %v2057 = vmul.f32 %v2039, 0.01
    %v2058 = vmul.f32 %v2041, 0.01
    %v2059 = vsel %vm2043, %v1992, %v2051
    %v2060 = vsel %vm2044, %v1994, %v2052
    %v2061 = vsel %vm2045, %v2035, %v2053
    %v2062 = vsel %vm2046, %v2037, %v2054
    %v2063 = vsel %vm2047, %v1996, %v2055
    %v2064 = vsel %vm2048, %v1998, %v2056
    %v2065 = vsel %vm2049, %v2039, %v2057
    %v2066 = vsel %vm2050, %v2041, %v2058
    %v2067 = vpack.c.bf16 %v2063, %v2059
    %v2068 = vpack.c.bf16 %v2064, %v2060
    %v2069 = vpack.c.bf16 %v2065, %v2061
    %v2070 = vpack.c.bf16 %v2066, %v2062
    %s2071 = scalar_lea.vmem %s12, 512
    %v2072 = vld [vmem:[%s2071] sm:$0xf]
    %v2073 = vld [vmem:[%s2071 + $0x4] sm:$0xf]
    %v2074 = vld [vmem:[%s2071 + $0x8] sm:$0xf]
    %v2075 = vld [vmem:[%s2071 + $0xc] sm:$0xf]
    %v2076 = vld [vmem:[%s2071 + $0x10] sm:$0xf]
    %v2077 = vld [vmem:[%s2071 + $0x14] sm:$0xf]
    %v2078 = vld [vmem:[%s2071 + $0x18] sm:$0xf]
    %v2079 = vld [vmem:[%s2071 + $0x1c] sm:$0xf]
    %v2080 = vld [vmem:[%s2071 + $0x20] sm:$0xf]
    %v2081 = vld [vmem:[%s2071 + $0x24] sm:$0xf]
    %v2082 = vld [vmem:[%s2071 + $0x28] sm:$0xf]
    %v2083 = vld [vmem:[%s2071 + $0x2c] sm:$0xf]
    %v2084 = vld [vmem:[%s2071 + $0x30] sm:$0xf]
    %v2085 = vld [vmem:[%s2071 + $0x34] sm:$0xf]
    %v2086 = vld [vmem:[%s2071 + $0x38] sm:$0xf]
    %v2087 = vld [vmem:[%s2071 + $0x3c] sm:$0xf]
    %v2088 = vld [vmem:[%s2071 + $0x40] sm:$0xf]
    %v2089 = vld [vmem:[%s2071 + $0x44] sm:$0xf]
    %v2090 = vld [vmem:[%s2071 + $0x48] sm:$0xf]
    %v2091 = vld [vmem:[%s2071 + $0x4c] sm:$0xf]
    %v2092 = vld [vmem:[%s2071 + $0x50] sm:$0xf]
    %v2093 = vld [vmem:[%s2071 + $0x54] sm:$0xf]
    %v2094 = vld [vmem:[%s2071 + $0x58] sm:$0xf]
    %v2095 = vld [vmem:[%s2071 + $0x5c] sm:$0xf]
    %v2096 = vld [vmem:[%s2071 + $0x60] sm:$0xf]
    %v2097 = vld [vmem:[%s2071 + $0x64] sm:$0xf]
    %v2098 = vld [vmem:[%s2071 + $0x68] sm:$0xf]
    %v2099 = vld [vmem:[%s2071 + $0x6c] sm:$0xf]
    %v2100 = vld [vmem:[%s2071 + $0x70] sm:$0xf]
    %v2101 = vld [vmem:[%s2071 + $0x74] sm:$0xf]
    %v2102 = vld [vmem:[%s2071 + $0x78] sm:$0xf]
    %v2103 = vld [vmem:[%s2071 + $0x7c] sm:$0xf]
    %v2104 = vld [vmem:[%s2071 + $0x80] sm:$0xf]
    %v2105 = vld [vmem:[%s2071 + $0x84] sm:$0xf]
    %v2106 = vld [vmem:[%s2071 + $0x88] sm:$0xf]
    %v2107 = vld [vmem:[%s2071 + $0x8c] sm:$0xf]
    %v2108 = vld [vmem:[%s2071 + $0x90] sm:$0xf]
    %v2109 = vld [vmem:[%s2071 + $0x94] sm:$0xf]
    %v2110 = vld [vmem:[%s2071 + $0x98] sm:$0xf]
    %v2111 = vld [vmem:[%s2071 + $0x9c] sm:$0xf]
    %v2112 = vld [vmem:[%s2071 + $0xa0] sm:$0xf]
    %v2113 = vld [vmem:[%s2071 + $0xa4] sm:$0xf]
    %v2114 = vld [vmem:[%s2071 + $0xa8] sm:$0xf]
    %v2115 = vld [vmem:[%s2071 + $0xac] sm:$0xf]
    %v2116 = vld [vmem:[%s2071 + $0xb0] sm:$0xf]
    %v2117 = vld [vmem:[%s2071 + $0xb4] sm:$0xf]
    %v2118 = vld [vmem:[%s2071 + $0xb8] sm:$0xf]
    %v2119 = vld [vmem:[%s2071 + $0xbc] sm:$0xf]
    %v2120 = vld [vmem:[%s2071 + $0xc0] sm:$0xf]
    %v2121 = vld [vmem:[%s2071 + $0xc4] sm:$0xf]
    %v2122 = vld [vmem:[%s2071 + $0xc8] sm:$0xf]
    %v2123 = vld [vmem:[%s2071 + $0xcc] sm:$0xf]
    %v2124 = vld [vmem:[%s2071 + $0xd0] sm:$0xf]
    %v2125 = vld [vmem:[%s2071 + $0xd4] sm:$0xf]
    %v2126 = vld [vmem:[%s2071 + $0xd8] sm:$0xf]
    %v2127 = vld [vmem:[%s2071 + $0xdc] sm:$0xf]
    %v2128 = vld [vmem:[%s2071 + $0xe0] sm:$0xf]
    %v2129 = vld [vmem:[%s2071 + $0xe4] sm:$0xf]
    %v2130 = vld [vmem:[%s2071 + $0xe8] sm:$0xf]
    %v2131 = vld [vmem:[%s2071 + $0xec] sm:$0xf]
    %v2132 = vld [vmem:[%s2071 + $0xf0] sm:$0xf]
    %v2133 = vld [vmem:[%s2071 + $0xf4] sm:$0xf]
    %v2134 = vld [vmem:[%s2071 + $0xf8] sm:$0xf]
    %v2135 = vld [vmem:[%s2071 + $0xfc] sm:$0xf]
    %v2200 = vunpack.c.l.b16 %v2072
    %v2201 = vunpack.c.l.b16 %v2073
    %v2202 = vunpack.c.l.b16 %v2074
    %v2203 = vunpack.c.l.b16 %v2075
    %v2204 = vunpack.c.l.b16 %v2076
    %v2205 = vunpack.c.l.b16 %v2077
    %v2206 = vunpack.c.l.b16 %v2078
    %v2207 = vunpack.c.l.b16 %v2079
    %v2208 = vunpack.c.l.b16 %v2080
    %v2209 = vunpack.c.l.b16 %v2081
    %v2210 = vunpack.c.l.b16 %v2082
    %v2211 = vunpack.c.l.b16 %v2083
    %v2212 = vunpack.c.l.b16 %v2084
    %v2213 = vunpack.c.l.b16 %v2085
    %v2214 = vunpack.c.l.b16 %v2086
    %v2215 = vunpack.c.l.b16 %v2087
    %v2216 = vunpack.c.l.b16 %v2088
    %v2217 = vunpack.c.l.b16 %v2089
    %v2218 = vunpack.c.l.b16 %v2090
    %v2219 = vunpack.c.l.b16 %v2091
    %v2220 = vunpack.c.l.b16 %v2092
    %v2221 = vunpack.c.l.b16 %v2093
    %v2222 = vunpack.c.l.b16 %v2094
    %v2223 = vunpack.c.l.b16 %v2095
    %v2224 = vunpack.c.l.b16 %v2096
    %v2225 = vunpack.c.l.b16 %v2097
    %v2226 = vunpack.c.l.b16 %v2098
    %v2227 = vunpack.c.l.b16 %v2099
    %v2228 = vunpack.c.l.b16 %v2100
    %v2229 = vunpack.c.l.b16 %v2101
    %v2230 = vunpack.c.l.b16 %v2102
    %v2231 = vunpack.c.l.b16 %v2103
    %v2232 = vunpack.c.l.b16 %v2104
    %v2233 = vunpack.c.l.b16 %v2105
    %v2234 = vunpack.c.l.b16 %v2106
    %v2235 = vunpack.c.l.b16 %v2107
    %v2236 = vunpack.c.l.b16 %v2108
    %v2237 = vunpack.c.l.b16 %v2109
    %v2238 = vunpack.c.l.b16 %v2110
    %v2239 = vunpack.c.l.b16 %v2111
    %v2240 = vunpack.c.l.b16 %v2112
    %v2241 = vunpack.c.l.b16 %v2113
    %v2242 = vunpack.c.l.b16 %v2114
    %v2243 = vunpack.c.l.b16 %v2115
    %v2244 = vunpack.c.l.b16 %v2116
    %v2245 = vunpack.c.l.b16 %v2117
    %v2246 = vunpack.c.l.b16 %v2118
    %v2247 = vunpack.c.l.b16 %v2119
    %v2248 = vunpack.c.l.b16 %v2120
    %v2249 = vunpack.c.l.b16 %v2121
    %v2250 = vunpack.c.l.b16 %v2122
    %v2251 = vunpack.c.l.b16 %v2123
    %v2252 = vunpack.c.l.b16 %v2124
    %v2253 = vunpack.c.l.b16 %v2125
    %v2254 = vunpack.c.l.b16 %v2126
    %v2255 = vunpack.c.l.b16 %v2127
    %v2256 = vunpack.c.l.b16 %v2128
    %v2257 = vunpack.c.l.b16 %v2129
    %v2258 = vunpack.c.l.b16 %v2130
    %v2259 = vunpack.c.l.b16 %v2131
    %v2260 = vunpack.c.l.b16 %v2132
    %v2261 = vunpack.c.l.b16 %v2133
    %v2262 = vunpack.c.l.b16 %v2134
    %v2263 = vunpack.c.l.b16 %v2135
    %v2264 = vpack.c.b16 %v2201, %v2200
    %v2265 = vpack.c.b16 %v2203, %v2202
    %v2266 = vpack.c.b16 %v2205, %v2204
    %v2267 = vpack.c.b16 %v2207, %v2206
    %v2268 = vpack.c.b16 %v2209, %v2208
    %v2269 = vpack.c.b16 %v2211, %v2210
    %v2270 = vpack.c.b16 %v2213, %v2212
    %v2271 = vpack.c.b16 %v2215, %v2214
    %v2272 = vpack.c.b16 %v2217, %v2216
    %v2273 = vpack.c.b16 %v2219, %v2218
    %v2274 = vpack.c.b16 %v2221, %v2220
    %v2275 = vpack.c.b16 %v2223, %v2222
    %v2276 = vpack.c.b16 %v2225, %v2224
    %v2277 = vpack.c.b16 %v2227, %v2226
    %v2278 = vpack.c.b16 %v2229, %v2228
    %v2279 = vpack.c.b16 %v2231, %v2230
    %v2280 = vpack.c.b16 %v2233, %v2232
    %v2281 = vpack.c.b16 %v2235, %v2234
    %v2282 = vpack.c.b16 %v2237, %v2236
    %v2283 = vpack.c.b16 %v2239, %v2238
    %v2284 = vpack.c.b16 %v2241, %v2240
    %v2285 = vpack.c.b16 %v2243, %v2242
    %v2286 = vpack.c.b16 %v2245, %v2244
    %v2287 = vpack.c.b16 %v2247, %v2246
    %v2288 = vpack.c.b16 %v2249, %v2248
    %v2289 = vpack.c.b16 %v2251, %v2250
    %v2290 = vpack.c.b16 %v2253, %v2252
    %v2291 = vpack.c.b16 %v2255, %v2254
    %v2292 = vpack.c.b16 %v2257, %v2256
    %v2293 = vpack.c.b16 %v2259, %v2258
    %v2294 = vpack.c.b16 %v2261, %v2260
    %v2295 = vpack.c.b16 %v2263, %v2262
    %2328 = vmatprep.subr.bf16.mxu0 0
    %2329 = vmatpush1.bf16.msra.mxu0 %v2271
    %2330 = vmatprep.subr.bf16.mxu0 0
    %2331 = vmatpush1.bf16.msra.mxu0 %v2270
    %2332 = vmatprep.subr.bf16.mxu0 0
    %2333 = vmatpush1.bf16.msra.mxu0 %v2269
    %2334 = vmatprep.subr.bf16.mxu0 0
    %2335 = vmatpush1.bf16.msra.mxu0 %v2268
    %2336 = vmatprep.subr.bf16.mxu0 0
    %2337 = vmatpush1.bf16.msra.mxu0 %v2267
    %2338 = vmatprep.subr.bf16.mxu0 0
    %2339 = vmatpush1.bf16.msra.mxu0 %v2266
    %2340 = vmatprep.subr.bf16.mxu0 0
    %2341 = vmatpush1.bf16.msra.mxu0 %v2265
    %2342 = vmatprep.subr.bf16.mxu0 0
    %2343 = vmatpush1.bf16.msra.mxu0 %v2264
    %2344 = vmatprep.subr.bf16.mxu0 0
    %2345 = vmatpush2.bf16.msra.mxu0 %v2279
    %2346 = vmatprep.subr.bf16.mxu0 0
    %2347 = vmatpush2.bf16.msra.mxu0 %v2278
    %2348 = vmatprep.subr.bf16.mxu0 0
    %2349 = vmatpush2.bf16.msra.mxu0 %v2277
    %2350 = vmatprep.subr.bf16.mxu0 0
    %2351 = vmatpush2.bf16.msra.mxu0 %v2276
    %2352 = vmatprep.subr.bf16.mxu0 0
    %2353 = vmatpush2.bf16.msra.mxu0 %v2275
    %2354 = vmatprep.subr.bf16.mxu0 0
    %2355 = vmatpush2.bf16.msra.mxu0 %v2274
    %2356 = vmatprep.subr.bf16.mxu0 0
    %2357 = vmatpush2.bf16.msra.mxu0 %v2273
    %2358 = vmatprep.subr.bf16.mxu0 0
    %2359 = vmatpush2.bf16.msra.mxu0 %v2272
    %2360 = vmatprep.mubr.bf16.mxu0 %v2068
    %2361 = vmatmul.mubr.bf16.gmra.mxu0 %v2067
    %v2362 = vpop.f32.mrf.mxu0
    %v2363 = vadd.f32 0.0, %v2362
    %v2364 = vpop.f32.mrf.mxu0
    %v2365 = vpop.f32.mrf.mxu0
    %v2366 = vadd.f32 0.0, %v2365
    %v2367 = vpop.f32.mrf.mxu0
    %2368 = vdwg.mxu0
    %2369 = vmatprep.subr.bf16.mxu0 0
    %2370 = vmatpush1.bf16.msra.mxu0 %v2287
    %2371 = vmatprep.subr.bf16.mxu0 0
    %2372 = vmatpush1.bf16.msra.mxu0 %v2286
    %2373 = vmatprep.subr.bf16.mxu0 0
    %2374 = vmatpush1.bf16.msra.mxu0 %v2285
    %2375 = vmatprep.subr.bf16.mxu0 0
    %2376 = vmatpush1.bf16.msra.mxu0 %v2284
    %2377 = vmatprep.subr.bf16.mxu0 0
    %2378 = vmatpush1.bf16.msra.mxu0 %v2283
    %2379 = vmatprep.subr.bf16.mxu0 0
    %2380 = vmatpush1.bf16.msra.mxu0 %v2282
    %2381 = vmatprep.subr.bf16.mxu0 0
    %2382 = vmatpush1.bf16.msra.mxu0 %v2281
    %2383 = vmatprep.subr.bf16.mxu0 0
    %2384 = vmatpush1.bf16.msra.mxu0 %v2280
    %2385 = vmatprep.subr.bf16.mxu0 0
    %2386 = vmatpush2.bf16.msra.mxu0 %v2295
    %2387 = vmatprep.subr.bf16.mxu0 0
    %2388 = vmatpush2.bf16.msra.mxu0 %v2294
    %2389 = vmatprep.subr.bf16.mxu0 0
    %2390 = vmatpush2.bf16.msra.mxu0 %v2293
    %2391 = vmatprep.subr.bf16.mxu0 0
    %2392 = vmatpush2.bf16.msra.mxu0 %v2292
    %2393 = vmatprep.subr.bf16.mxu0 0
    %2394 = vmatpush2.bf16.msra.mxu0 %v2291
    %2395 = vmatprep.subr.bf16.mxu0 0
    %2396 = vmatpush2.bf16.msra.mxu0 %v2290
    %2397 = vmatprep.subr.bf16.mxu0 0
    %2398 = vmatpush2.bf16.msra.mxu0 %v2289
    %2399 = vmatprep.subr.bf16.mxu0 0
    %2400 = vmatpush2.bf16.msra.mxu0 %v2288
    %2401 = vmatprep.mubr.bf16.mxu0 %v2070
    %2402 = vmatmul.mubr.bf16.gmra.mxu0 %v2069
    %v2403 = vpop.f32.mrf.mxu0
    %v2404 = vadd.f32 %v2363, %v2403
    %v2405 = vpop.f32.mrf.mxu0
    %v2406 = vpop.f32.mrf.mxu0
    %v2407 = vadd.f32 %v2366, %v2406
    %v2408 = vpop.f32.mrf.mxu0
    %2409 = vdwg.mxu0
    %v2410 = vadd.f32 %v1879, %v2404
    %v2411 = vadd.f32 %v1882, %v2407
    %s2412 = scalar_lea.vmem %s10, 48
    %v2413 = vld [vmem:[%s2412] sm:$0xff]
    %v2414 = vld [vmem:[%s2412 + $0x8] sm:$0xff]
    %v2415 = vld [vmem:[%s2412 + $0x40] sm:$0xff]
    %v2416 = vld [vmem:[%s2412 + $0x48] sm:$0xff]
    %v2417 = vld [vmem:[%s2412 + $0x80] sm:$0xff]
    %v2418 = vld [vmem:[%s2412 + $0x88] sm:$0xff]
    %v2419 = vld [vmem:[%s2412 + $0xc0] sm:$0xff]
    %v2420 = vld [vmem:[%s2412 + $0xc8] sm:$0xff]
    %s2421 = scalar_lea.vmem %s11, 12
    %v2422 = vld [vmem:[%s2421] sm:$0xf]
    %v2424 = vlaneseq
    %v2425 = vshrl.u32 %v2424, 7
    %v2426 = vsub.s32 0, %v2425
    %v2427 = vrot.slane %v2422, %v2426
    %v2428 = vlaneseq
    %v2429 = vshrl.u32 %v2428, 7
    %v2430 = vsub.s32 1, %v2429
    %v2431 = vrot.slane %v2422, %v2430
    %v2432 = vlaneseq
    %v2433 = vshrl.u32 %v2432, 7
    %v2434 = vsub.s32 2, %v2433
    %v2435 = vrot.slane %v2422, %v2434
    %v2436 = vlaneseq
    %v2437 = vshrl.u32 %v2436, 7
    %v2438 = vsub.s32 3, %v2437
    %v2439 = vrot.slane %v2422, %v2438
    %v2452 = vunpack.c.l.b16 %v2413
    %v2453 = vunpack.c.h.b16 %v2413
    %v2454 = vunpack.c.l.b16 %v2414
    %v2455 = vunpack.c.h.b16 %v2414
    %v2456 = vunpack.c.l.b16 %v2415
    %v2457 = vunpack.c.h.b16 %v2415
    %v2458 = vunpack.c.l.b16 %v2416
    %v2459 = vunpack.c.h.b16 %v2416
    %v2460 = vunpack.c.l.b16 %v2417
    %v2461 = vunpack.c.h.b16 %v2417
    %v2462 = vunpack.c.l.b16 %v2418
    %v2463 = vunpack.c.h.b16 %v2418
    %v2464 = vunpack.c.l.b16 %v2419
    %v2465 = vunpack.c.h.b16 %v2419
    %v2466 = vunpack.c.l.b16 %v2420
    %v2467 = vunpack.c.h.b16 %v2420
    %v2468 = vpack.c.b16 %v2456, %v2452
    %v2469 = vpack.c.b16 %v2457, %v2453
    %v2470 = vpack.c.b16 %v2458, %v2454
    %v2471 = vpack.c.b16 %v2459, %v2455
    %v2472 = vpack.c.b16 %v2464, %v2460
    %v2473 = vpack.c.b16 %v2465, %v2461
    %v2474 = vpack.c.b16 %v2466, %v2462
    %v2475 = vpack.c.b16 %v2467, %v2463
    %2484 = vmatprep.subr.bf16.mxu0 0
    %2485 = vmatpush1.bf16.msra.mxu0 0
    %2486 = vmatprep.subr.bf16.mxu0 0
    %2487 = vmatpush1.bf16.msra.mxu0 0
    %2488 = vmatprep.subr.bf16.mxu0 0
    %2489 = vmatpush1.bf16.msra.mxu0 0
    %2490 = vmatprep.subr.bf16.mxu0 0
    %2491 = vmatpush1.bf16.msra.mxu0 0
    %2492 = vmatprep.subr.bf16.mxu0 0
    %2493 = vmatpush1.bf16.msra.mxu0 0
    %2494 = vmatprep.subr.bf16.mxu0 0
    %2495 = vmatpush1.bf16.msra.mxu0 0
    %2496 = vmatprep.subr.bf16.mxu0 %v2473
    %2497 = vmatpush1.bf16.msra.mxu0 %v2472
    %2498 = vmatprep.subr.bf16.mxu0 %v2469
    %2499 = vmatpush1.bf16.msra.mxu0 %v2468
    %2500 = vmatprep.subr.bf16.mxu0 0
    %2501 = vmatpush2.bf16.msra.mxu0 0
    %2502 = vmatprep.subr.bf16.mxu0 0
    %2503 = vmatpush2.bf16.msra.mxu0 0
    %2504 = vmatprep.subr.bf16.mxu0 0
    %2505 = vmatpush2.bf16.msra.mxu0 0
    %2506 = vmatprep.subr.bf16.mxu0 0
    %2507 = vmatpush2.bf16.msra.mxu0 0
    %2508 = vmatprep.subr.bf16.mxu0 0
    %2509 = vmatpush2.bf16.msra.mxu0 0
    %2510 = vmatprep.subr.bf16.mxu0 0
    %2511 = vmatpush2.bf16.msra.mxu0 0
    %2512 = vmatprep.subr.bf16.mxu0 0
    %2513 = vmatpush2.bf16.msra.mxu0 0
    %2514 = vmatprep.subr.bf16.mxu0 0
    %2515 = vmatpush2.bf16.msra.mxu0 0
    %2516 = vmatprep.mubr.bf16.mxu0 0
    %2517 = vmatmul.mubr.bf16.gmra.mxu0 %v906
    %v2518 = vpop.f32.mrf.mxu0
    %v2519 = vadd.f32 %v2427, %v2518
    %v2520 = vpop.f32.mrf.mxu0
    %v2521 = vadd.f32 %v2431, %v2520
    %v2522 = vpop.f32.mrf.mxu0
    %v2523 = vadd.f32 %v2427, %v2522
    %v2524 = vpop.f32.mrf.mxu0
    %v2525 = vadd.f32 %v2431, %v2524
    %2526 = vdwg.mxu0
    %2527 = vmatprep.subr.bf16.mxu0 0
    %2528 = vmatpush1.bf16.msra.mxu0 0
    %2529 = vmatprep.subr.bf16.mxu0 0
    %2530 = vmatpush1.bf16.msra.mxu0 0
    %2531 = vmatprep.subr.bf16.mxu0 0
    %2532 = vmatpush1.bf16.msra.mxu0 0
    %2533 = vmatprep.subr.bf16.mxu0 0
    %2534 = vmatpush1.bf16.msra.mxu0 0
    %2535 = vmatprep.subr.bf16.mxu0 0
    %2536 = vmatpush1.bf16.msra.mxu0 0
    %2537 = vmatprep.subr.bf16.mxu0 0
    %2538 = vmatpush1.bf16.msra.mxu0 0
    %2539 = vmatprep.subr.bf16.mxu0 %v2475
    %2540 = vmatpush1.bf16.msra.mxu0 %v2474
    %2541 = vmatprep.subr.bf16.mxu0 %v2471
    %2542 = vmatpush1.bf16.msra.mxu0 %v2470
    %2543 = vmatprep.subr.bf16.mxu0 0
    %2544 = vmatpush2.bf16.msra.mxu0 0
    %2545 = vmatprep.subr.bf16.mxu0 0
    %2546 = vmatpush2.bf16.msra.mxu0 0
    %2547 = vmatprep.subr.bf16.mxu0 0
    %2548 = vmatpush2.bf16.msra.mxu0 0
    %2549 = vmatprep.subr.bf16.mxu0 0
    %2550 = vmatpush2.bf16.msra.mxu0 0
    %2551 = vmatprep.subr.bf16.mxu0 0
    %2552 = vmatpush2.bf16.msra.mxu0 0
    %2553 = vmatprep.subr.bf16.mxu0 0
    %2554 = vmatpush2.bf16.msra.mxu0 0
    %2555 = vmatprep.subr.bf16.mxu0 0
    %2556 = vmatpush2.bf16.msra.mxu0 0
    %2557 = vmatprep.subr.bf16.mxu0 0
    %2558 = vmatpush2.bf16.msra.mxu0 0
    %2559 = vmatprep.mubr.bf16.mxu0 0
    %2560 = vmatmul.mubr.bf16.gmra.mxu0 %v906
    %v2561 = vpop.f32.mrf.mxu0
    %v2562 = vadd.f32 %v2435, %v2561
    %v2563 = vpop.f32.mrf.mxu0
    %v2564 = vadd.f32 %v2439, %v2563
    %v2565 = vpop.f32.mrf.mxu0
    %v2566 = vadd.f32 %v2435, %v2565
    %v2567 = vpop.f32.mrf.mxu0
    %v2568 = vadd.f32 %v2439, %v2567
    %2569 = vdwg.mxu0
    %vm2570 = vcmp.ge.f32.partialorder %v2519, 0.0
    %vm2571 = vcmp.ge.f32.partialorder %v2521, 0.0
    %vm2572 = vcmp.ge.f32.partialorder %v2562, 0.0
    %vm2573 = vcmp.ge.f32.partialorder %v2564, 0.0
    %vm2574 = vcmp.ge.f32.partialorder %v2523, 0.0
    %vm2575 = vcmp.ge.f32.partialorder %v2525, 0.0
    %vm2576 = vcmp.ge.f32.partialorder %v2566, 0.0
    %vm2577 = vcmp.ge.f32.partialorder %v2568, 0.0
    %v2578 = vmul.f32 %v2519, 0.01
    %v2579 = vmul.f32 %v2521, 0.01
    %v2580 = vmul.f32 %v2562, 0.01
    %v2581 = vmul.f32 %v2564, 0.01
    %v2582 = vmul.f32 %v2523, 0.01
    %v2583 = vmul.f32 %v2525, 0.01
    %v2584 = vmul.f32 %v2566, 0.01
    %v2585 = vmul.f32 %v2568, 0.01
    %v2586 = vsel %vm2570, %v2519, %v2578
    %v2587 = vsel %vm2571, %v2521, %v2579
    %v2588 = vsel %vm2572, %v2562, %v2580
    %v2589 = vsel %vm2573, %v2564, %v2581
    %v2590 = vsel %vm2574, %v2523, %v2582
    %v2591 = vsel %vm2575, %v2525, %v2583
    %v2592 = vsel %vm2576, %v2566, %v2584
    %v2593 = vsel %vm2577, %v2568, %v2585
    %v2594 = vpack.c.bf16 %v2590, %v2586
    %v2595 = vpack.c.bf16 %v2591, %v2587
    %v2596 = vpack.c.bf16 %v2592, %v2588
    %v2597 = vpack.c.bf16 %v2593, %v2589
    %s2598 = scalar_lea.vmem %s12, 768
    %v2599 = vld [vmem:[%s2598] sm:$0xf]
    %v2600 = vld [vmem:[%s2598 + $0x4] sm:$0xf]
    %v2601 = vld [vmem:[%s2598 + $0x8] sm:$0xf]
    %v2602 = vld [vmem:[%s2598 + $0xc] sm:$0xf]
    %v2603 = vld [vmem:[%s2598 + $0x10] sm:$0xf]
    %v2604 = vld [vmem:[%s2598 + $0x14] sm:$0xf]
    %v2605 = vld [vmem:[%s2598 + $0x18] sm:$0xf]
    %v2606 = vld [vmem:[%s2598 + $0x1c] sm:$0xf]
    %v2607 = vld [vmem:[%s2598 + $0x20] sm:$0xf]
    %v2608 = vld [vmem:[%s2598 + $0x24] sm:$0xf]
    %v2609 = vld [vmem:[%s2598 + $0x28] sm:$0xf]
    %v2610 = vld [vmem:[%s2598 + $0x2c] sm:$0xf]
    %v2611 = vld [vmem:[%s2598 + $0x30] sm:$0xf]
    %v2612 = vld [vmem:[%s2598 + $0x34] sm:$0xf]
    %v2613 = vld [vmem:[%s2598 + $0x38] sm:$0xf]
    %v2614 = vld [vmem:[%s2598 + $0x3c] sm:$0xf]
    %v2615 = vld [vmem:[%s2598 + $0x40] sm:$0xf]
    %v2616 = vld [vmem:[%s2598 + $0x44] sm:$0xf]
    %v2617 = vld [vmem:[%s2598 + $0x48] sm:$0xf]
    %v2618 = vld [vmem:[%s2598 + $0x4c] sm:$0xf]
    %v2619 = vld [vmem:[%s2598 + $0x50] sm:$0xf]
    %v2620 = vld [vmem:[%s2598 + $0x54] sm:$0xf]
    %v2621 = vld [vmem:[%s2598 + $0x58] sm:$0xf]
    %v2622 = vld [vmem:[%s2598 + $0x5c] sm:$0xf]
    %v2623 = vld [vmem:[%s2598 + $0x60] sm:$0xf]
    %v2624 = vld [vmem:[%s2598 + $0x64] sm:$0xf]
    %v2625 = vld [vmem:[%s2598 + $0x68] sm:$0xf]
    %v2626 = vld [vmem:[%s2598 + $0x6c] sm:$0xf]
    %v2627 = vld [vmem:[%s2598 + $0x70] sm:$0xf]
    %v2628 = vld [vmem:[%s2598 + $0x74] sm:$0xf]
    %v2629 = vld [vmem:[%s2598 + $0x78] sm:$0xf]
    %v2630 = vld [vmem:[%s2598 + $0x7c] sm:$0xf]
    %v2631 = vld [vmem:[%s2598 + $0x80] sm:$0xf]
    %v2632 = vld [vmem:[%s2598 + $0x84] sm:$0xf]
    %v2633 = vld [vmem:[%s2598 + $0x88] sm:$0xf]
    %v2634 = vld [vmem:[%s2598 + $0x8c] sm:$0xf]
    %v2635 = vld [vmem:[%s2598 + $0x90] sm:$0xf]
    %v2636 = vld [vmem:[%s2598 + $0x94] sm:$0xf]
    %v2637 = vld [vmem:[%s2598 + $0x98] sm:$0xf]
    %v2638 = vld [vmem:[%s2598 + $0x9c] sm:$0xf]
    %v2639 = vld [vmem:[%s2598 + $0xa0] sm:$0xf]
    %v2640 = vld [vmem:[%s2598 + $0xa4] sm:$0xf]
    %v2641 = vld [vmem:[%s2598 + $0xa8] sm:$0xf]
    %v2642 = vld [vmem:[%s2598 + $0xac] sm:$0xf]
    %v2643 = vld [vmem:[%s2598 + $0xb0] sm:$0xf]
    %v2644 = vld [vmem:[%s2598 + $0xb4] sm:$0xf]
    %v2645 = vld [vmem:[%s2598 + $0xb8] sm:$0xf]
    %v2646 = vld [vmem:[%s2598 + $0xbc] sm:$0xf]
    %v2647 = vld [vmem:[%s2598 + $0xc0] sm:$0xf]
    %v2648 = vld [vmem:[%s2598 + $0xc4] sm:$0xf]
    %v2649 = vld [vmem:[%s2598 + $0xc8] sm:$0xf]
    %v2650 = vld [vmem:[%s2598 + $0xcc] sm:$0xf]
    %v2651 = vld [vmem:[%s2598 + $0xd0] sm:$0xf]
    %v2652 = vld [vmem:[%s2598 + $0xd4] sm:$0xf]
    %v2653 = vld [vmem:[%s2598 + $0xd8] sm:$0xf]
    %v2654 = vld [vmem:[%s2598 + $0xdc] sm:$0xf]
    %v2655 = vld [vmem:[%s2598 + $0xe0] sm:$0xf]
    %v2656 = vld [vmem:[%s2598 + $0xe4] sm:$0xf]
    %v2657 = vld [vmem:[%s2598 + $0xe8] sm:$0xf]
    %v2658 = vld [vmem:[%s2598 + $0xec] sm:$0xf]
    %v2659 = vld [vmem:[%s2598 + $0xf0] sm:$0xf]
    %v2660 = vld [vmem:[%s2598 + $0xf4] sm:$0xf]
    %v2661 = vld [vmem:[%s2598 + $0xf8] sm:$0xf]
    %v2662 = vld [vmem:[%s2598 + $0xfc] sm:$0xf]
    %v2727 = vunpack.c.l.b16 %v2599
    %v2728 = vunpack.c.l.b16 %v2600
    %v2729 = vunpack.c.l.b16 %v2601
    %v2730 = vunpack.c.l.b16 %v2602
    %v2731 = vunpack.c.l.b16 %v2603
    %v2732 = vunpack.c.l.b16 %v2604
    %v2733 = vunpack.c.l.b16 %v2605
    %v2734 = vunpack.c.l.b16 %v2606
    %v2735 = vunpack.c.l.b16 %v2607
    %v2736 = vunpack.c.l.b16 %v2608
    %v2737 = vunpack.c.l.b16 %v2609
    %v2738 = vunpack.c.l.b16 %v2610
    %v2739 = vunpack.c.l.b16 %v2611
    %v2740 = vunpack.c.l.b16 %v2612
    %v2741 = vunpack.c.l.b16 %v2613
    %v2742 = vunpack.c.l.b16 %v2614
    %v2743 = vunpack.c.l.b16 %v2615
    %v2744 = vunpack.c.l.b16 %v2616
    %v2745 = vunpack.c.l.b16 %v2617
    %v2746 = vunpack.c.l.b16 %v2618
    %v2747 = vunpack.c.l.b16 %v2619
    %v2748 = vunpack.c.l.b16 %v2620
    %v2749 = vunpack.c.l.b16 %v2621
    %v2750 = vunpack.c.l.b16 %v2622
    %v2751 = vunpack.c.l.b16 %v2623
    %v2752 = vunpack.c.l.b16 %v2624
    %v2753 = vunpack.c.l.b16 %v2625
    %v2754 = vunpack.c.l.b16 %v2626
    %v2755 = vunpack.c.l.b16 %v2627
    %v2756 = vunpack.c.l.b16 %v2628
    %v2757 = vunpack.c.l.b16 %v2629
    %v2758 = vunpack.c.l.b16 %v2630
    %v2759 = vunpack.c.l.b16 %v2631
    %v2760 = vunpack.c.l.b16 %v2632
    %v2761 = vunpack.c.l.b16 %v2633
    %v2762 = vunpack.c.l.b16 %v2634
    %v2763 = vunpack.c.l.b16 %v2635
    %v2764 = vunpack.c.l.b16 %v2636
    %v2765 = vunpack.c.l.b16 %v2637
    %v2766 = vunpack.c.l.b16 %v2638
    %v2767 = vunpack.c.l.b16 %v2639
    %v2768 = vunpack.c.l.b16 %v2640
    %v2769 = vunpack.c.l.b16 %v2641
    %v2770 = vunpack.c.l.b16 %v2642
    %v2771 = vunpack.c.l.b16 %v2643
    %v2772 = vunpack.c.l.b16 %v2644
    %v2773 = vunpack.c.l.b16 %v2645
    %v2774 = vunpack.c.l.b16 %v2646
    %v2775 = vunpack.c.l.b16 %v2647
    %v2776 = vunpack.c.l.b16 %v2648
    %v2777 = vunpack.c.l.b16 %v2649
    %v2778 = vunpack.c.l.b16 %v2650
    %v2779 = vunpack.c.l.b16 %v2651
    %v2780 = vunpack.c.l.b16 %v2652
    %v2781 = vunpack.c.l.b16 %v2653
    %v2782 = vunpack.c.l.b16 %v2654
    %v2783 = vunpack.c.l.b16 %v2655
    %v2784 = vunpack.c.l.b16 %v2656
    %v2785 = vunpack.c.l.b16 %v2657
    %v2786 = vunpack.c.l.b16 %v2658
    %v2787 = vunpack.c.l.b16 %v2659
    %v2788 = vunpack.c.l.b16 %v2660
    %v2789 = vunpack.c.l.b16 %v2661
    %v2790 = vunpack.c.l.b16 %v2662
    %v2791 = vpack.c.b16 %v2728, %v2727
    %v2792 = vpack.c.b16 %v2730, %v2729
    %v2793 = vpack.c.b16 %v2732, %v2731
    %v2794 = vpack.c.b16 %v2734, %v2733
    %v2795 = vpack.c.b16 %v2736, %v2735
    %v2796 = vpack.c.b16 %v2738, %v2737
    %v2797 = vpack.c.b16 %v2740, %v2739
    %v2798 = vpack.c.b16 %v2742, %v2741
    %v2799 = vpack.c.b16 %v2744, %v2743
    %v2800 = vpack.c.b16 %v2746, %v2745
    %v2801 = vpack.c.b16 %v2748, %v2747
    %v2802 = vpack.c.b16 %v2750, %v2749
    %v2803 = vpack.c.b16 %v2752, %v2751
    %v2804 = vpack.c.b16 %v2754, %v2753
    %v2805 = vpack.c.b16 %v2756, %v2755
    %v2806 = vpack.c.b16 %v2758, %v2757
    %v2807 = vpack.c.b16 %v2760, %v2759
    %v2808 = vpack.c.b16 %v2762, %v2761
    %v2809 = vpack.c.b16 %v2764, %v2763
    %v2810 = vpack.c.b16 %v2766, %v2765
    %v2811 = vpack.c.b16 %v2768, %v2767
    %v2812 = vpack.c.b16 %v2770, %v2769
    %v2813 = vpack.c.b16 %v2772, %v2771
    %v2814 = vpack.c.b16 %v2774, %v2773
    %v2815 = vpack.c.b16 %v2776, %v2775
    %v2816 = vpack.c.b16 %v2778, %v2777
    %v2817 = vpack.c.b16 %v2780, %v2779
    %v2818 = vpack.c.b16 %v2782, %v2781
    %v2819 = vpack.c.b16 %v2784, %v2783
    %v2820 = vpack.c.b16 %v2786, %v2785
    %v2821 = vpack.c.b16 %v2788, %v2787
    %v2822 = vpack.c.b16 %v2790, %v2789
    %2855 = vmatprep.subr.bf16.mxu0 0
    %2856 = vmatpush1.bf16.msra.mxu0 %v2798
    %2857 = vmatprep.subr.bf16.mxu0 0
    %2858 = vmatpush1.bf16.msra.mxu0 %v2797
    %2859 = vmatprep.subr.bf16.mxu0 0
    %2860 = vmatpush1.bf16.msra.mxu0 %v2796
    %2861 = vmatprep.subr.bf16.mxu0 0
    %2862 = vmatpush1.bf16.msra.mxu0 %v2795
    %2863 = vmatprep.subr.bf16.mxu0 0
    %2864 = vmatpush1.bf16.msra.mxu0 %v2794
    %2865 = vmatprep.subr.bf16.mxu0 0
    %2866 = vmatpush1.bf16.msra.mxu0 %v2793
    %2867 = vmatprep.subr.bf16.mxu0 0
    %2868 = vmatpush1.bf16.msra.mxu0 %v2792
    %2869 = vmatprep.subr.bf16.mxu0 0
    %2870 = vmatpush1.bf16.msra.mxu0 %v2791
    %2871 = vmatprep.subr.bf16.mxu0 0
    %2872 = vmatpush2.bf16.msra.mxu0 %v2806
    %2873 = vmatprep.subr.bf16.mxu0 0
    %2874 = vmatpush2.bf16.msra.mxu0 %v2805
    %2875 = vmatprep.subr.bf16.mxu0 0
    %2876 = vmatpush2.bf16.msra.mxu0 %v2804
    %2877 = vmatprep.subr.bf16.mxu0 0
    %2878 = vmatpush2.bf16.msra.mxu0 %v2803
    %2879 = vmatprep.subr.bf16.mxu0 0
    %2880 = vmatpush2.bf16.msra.mxu0 %v2802
    %2881 = vmatprep.subr.bf16.mxu0 0
    %2882 = vmatpush2.bf16.msra.mxu0 %v2801
    %2883 = vmatprep.subr.bf16.mxu0 0
    %2884 = vmatpush2.bf16.msra.mxu0 %v2800
    %2885 = vmatprep.subr.bf16.mxu0 0
    %2886 = vmatpush2.bf16.msra.mxu0 %v2799
    %2887 = vmatprep.mubr.bf16.mxu0 %v2595
    %2888 = vmatmul.mubr.bf16.gmra.mxu0 %v2594
    %v2889 = vpop.f32.mrf.mxu0
    %v2890 = vadd.f32 0.0, %v2889
    %v2891 = vpop.f32.mrf.mxu0
    %v2892 = vpop.f32.mrf.mxu0
    %v2893 = vadd.f32 0.0, %v2892
    %v2894 = vpop.f32.mrf.mxu0
    %2895 = vdwg.mxu0
    %2896 = vmatprep.subr.bf16.mxu0 0
    %2897 = vmatpush1.bf16.msra.mxu0 %v2814
    %2898 = vmatprep.subr.bf16.mxu0 0
    %2899 = vmatpush1.bf16.msra.mxu0 %v2813
    %2900 = vmatprep.subr.bf16.mxu0 0
    %2901 = vmatpush1.bf16.msra.mxu0 %v2812
    %2902 = vmatprep.subr.bf16.mxu0 0
    %2903 = vmatpush1.bf16.msra.mxu0 %v2811
    %2904 = vmatprep.subr.bf16.mxu0 0
    %2905 = vmatpush1.bf16.msra.mxu0 %v2810
    %2906 = vmatprep.subr.bf16.mxu0 0
    %2907 = vmatpush1.bf16.msra.mxu0 %v2809
    %2908 = vmatprep.subr.bf16.mxu0 0
    %2909 = vmatpush1.bf16.msra.mxu0 %v2808
    %2910 = vmatprep.subr.bf16.mxu0 0
    %2911 = vmatpush1.bf16.msra.mxu0 %v2807
    %2912 = vmatprep.subr.bf16.mxu0 0
    %2913 = vmatpush2.bf16.msra.mxu0 %v2822
    %2914 = vmatprep.subr.bf16.mxu0 0
    %2915 = vmatpush2.bf16.msra.mxu0 %v2821
    %2916 = vmatprep.subr.bf16.mxu0 0
    %2917 = vmatpush2.bf16.msra.mxu0 %v2820
    %2918 = vmatprep.subr.bf16.mxu0 0
    %2919 = vmatpush2.bf16.msra.mxu0 %v2819
    %2920 = vmatprep.subr.bf16.mxu0 0
    %2921 = vmatpush2.bf16.msra.mxu0 %v2818
    %2922 = vmatprep.subr.bf16.mxu0 0
    %2923 = vmatpush2.bf16.msra.mxu0 %v2817
    %2924 = vmatprep.subr.bf16.mxu0 0
    %2925 = vmatpush2.bf16.msra.mxu0 %v2816
    %2926 = vmatprep.subr.bf16.mxu0 0
    %2927 = vmatpush2.bf16.msra.mxu0 %v2815
    %2928 = vmatprep.mubr.bf16.mxu0 %v2597
    %2929 = vmatmul.mubr.bf16.gmra.mxu0 %v2596
    %v2930 = vpop.f32.mrf.mxu0
    %v2931 = vadd.f32 %v2890, %v2930
    %v2932 = vpop.f32.mrf.mxu0
    %v2933 = vpop.f32.mrf.mxu0
    %v2934 = vadd.f32 %v2893, %v2933
    %v2935 = vpop.f32.mrf.mxu0
    %2936 = vdwg.mxu0
    %v2937 = vadd.f32 %v2410, %v2931
    %v2938 = vadd.f32 %v2411, %v2934
    %v2939 = vadd.f32 %v788, %v2937
    %v2940 = vadd.f32 %v789, %v2938
    %v2941 = vld [vmem:[%s13] sm:$0x1]
    %v2943 = vlaneseq
    %v2944 = vshrl.u32 %v2943, 7
    %v2945 = vsub.s32 0, %v2944
    %v2946 = vrot.slane %v2941, %v2945
    %v2948 = vadd.f32 %v2939, %v2946
    %v2949 = vadd.f32 %v2940, %v2946
    %2950 = vst.msk [vmem:[#allocation2] sm:$0xff] %vm53, %v2948
    %2951 = vst.msk [vmem:[#allocation2 + $0x8] sm:$0xff] %vm53, %v2949
    // Predicated region
    $region58: #{encoder_layer.1} parent=1 // pred_check
      _
    $region59: #{encoder_layer.1} parent=1 // pred_check_branch
      %2953 = sbr.rel (0) target = $region61
    $region60: #{encoder_layer.1} parent=1 // pred_region
      %s2955 = ssub.s32 256, 256
      %2956 = vsyncadd [#allocation3], %s2955
      %s2957 = sshll.u32 [#allocation2], 4
      %s2958 = int_to_ptr.vmem [resolvable:$true] %s2957
      %2963 = dma.vmem_to_hbm [thread:$0]  %s2958, 256, %s14, [#allocation3], 128, 128, 8
    $region61: #{encoder_layer.1} parent=1 // pred_fallthru
      _
    // Predicated region
    $region62: #{encoder_layer.1} parent=1 // pred_check
      _
    $region63: #{encoder_layer.1} parent=1 // pred_check_branch
      %2965 = sbr.rel (0) target = $region65
    $region64: #{encoder_layer.1} parent=1 // pred_region
      %2966 = dma.done [#allocation3], 256
    $region65: #{encoder_layer.1} parent=1 // pred_fallthru
      _
    %2967 = vsyncpa [#allocation3], 1

</llo_original>
